<compile_context>
chip_gen: v7x
topology: tpu7x:2x2x1
jax: 0.10.0
libtpu: 0.0.40
codegen_flags: <defaults>
</compile_context>

<pallas_src>
import math
import functools

import jax
import jax.numpy as jnp
from jax.experimental import pallas as pl
from jax.experimental.pallas import tpu as pltpu


# ------------------------------------------------------------------ helpers

def _pick_tile(dim, target, align):
    """Largest divisor of `dim` that is <= target and a multiple of `align`.
    Full dim if dim <= target; falls back to the full dim (always legal)."""
    if dim <= target:
        return dim
    for t in range(target, align - 1, -1):
        if dim % t == 0 and t % align == 0:
            return t
    # TODO(synk): pad awkward dims (e.g. vocab=50257) to a (16,128) multiple in
    # the wrapper instead of falling back to one full-dim block.
    return dim


def _cparams(*dims):
    return pltpu.CompilerParams(dimension_semantics=dims,
                                vmem_limit_bytes=64 * 1024 * 1024)


# ------------------------------------------------------------------ linear (+bias [+relu])

def _matmul_bias_kernel(x_ref, w_ref, b_ref, o_ref, acc_ref, *, activation):
    k = pl.program_id(2)

    @pl.when(k == 0)
    def _():
        acc_ref[...] = jnp.zeros(acc_ref.shape, acc_ref.dtype)

    acc_ref[...] += jnp.dot(x_ref[...], w_ref[...],
                            preferred_element_type=jnp.float32)

    @pl.when(k == pl.num_programs(2) - 1)
    def _():
        y = acc_ref[...] + b_ref[...]
        if activation == "relu":
            y = jnp.maximum(y, 0.0)
        o_ref[...] = y.astype(o_ref.dtype)


def pallas_linear(x, w, b, out_dtype=jnp.bfloat16, activation=None,
                  tm=256, tn=512, tk=512):
    """x: (M, K) bf16; w: (K, N) bf16 (pre-transposed torch weight); b: (N,) f32."""
    M, K = x.shape
    K2, N = w.shape
    assert K == K2
    x = x.astype(w.dtype)
    tm = _pick_tile(M, tm, 16)
    tn = _pick_tile(N, tn, 128)
    tk = _pick_tile(K, tk, 128)
    grid = (M // tm, N // tn, K // tk)
    # TODO(synk): for the LM head at GPT-scale vocab, consider pl.Buffered(3) on
    # the weight stream and even larger tm to cut weight re-reads.
    return pl.pallas_call(
        functools.partial(_matmul_bias_kernel, activation=activation),
        out_shape=jax.ShapeDtypeStruct((M, N), out_dtype),
        grid_spec=pltpu.PrefetchScalarGridSpec(
            num_scalar_prefetch=0,
            grid=grid,
            in_specs=[
                pl.BlockSpec((tm, tk), lambda i, j, k: (i, k)),
                pl.BlockSpec((tk, tn), lambda i, j, k: (k, j)),
                pl.BlockSpec((1, tn), lambda i, j, k: (0, j)),
            ],
            out_specs=pl.BlockSpec((tm, tn), lambda i, j, k: (i, j)),
            scratch_shapes=[pltpu.VMEM((tm, tn), jnp.float32)],
        ),
        compiler_params=_cparams("parallel", "parallel", "arbitrary"),
    )(x, w, b.reshape(1, N).astype(jnp.float32))


# ------------------------------------------------------------------ linear + residual + LN

def _matmul_res_ln_kernel(x_ref, w_ref, b_ref, r_ref, g_ref, be_ref,
                          o_ref, acc_ref, *, eps):
    k = pl.program_id(1)

    @pl.when(k == 0)
    def _():
        acc_ref[...] = jnp.zeros(acc_ref.shape, acc_ref.dtype)

    acc_ref[...] += jnp.dot(x_ref[...], w_ref[...],
                            preferred_element_type=jnp.float32)

    @pl.when(k == pl.num_programs(1) - 1)
    def _():
        z = acc_ref[...] + b_ref[...] + r_ref[...].astype(jnp.float32)
        mu = jnp.mean(z, axis=-1, keepdims=True)
        var = jnp.mean(jnp.square(z - mu), axis=-1, keepdims=True)
        y = (z - mu) * jax.lax.rsqrt(var + eps) * g_ref[...] + be_ref[...]
        o_ref[...] = y.astype(o_ref.dtype)


def pallas_linear_residual_ln(x, w, b, residual, gamma, beta,
                              eps=1e-5, tm=256, tk=512):
    """LayerNorm(residual + x @ w + b). N == embed_dim stays fully lane-resident."""
    M, K = x.shape
    _, N = w.shape
    x = x.astype(w.dtype)
    residual = residual.astype(w.dtype)
    tm = _pick_tile(M, tm, 16)
    tk = _pick_tile(K, tk, 128)
    grid = (M // tm, K // tk)
    return pl.pallas_call(
        functools.partial(_matmul_res_ln_kernel, eps=eps),
        out_shape=jax.ShapeDtypeStruct((M, N), jnp.bfloat16),
        grid_spec=pltpu.PrefetchScalarGridSpec(
            num_scalar_prefetch=0,
            grid=grid,
            in_specs=[
                pl.BlockSpec((tm, tk), lambda i, k: (i, k)),
                pl.BlockSpec((tk, N), lambda i, k: (k, 0)),
                pl.BlockSpec((1, N), lambda i, k: (0, 0)),
                pl.BlockSpec((tm, N), lambda i, k: (i, 0)),   # residual
                pl.BlockSpec((1, N), lambda i, k: (0, 0)),    # gamma
                pl.BlockSpec((1, N), lambda i, k: (0, 0)),    # beta
            ],
            out_specs=pl.BlockSpec((tm, N), lambda i, k: (i, 0)),
            scratch_shapes=[pltpu.VMEM((tm, N), jnp.float32)],
        ),
        compiler_params=_cparams("parallel", "arbitrary"),
    )(x, w, b.reshape(1, N).astype(jnp.float32), residual,
      gamma.reshape(1, N).astype(jnp.float32),
      beta.reshape(1, N).astype(jnp.float32))


# ------------------------------------------------------------------ fused FFN + residual + LN

def _ffn_res_ln_kernel(x_ref, w1_ref, b1_ref, w2_ref, b2_ref, g_ref, be_ref,
                       o_ref, acc_ref, *, eps):
    f = pl.program_id(1)

    @pl.when(f == 0)
    def _():
        acc_ref[...] = jnp.zeros(acc_ref.shape, acc_ref.dtype)

    h = jnp.dot(x_ref[...], w1_ref[...],
                preferred_element_type=jnp.float32) + b1_ref[...]
    h = jnp.maximum(h, 0.0).astype(x_ref.dtype)              # bf16 back into the MXU
    acc_ref[...] += jnp.dot(h, w2_ref[...],
                            preferred_element_type=jnp.float32)

    @pl.when(f == pl.num_programs(1) - 1)
    def _():
        z = acc_ref[...] + b2_ref[...] + x_ref[...].astype(jnp.float32)
        mu = jnp.mean(z, axis=-1, keepdims=True)
        var = jnp.mean(jnp.square(z - mu), axis=-1, keepdims=True)
        y = (z - mu) * jax.lax.rsqrt(var + eps) * g_ref[...] + be_ref[...]
        o_ref[...] = y.astype(o_ref.dtype)


def pallas_ffn_residual_ln(x, w1, b1, w2, b2, gamma, beta,
                           eps=1e-5, tm=256, tf=512):
    """LayerNorm(x + relu(x @ w1 + b1) @ w2 + b2) in one kernel.
    The (M, ff_hidden) hidden activation never leaves VMEM."""
    M, E = x.shape
    _, F = w1.shape
    x = x.astype(w1.dtype)
    tm = _pick_tile(M, tm, 16)
    tf = _pick_tile(F, tf, 128)
    grid = (M // tm, F // tf)
    return pl.pallas_call(
        functools.partial(_ffn_res_ln_kernel, eps=eps),
        out_shape=jax.ShapeDtypeStruct((M, E), jnp.bfloat16),
        grid_spec=pltpu.PrefetchScalarGridSpec(
            num_scalar_prefetch=0,
            grid=grid,
            in_specs=[
                pl.BlockSpec((tm, E), lambda i, f: (i, 0)),   # x (also the residual)
                pl.BlockSpec((E, tf), lambda i, f: (0, f)),   # w1
                pl.BlockSpec((1, tf), lambda i, f: (0, f)),   # b1
                pl.BlockSpec((tf, E), lambda i, f: (f, 0)),   # w2
                pl.BlockSpec((1, E), lambda i, f: (0, 0)),    # b2
                pl.BlockSpec((1, E), lambda i, f: (0, 0)),    # gamma
                pl.BlockSpec((1, E), lambda i, f: (0, 0)),    # beta
            ],
            out_specs=pl.BlockSpec((tm, E), lambda i, f: (i, 0)),
            scratch_shapes=[pltpu.VMEM((tm, E), jnp.float32)],
        ),
        compiler_params=_cparams("parallel", "arbitrary"),
    )(x, w1, b1.reshape(1, F).astype(jnp.float32), w2,
      b2.reshape(1, E).astype(jnp.float32),
      gamma.reshape(1, E).astype(jnp.float32),
      beta.reshape(1, E).astype(jnp.float32))


# ------------------------------------------------------------------ final LayerNorm

def _ln_kernel(x_ref, g_ref, b_ref, o_ref, *, eps):
    z = x_ref[...].astype(jnp.float32)
    mu = jnp.mean(z, axis=-1, keepdims=True)
    var = jnp.mean(jnp.square(z - mu), axis=-1, keepdims=True)
    y = (z - mu) * jax.lax.rsqrt(var + eps) * g_ref[...] + b_ref[...]
    o_ref[...] = y.astype(o_ref.dtype)


def pallas_layernorm(x, gamma, beta, eps=1e-5, tm=512):
    M, E = x.shape
    tm = _pick_tile(M, tm, 16)
    return pl.pallas_call(
        functools.partial(_ln_kernel, eps=eps),
        out_shape=jax.ShapeDtypeStruct((M, E), jnp.bfloat16),
        grid=(M // tm,),
        in_specs=[
            pl.BlockSpec((tm, E), lambda i: (i, 0)),
            pl.BlockSpec((1, E), lambda i: (0, 0)),
            pl.BlockSpec((1, E), lambda i: (0, 0)),
        ],
        out_specs=pl.BlockSpec((tm, E), lambda i: (i, 0)),
        compiler_params=_cparams("parallel"),
    )(x, gamma.reshape(1, E).astype(jnp.float32),
      beta.reshape(1, E).astype(jnp.float32))


# ------------------------------------------------------------------ flash attention

def _flash_attn_kernel(q_ref, kv_ref, o_ref, m_ref, l_ref, acc_ref, *, H, hd, E):
    """Online-softmax attention over kv tiles.  q_ref block = (1, tq, 3E) (q-rows
    of the qkv buffer, resident across the kv axis); kv_ref block = (1, tkv, 3E).
    Output block (1, tq, E) is lane-dense with heads packed on the lane axis.
    The 1/sqrt(hd) scale is folded into the q weights, and attn_mask=None."""
    ki = pl.program_id(2)

    @pl.when(ki == 0)
    def _():
        m_ref[...] = jnp.full(m_ref.shape, -jnp.inf, m_ref.dtype)
        l_ref[...] = jnp.zeros(l_ref.shape, l_ref.dtype)
        acc_ref[...] = jnp.zeros(acc_ref.shape, acc_ref.dtype)

    for h in range(H):
        lo = h * hd
        q_h = q_ref[0, :, lo:lo + hd]                       # (tq, hd) bf16
        k_h = kv_ref[0, :, E + lo:E + lo + hd]              # (tkv, hd) bf16
        v_h = kv_ref[0, :, 2 * E + lo:2 * E + lo + hd]      # (tkv, hd) bf16

        s = jax.lax.dot_general(q_h, k_h, (((1,), (1,)), ((), ())),
                                preferred_element_type=jnp.float32)   # (tq, tkv)
        m_prev = m_ref[:, h:h + 1]
        m_new = jnp.maximum(m_prev, jnp.max(s, axis=-1, keepdims=True))
        alpha = jnp.exp(m_prev - m_new)
        p = jnp.exp(s - m_new)
        l_ref[:, h:h + 1] = alpha * l_ref[:, h:h + 1] + jnp.sum(p, axis=-1,
                                                                keepdims=True)
        acc_ref[:, lo:lo + hd] = (alpha * acc_ref[:, lo:lo + hd]
                                  + jnp.dot(p.astype(v_h.dtype), v_h,
                                            preferred_element_type=jnp.float32))
        m_ref[:, h:h + 1] = m_new

    @pl.when(ki == pl.num_programs(2) - 1)
    def _():
        inv_l = pl.reciprocal(l_ref[...], approx=True)      # divide rides the EUP
        for h in range(H):
            lo = h * hd
            o_ref[0, :, lo:lo + hd] = (acc_ref[:, lo:lo + hd]
                                       * inv_l[:, h:h + 1]).astype(o_ref.dtype)


def pallas_attention(qkv, num_heads, tq=256, tkv=256):
    """qkv: (B, T, 3E) bf16 straight from the qkv projection (no head transposes).
    Returns (B, T, E) bf16 with heads packed on the last (lane) axis."""
    B, T, threeE = qkv.shape
    E = threeE // 3
    H = num_heads
    hd = E // H
    tq = _pick_tile(T, tq, 16)
    tkv = _pick_tile(T, tkv, 16)
    grid = (B, T // tq, T // tkv)
    # TODO(synk): when E % 128 == 0, pass per-column-block views (block last dim
    # E instead of 3E) to cut the kv DMA stream by 1/3.
    return pl.pallas_call(
        functools.partial(_flash_attn_kernel, H=H, hd=hd, E=E),
        out_shape=jax.ShapeDtypeStruct((B, T, E), jnp.bfloat16),
        grid=grid,
        in_specs=[
            pl.BlockSpec((1, tq, 3 * E), lambda b, qi, ki: (b, qi, 0)),
            pl.BlockSpec((1, tkv, 3 * E), lambda b, qi, ki: (b, ki, 0)),
        ],
        out_specs=pl.BlockSpec((1, tq, E), lambda b, qi, ki: (b, qi, 0)),
        scratch_shapes=[
            pltpu.VMEM((tq, H), jnp.float32),    # running max  (per head column)
            pltpu.VMEM((tq, H), jnp.float32),    # running denom
            pltpu.VMEM((tq, E), jnp.float32),    # output accumulator, heads packed
        ],
        compiler_params=_cparams("parallel", "parallel", "arbitrary"),
    )(qkv, qkv)


# ------------------------------------------------------------------ params

def init_params(key, vocab_size, embed_dim, num_heads, ff_hidden_dim,
                num_layers, block_size):
    """Torch-semantic f32 params; linear weights stored as (in, out) == torch W.T."""
    def nrm(k, shape, scale=0.02):
        return scale * jax.random.normal(k, shape, jnp.float32)

    keys = jax.random.split(key, 4 + 8 * num_layers)
    ki = iter(keys)
    params = {
        "token_emb": nrm(next(ki), (vocab_size, embed_dim)),
        "pos_emb": nrm(next(ki), (block_size, embed_dim)),
        "ln_f_g": jnp.ones((embed_dim,), jnp.float32),
        "ln_f_b": jnp.zeros((embed_dim,), jnp.float32),
        "head_w": nrm(next(ki), (embed_dim, vocab_size)),
        "head_b": nrm(next(ki), (vocab_size,)),
        "blocks": [],
    }
    for _ in range(num_layers):
        params["blocks"].append({
            "w_qkv": nrm(next(ki), (embed_dim, 3 * embed_dim)),
            "b_qkv": nrm(next(ki), (3 * embed_dim,)),
            "w_out": nrm(next(ki), (embed_dim, embed_dim)),
            "b_out": nrm(next(ki), (embed_dim,)),
            "ln1_g": jnp.ones((embed_dim,), jnp.float32),
            "ln1_b": jnp.zeros((embed_dim,), jnp.float32),
            "w_ff1": nrm(next(ki), (embed_dim, ff_hidden_dim)),
            "b_ff1": nrm(next(ki), (ff_hidden_dim,)),
            "w_ff2": nrm(next(ki), (ff_hidden_dim, embed_dim)),
            "b_ff2": nrm(next(ki), (embed_dim,)),
            "ln2_g": jnp.ones((embed_dim,), jnp.float32),
            "ln2_b": jnp.zeros((embed_dim,), jnp.float32),
        })
    return params


def prepare_params(p, num_heads):
    """Fold the softmax scale into the q columns and cast matmul weights to bf16."""
    E = p["token_emb"].shape[1]
    hd = E // num_heads
    scale = 1.0 / math.sqrt(hd)

    def bf(w):
        return w.astype(jnp.bfloat16)

    out = {
        "token_emb": p["token_emb"], "pos_emb": p["pos_emb"],
        "ln_f_g": p["ln_f_g"], "ln_f_b": p["ln_f_b"],
        "head_w": bf(p["head_w"]), "head_b": p["head_b"],
        "blocks": [],
    }
    for blk in p["blocks"]:
        w_qkv = blk["w_qkv"].at[:, :E].multiply(scale)
        b_qkv = blk["b_qkv"].at[:E].multiply(scale)
        out["blocks"].append({
            "w_qkv": bf(w_qkv), "b_qkv": b_qkv,
            "w_out": bf(blk["w_out"]), "b_out": blk["b_out"],
            "ln1_g": blk["ln1_g"], "ln1_b": blk["ln1_b"],
            "w_ff1": bf(blk["w_ff1"]), "b_ff1": blk["b_ff1"],
            "w_ff2": bf(blk["w_ff2"]), "b_ff2": blk["b_ff2"],
            "ln2_g": blk["ln2_g"], "ln2_b": blk["ln2_b"],
        })
    return out


# ------------------------------------------------------------------ forward

def transformer_lm_forward(params, tokens, num_heads):
    """Pallas implementation of TransformerLM.forward(x, targets=None) -> logits."""
    B, T = tokens.shape
    E = params["token_emb"].shape[1]

    # Embedding gathers stay in plain JAX (glue).
    pos = jnp.arange(T, dtype=jnp.int32)
    x = params["token_emb"][tokens] + params["pos_emb"][pos][None, :, :]
    x2 = x.reshape(B * T, E).astype(jnp.bfloat16)

    for blk in params["blocks"]:
        # QKV projection (bf16 in / bf16 out, f32 accumulate).
        qkv = pallas_linear(x2, blk["w_qkv"], blk["b_qkv"],
                            out_dtype=jnp.bfloat16)                       # (B*T, 3E)
        # Flash attention directly on the (B, T, 3E) qkv buffer, no transposes.
        attn = pallas_attention(qkv.reshape(B, T, 3 * E), num_heads)       # (B, T, E)
        attn = attn.reshape(B * T, E)
        # out_proj fused with residual add + LN1 (dropout = identity in eval).
        x2 = pallas_linear_residual_ln(attn, blk["w_out"], blk["b_out"],
                                       residual=x2,
                                       gamma=blk["ln1_g"], beta=blk["ln1_b"])
        # ff1 -> ReLU -> ff2 -> +residual -> LN2 fused into one kernel.
        x2 = pallas_ffn_residual_ln(x2, blk["w_ff1"], blk["b_ff1"],
                                    blk["w_ff2"], blk["b_ff2"],
                                    gamma=blk["ln2_g"], beta=blk["ln2_b"])

    x2 = pallas_layernorm(x2, params["ln_f_g"], params["ln_f_b"])
    logits = pallas_linear(x2, params["head_w"], params["head_b"],
                           out_dtype=jnp.float32, tm=512, tn=1024, tk=512)
    return logits.reshape(B, T, -1)


# ------------------------------------------------------------------ pure-JAX f32 reference

def reference_forward(params, tokens, num_heads):
    B, T = tokens.shape
    E = params["token_emb"].shape[1]
    H = num_heads
    hd = E // H

    def ln(z, g, b, eps=1e-5):
        mu = jnp.mean(z, axis=-1, keepdims=True)
        var = jnp.mean(jnp.square(z - mu), axis=-1, keepdims=True)
        return (z - mu) * jax.lax.rsqrt(var + eps) * g + b

    pos = jnp.arange(T, dtype=jnp.int32)
    x = params["token_emb"][tokens] + params["pos_emb"][pos][None, :, :]
    for blk in params["blocks"]:
        qkv = x @ blk["w_qkv"] + blk["b_qkv"]
        q, k, v = jnp.split(qkv, 3, axis=-1)
        q = q.reshape(B, T, H, hd).transpose(0, 2, 1, 3)
        k = k.reshape(B, T, H, hd).transpose(0, 2, 1, 3)
        v = v.reshape(B, T, H, hd).transpose(0, 2, 1, 3)
        s = jnp.einsum("bhqd,bhkd->bhqk", q, k) / math.sqrt(hd)
        p = jax.nn.softmax(s, axis=-1)
        a = jnp.einsum("bhqk,bhkd->bhqd", p, v).transpose(0, 2, 1, 3).reshape(B, T, E)
        a = a @ blk["w_out"] + blk["b_out"]
        x = ln(x + a, blk["ln1_g"], blk["ln1_b"])
        h = jnp.maximum(x @ blk["w_ff1"] + blk["b_ff1"], 0.0)
        ff = h @ blk["w_ff2"] + blk["b_ff2"]
        x = ln(x + ff, blk["ln2_g"], blk["ln2_b"])
    x = ln(x, params["ln_f_g"], params["ln_f_b"])
    return x @ params["head_w"] + params["head_b"]


# ------------------------------------------------------------------ main

if __name__ == "__main__":
    # Small synthetic config consistent with TransformerLM.__init__
    VOCAB, EMBED, HEADS, FF, LAYERS, BLOCK = 64, 32, 4, 64, 2, 16
    B, T = 2, 8

    key = jax.random.PRNGKey(0)
    pkey, tkey = jax.random.split(key)
    params_f32 = init_params(pkey, VOCAB, EMBED, HEADS, FF, LAYERS, BLOCK)
    params = prepare_params(params_f32, HEADS)
    tokens = jax.random.randint(tkey, (B, T), 0, VOCAB, dtype=jnp.int32)

    fwd = jax.jit(functools.partial(transformer_lm_forward, num_heads=HEADS))
    logits = fwd(params, tokens)
    jax.block_until_ready(logits)

    ref = reference_forward(params_f32, tokens, HEADS)
    assert logits.shape == (B, T, VOCAB), logits.shape
    # Tolerance accounts for bf16 matmul inputs (f32 accumulation) and the
    # EUP approximate reciprocal in the softmax; the reference is pure f32.
    err = float(jnp.max(jnp.abs(logits - ref)))
    assert jnp.allclose(logits, ref, atol=2e-2, rtol=2e-2), err

    print("KERNEL_OK")
</pallas_src>

<mosaic_0001>
module attributes {stable_mosaic.version = 11 : i64} {
  func.func @_matmul_bias_kernel(%arg0: i32, %arg1: i32, %arg2: i32, %arg3: memref<16x32xbf16, #tpu.memory_space<vmem>>, %arg4: memref<32x96xbf16, #tpu.memory_space<vmem>>, %arg5: memref<1x96xf32, #tpu.memory_space<vmem>>, %arg6: memref<16x96xbf16, #tpu.memory_space<vmem>>, %arg7: memref<16x96xf32, #tpu.memory_space<vmem>>) attributes {dimension_semantics = [#tpu.dimension_semantics<parallel>, #tpu.dimension_semantics<parallel>, #tpu.dimension_semantics<arbitrary>], iteration_bounds = array<i64: 1, 1, 1>, scalar_prefetch = 0 : i64, scratch_operands = 1 : i64, tpu.core_type = #tpu.core_type<tc>, window_params = [{transform_indices = @transform_0, window_bounds = array<i64: 16, 32>}, {transform_indices = @transform_1, window_bounds = array<i64: 32, 96>}, {transform_indices = @transform_2, window_bounds = array<i64: 1, 96>}, {transform_indices = @transform_3, window_bounds = array<i64: 16, 96>}]} {
    %c0_i32 = arith.constant 0 : i32
    %0 = arith.cmpi eq, %arg2, %c0_i32 : i32
    %1 = arith.extui %0 : i1 to i32
    %c0_i32_0 = arith.constant 0 : i32
    %2 = arith.cmpi ne, %1, %c0_i32_0 : i32
    scf.if %2 {
      %cst_10 = arith.constant 0.000000e+00 : f32
      %12 = vector.broadcast %cst_10 : f32 to vector<16x96xf32>
      %c0_11 = arith.constant 0 : index
      %c0_12 = arith.constant 0 : index
      %13 = vector.load %arg7[%c0_11, %c0_12] : memref<16x96xf32, #tpu.memory_space<vmem>>, vector<16x96xf32>
      tpu.vector_store %arg7[%c0_11, %c0_12], %12 {strides = array<i32>} : memref<16x96xf32, #tpu.memory_space<vmem>>, vector<16x96xf32>,
    } else {
    }
    %c0 = arith.constant 0 : index
    %c0_1 = arith.constant 0 : index
    %3 = vector.load %arg7[%c0, %c0_1] : memref<16x96xf32, #tpu.memory_space<vmem>>, vector<16x96xf32>
    %c0_2 = arith.constant 0 : index
    %c0_3 = arith.constant 0 : index
    %4 = vector.load %arg3[%c0_2, %c0_3] : memref<16x32xbf16, #tpu.memory_space<vmem>>, vector<16x32xbf16>
    %c0_4 = arith.constant 0 : index
    %c0_5 = arith.constant 0 : index
    %5 = vector.load %arg4[%c0_4, %c0_5] : memref<32x96xbf16, #tpu.memory_space<vmem>>, vector<32x96xbf16>
    %cst = arith.constant dense<0.000000e+00> : vector<16x96xf32>
    %6 = tpu.matmul %4, %5, %cst {dimension_numbers = #tpu.dot_dimension_numbers<[1], [0], [0], [1], [0, 0, 1, 1], [], []>} : vector<16x32xbf16>, vector<32x96xbf16>, vector<16x96xf32> -> vector<16x96xf32>
    %7 = arith.addf %3, %6 : vector<16x96xf32>
    %c0_6 = arith.constant 0 : index
    %c0_7 = arith.constant 0 : index
    %8 = vector.load %arg7[%c0_6, %c0_7] : memref<16x96xf32, #tpu.memory_space<vmem>>, vector<16x96xf32>
    tpu.vector_store %arg7[%c0_6, %c0_7], %7 {strides = array<i32>} : memref<16x96xf32, #tpu.memory_space<vmem>>, vector<16x96xf32>,
    %c0_i32_8 = arith.constant 0 : i32
    %9 = arith.cmpi eq, %arg2, %c0_i32_8 : i32
    %10 = arith.extui %9 : i1 to i32
    %c0_i32_9 = arith.constant 0 : i32
    %11 = arith.cmpi ne, %10, %c0_i32_9 : i32
    scf.if %11 {
      %c0_10 = arith.constant 0 : index
      %c0_11 = arith.constant 0 : index
      %12 = vector.load %arg7[%c0_10, %c0_11] : memref<16x96xf32, #tpu.memory_space<vmem>>, vector<16x96xf32>
      %c0_12 = arith.constant 0 : index
      %c0_13 = arith.constant 0 : index
      %13 = vector.load %arg5[%c0_12, %c0_13] : memref<1x96xf32, #tpu.memory_space<vmem>>, vector<1x96xf32>
      %14 = vector.broadcast %13 : vector<1x96xf32> to vector<16x96xf32>
      %15 = arith.addf %12, %14 : vector<16x96xf32>
      %16 = arith.truncf %15 : vector<16x96xf32> to vector<16x96xbf16>
      %c0_14 = arith.constant 0 : index
      %c0_15 = arith.constant 0 : index
      %17 = vector.load %arg6[%c0_14, %c0_15] : memref<16x96xbf16, #tpu.memory_space<vmem>>, vector<16x96xbf16>
      tpu.vector_store %arg6[%c0_14, %c0_15], %16 {strides = array<i32>} : memref<16x96xbf16, #tpu.memory_space<vmem>>, vector<16x96xbf16>,
    } else {
    }
    return
  }
  func.func @transform_0(%arg0: i32, %arg1: i32, %arg2: i32) -> (i32, i32) {
    %c0_i32 = arith.constant 0 : i32
    return %arg0, %arg2 : i32, i32
  }
  func.func @transform_1(%arg0: i32, %arg1: i32, %arg2: i32) -> (i32, i32) {
    %c0_i32 = arith.constant 0 : i32
    return %arg2, %arg1 : i32, i32
  }
  func.func @transform_2(%arg0: i32, %arg1: i32, %arg2: i32) -> (i32, i32) {
    %c0_i32 = arith.constant 0 : i32
    %c0_i32_0 = arith.constant 0 : i32
    return %c0_i32, %arg1 : i32, i32
  }
  func.func @transform_3(%arg0: i32, %arg1: i32, %arg2: i32) -> (i32, i32) {
    %c0_i32 = arith.constant 0 : i32
    return %arg0, %arg1 : i32, i32
  }
}

module attributes {stable_mosaic.version = 11 : i64} {
  func.func @_matmul_res_ln_kernel(%arg0: i32, %arg1: i32, %arg2: memref<16x32xbf16, #tpu.memory_space<vmem>>, %arg3: memref<32x32xbf16, #tpu.memory_space<vmem>>, %arg4: memref<1x32xf32, #tpu.memory_space<vmem>>, %arg5: memref<16x32xbf16, #tpu.memory_space<vmem>>, %arg6: memref<1x32xf32, #tpu.memory_space<vmem>>, %arg7: memref<1x32xf32, #tpu.memory_space<vmem>>, %arg8: memref<16x32xbf16, #tpu.memory_space<vmem>>, %arg9: memref<16x32xf32, #tpu.memory_space<vmem>>) attributes {dimension_semantics = [#tpu.dimension_semantics<parallel>, #tpu.dimension_semantics<arbitrary>], iteration_bounds = array<i64: 1, 1>, scalar_prefetch = 0 : i64, scratch_operands = 1 : i64, tpu.core_type = #tpu.core_type<tc>, window_params = [{transform_indices = @transform_0, window_bounds = array<i64: 16, 32>}, {transform_indices = @transform_1, window_bounds = array<i64: 32, 32>}, {pipeline_mode = #tpu.pipeline_mode<synchronous>, transform_indices = @transform_2, window_bounds = array<i64: 1, 32>}, {transform_indices = @transform_3, window_bounds = array<i64: 16, 32>}, {pipeline_mode = #tpu.pipeline_mode<synchronous>, transform_indices = @transform_4, window_bounds = array<i64: 1, 32>}, {pipeline_mode = #tpu.pipeline_mode<synchronous>, transform_indices = @transform_5, window_bounds = array<i64: 1, 32>}, {transform_indices = @transform_6, window_bounds = array<i64: 16, 32>}]} {
    %c0_i32 = arith.constant 0 : i32
    %0 = arith.cmpi eq, %arg1, %c0_i32 : i32
    %1 = arith.extui %0 : i1 to i32
    %c0_i32_0 = arith.constant 0 : i32
    %2 = arith.cmpi ne, %1, %c0_i32_0 : i32
    scf.if %2 {
      %cst_10 = arith.constant 0.000000e+00 : f32
      %12 = vector.broadcast %cst_10 : f32 to vector<16x32xf32>
      %c0_11 = arith.constant 0 : index
      %c0_12 = arith.constant 0 : index
      %13 = vector.load %arg9[%c0_11, %c0_12] : memref<16x32xf32, #tpu.memory_space<vmem>>, vector<16x32xf32>
      tpu.vector_store %arg9[%c0_11, %c0_12], %12 {strides = array<i32>} : memref<16x32xf32, #tpu.memory_space<vmem>>, vector<16x32xf32>,
    } else {
    }
    %c0 = arith.constant 0 : index
    %c0_1 = arith.constant 0 : index
    %3 = vector.load %arg9[%c0, %c0_1] : memref<16x32xf32, #tpu.memory_space<vmem>>, vector<16x32xf32>
    %c0_2 = arith.constant 0 : index
    %c0_3 = arith.constant 0 : index
    %4 = vector.load %arg2[%c0_2, %c0_3] : memref<16x32xbf16, #tpu.memory_space<vmem>>, vector<16x32xbf16>
    %c0_4 = arith.constant 0 : index
    %c0_5 = arith.constant 0 : index
    %5 = vector.load %arg3[%c0_4, %c0_5] : memref<32x32xbf16, #tpu.memory_space<vmem>>, vector<32x32xbf16>
    %cst = arith.constant dense<0.000000e+00> : vector<16x32xf32>
    %6 = tpu.matmul %4, %5, %cst {dimension_numbers = #tpu.dot_dimension_numbers<[1], [0], [0], [1], [0, 0, 1, 1], [], []>} : vector<16x32xbf16>, vector<32x32xbf16>, vector<16x32xf32> -> vector<16x32xf32>
    %7 = arith.addf %3, %6 : vector<16x32xf32>
    %c0_6 = arith.constant 0 : index
    %c0_7 = arith.constant 0 : index
    %8 = vector.load %arg9[%c0_6, %c0_7] : memref<16x32xf32, #tpu.memory_space<vmem>>, vector<16x32xf32>
    tpu.vector_store %arg9[%c0_6, %c0_7], %7 {strides = array<i32>} : memref<16x32xf32, #tpu.memory_space<vmem>>, vector<16x32xf32>,
    %c0_i32_8 = arith.constant 0 : i32
    %9 = arith.cmpi eq, %arg1, %c0_i32_8 : i32
    %10 = arith.extui %9 : i1 to i32
    %c0_i32_9 = arith.constant 0 : i32
    %11 = arith.cmpi ne, %10, %c0_i32_9 : i32
    scf.if %11 {
      %c0_10 = arith.constant 0 : index
      %c0_11 = arith.constant 0 : index
      %12 = vector.load %arg9[%c0_10, %c0_11] : memref<16x32xf32, #tpu.memory_space<vmem>>, vector<16x32xf32>
      %c0_12 = arith.constant 0 : index
      %c0_13 = arith.constant 0 : index
      %13 = vector.load %arg4[%c0_12, %c0_13] : memref<1x32xf32, #tpu.memory_space<vmem>>, vector<1x32xf32>
      %14 = vector.broadcast %13 : vector<1x32xf32> to vector<16x32xf32>
      %15 = arith.addf %12, %14 : vector<16x32xf32>
      %c0_14 = arith.constant 0 : index
      %c0_15 = arith.constant 0 : index
      %16 = vector.load %arg5[%c0_14, %c0_15] : memref<16x32xbf16, #tpu.memory_space<vmem>>, vector<16x32xbf16>
      %17 = arith.extf %16 : vector<16x32xbf16> to vector<16x32xf32>
      %18 = arith.addf %15, %17 : vector<16x32xf32>
      %cst_16 = arith.constant dense<0.000000e+00> : vector<16xf32>
      %19 = vector.multi_reduction <add>, %18, %cst_16 [1] : vector<16x32xf32> to vector<16xf32>
      %20 = vector.shape_cast %19 : vector<16xf32> to vector<16x1xf32>
      %cst_17 = arith.constant 3.200000e+01 : f32
      %21 = vector.broadcast %cst_17 : f32 to vector<16x1xf32>
      %22 = arith.divf %20, %21 : vector<16x1xf32>
      %23 = vector.broadcast %22 : vector<16x1xf32> to vector<16x32xf32>
      %24 = arith.subf %18, %23 : vector<16x32xf32>
      %25 = arith.mulf %24, %24 : vector<16x32xf32>
      %cst_18 = arith.constant dense<0.000000e+00> : vector<16xf32>
      %26 = vector.multi_reduction <add>, %25, %cst_18 [1] : vector<16x32xf32> to vector<16xf32>
      %27 = vector.shape_cast %26 : vector<16xf32> to vector<16x1xf32>
      %cst_19 = arith.constant 3.200000e+01 : f32
      %28 = vector.broadcast %cst_19 : f32 to vector<16x1xf32>
      %29 = arith.divf %27, %28 : vector<16x1xf32>
      %30 = vector.broadcast %22 : vector<16x1xf32> to vector<16x32xf32>
      %31 = arith.subf %18, %30 : vector<16x32xf32>
      %cst_20 = arith.constant 9.99999974E-6 : f32
      %32 = vector.broadcast %cst_20 : f32 to vector<16x1xf32>
      %33 = arith.addf %29, %32 : vector<16x1xf32>
      %34 = math.rsqrt %33 : vector<16x1xf32>
      %35 = vector.broadcast %34 : vector<16x1xf32> to vector<16x32xf32>
      %36 = arith.mulf %31, %35 : vector<16x32xf32>
      %c0_21 = arith.constant 0 : index
      %c0_22 = arith.constant 0 : index
      %37 = vector.load %arg6[%c0_21, %c0_22] : memref<1x32xf32, #tpu.memory_space<vmem>>, vector<1x32xf32>
      %38 = vector.broadcast %37 : vector<1x32xf32> to vector<16x32xf32>
      %39 = arith.mulf %36, %38 : vector<16x32xf32>
      %c0_23 = arith.constant 0 : index
      %c0_24 = arith.constant 0 : index
      %40 = vector.load %arg7[%c0_23, %c0_24] : memref<1x32xf32, #tpu.memory_space<vmem>>, vector<1x32xf32>
      %41 = vector.broadcast %40 : vector<1x32xf32> to vector<16x32xf32>
      %42 = arith.addf %39, %41 : vector<16x32xf32>
      %43 = arith.truncf %42 : vector<16x32xf32> to vector<16x32xbf16>
      %c0_25 = arith.constant 0 : index
      %c0_26 = arith.constant 0 : index
      %44 = vector.load %arg8[%c0_25, %c0_26] : memref<16x32xbf16, #tpu.memory_space<vmem>>, vector<16x32xbf16>
      tpu.vector_store %arg8[%c0_25, %c0_26], %43 {strides = array<i32>} : memref<16x32xbf16, #tpu.memory_space<vmem>>, vector<16x32xbf16>,
    } else {
    }
    return
  }
  func.func @transform_0(%arg0: i32, %arg1: i32) -> (i32, i32) {
    %c0_i32 = arith.constant 0 : i32
    return %arg0, %arg1 : i32, i32
  }
  func.func @transform_1(%arg0: i32, %arg1: i32) -> (i32, i32) {
    %c0_i32 = arith.constant 0 : i32
    %c0_i32_0 = arith.constant 0 : i32
    return %arg1, %c0_i32 : i32, i32
  }
  func.func @transform_2(%arg0: i32, %arg1: i32) -> (i32, i32) {
    %c0_i32 = arith.constant 0 : i32
    %c0_i32_0 = arith.constant 0 : i32
    %c0_i32_1 = arith.constant 0 : i32
    return %c0_i32, %c0_i32_0 : i32, i32
  }
  func.func @transform_3(%arg0: i32, %arg1: i32) -> (i32, i32) {
    %c0_i32 = arith.constant 0 : i32
    %c0_i32_0 = arith.constant 0 : i32
    return %arg0, %c0_i32 : i32, i32
  }
  func.func @transform_4(%arg0: i32, %arg1: i32) -> (i32, i32) {
    %c0_i32 = arith.constant 0 : i32
    %c0_i32_0 = arith.constant 0 : i32
    %c0_i32_1 = arith.constant 0 : i32
    return %c0_i32, %c0_i32_0 : i32, i32
  }
  func.func @transform_5(%arg0: i32, %arg1: i32) -> (i32, i32) {
    %c0_i32 = arith.constant 0 : i32
    %c0_i32_0 = arith.constant 0 : i32
    %c0_i32_1 = arith.constant 0 : i32
    return %c0_i32, %c0_i32_0 : i32, i32
  }
  func.func @transform_6(%arg0: i32, %arg1: i32) -> (i32, i32) {
    %c0_i32 = arith.constant 0 : i32
    %c0_i32_0 = arith.constant 0 : i32
    return %arg0, %c0_i32 : i32, i32
  }
}

module attributes {stable_mosaic.version = 11 : i64} {
  func.func @_flash_attn_kernel(%arg0: i32, %arg1: i32, %arg2: i32, %arg3: memref<1x8x96xbf16, #tpu.memory_space<vmem>>, %arg4: memref<1x8x96xbf16, #tpu.memory_space<vmem>>, %arg5: memref<1x8x32xbf16, #tpu.memory_space<vmem>>, %arg6: memref<8x4xf32, #tpu.memory_space<vmem>>, %arg7: memref<8x4xf32, #tpu.memory_space<vmem>>, %arg8: memref<8x32xf32, #tpu.memory_space<vmem>>) attributes {dimension_semantics = [#tpu.dimension_semantics<parallel>, #tpu.dimension_semantics<parallel>, #tpu.dimension_semantics<arbitrary>], iteration_bounds = array<i64: 2, 1, 1>, scalar_prefetch = 0 : i64, scratch_operands = 3 : i64, tpu.core_type = #tpu.core_type<tc>, window_params = [{transform_indices = @transform_0, window_bounds = array<i64: 1, 8, 96>}, {transform_indices = @transform_1, window_bounds = array<i64: 1, 8, 96>}, {transform_indices = @transform_2, window_bounds = array<i64: 1, 8, 32>}]} {
    %c0_i32 = arith.constant 0 : i32
    %0 = arith.cmpi eq, %arg2, %c0_i32 : i32
    %1 = arith.extui %0 : i1 to i32
    %c0_i32_0 = arith.constant 0 : i32
    %2 = arith.cmpi ne, %1, %c0_i32_0 : i32
    scf.if %2 {
      %cst_87 = arith.constant 0xFF800000 : f32
      %126 = vector.broadcast %cst_87 : f32 to vector<8x4xf32>
      %c0_88 = arith.constant 0 : index
      %c0_89 = arith.constant 0 : index
      %127 = vector.load %arg6[%c0_88, %c0_89] : memref<8x4xf32, #tpu.memory_space<vmem>>, vector<8x4xf32>
      tpu.vector_store %arg6[%c0_88, %c0_89], %126 {strides = array<i32>} : memref<8x4xf32, #tpu.memory_space<vmem>>, vector<8x4xf32>,
      %cst_90 = arith.constant 0.000000e+00 : f32
      %128 = vector.broadcast %cst_90 : f32 to vector<8x4xf32>
      %c0_91 = arith.constant 0 : index
      %c0_92 = arith.constant 0 : index
      %129 = vector.load %arg7[%c0_91, %c0_92] : memref<8x4xf32, #tpu.memory_space<vmem>>, vector<8x4xf32>
      tpu.vector_store %arg7[%c0_91, %c0_92], %128 {strides = array<i32>} : memref<8x4xf32, #tpu.memory_space<vmem>>, vector<8x4xf32>,
      %cst_93 = arith.constant 0.000000e+00 : f32
      %130 = vector.broadcast %cst_93 : f32 to vector<8x32xf32>
      %c0_94 = arith.constant 0 : index
      %c0_95 = arith.constant 0 : index
      %131 = vector.load %arg8[%c0_94, %c0_95] : memref<8x32xf32, #tpu.memory_space<vmem>>, vector<8x32xf32>
      tpu.vector_store %arg8[%c0_94, %c0_95], %130 {strides = array<i32>} : memref<8x32xf32, #tpu.memory_space<vmem>>, vector<8x32xf32>,
    } else {
    }
    %c0 = arith.constant 0 : index
    %c0_1 = arith.constant 0 : index
    %c0_2 = arith.constant 0 : index
    %3 = vector.load %arg3[%c0, %c0_1, %c0_2] : memref<1x8x96xbf16, #tpu.memory_space<vmem>>, vector<1x8x8xbf16>
    %4 = vector.shape_cast %3 : vector<1x8x8xbf16> to vector<8x8xbf16>
    %c0_3 = arith.constant 0 : index
    %c0_4 = arith.constant 0 : index
    %c32 = arith.constant 32 : index
    %5 = vector.load %arg4[%c0_3, %c0_4, %c32] : memref<1x8x96xbf16, #tpu.memory_space<vmem>>, vector<1x8x8xbf16>
    %6 = vector.shape_cast %5 : vector<1x8x8xbf16> to vector<8x8xbf16>
    %c0_5 = arith.constant 0 : index
    %c0_6 = arith.constant 0 : index
    %c64 = arith.constant 64 : index
    %7 = vector.load %arg4[%c0_5, %c0_6, %c64] : memref<1x8x96xbf16, #tpu.memory_space<vmem>>, vector<1x8x8xbf16>
    %8 = vector.shape_cast %7 : vector<1x8x8xbf16> to vector<8x8xbf16>
    %cst = arith.constant dense<0.000000e+00> : vector<8x8xf32>
    %9 = tpu.matmul %4, %6, %cst {dimension_numbers = #tpu.dot_dimension_numbers<[1], [1], [0], [0], [0, 0, 1, 0], [], []>} : vector<8x8xbf16>, vector<8x8xbf16>, vector<8x8xf32> -> vector<8x8xf32>
    %c0_7 = arith.constant 0 : index
    %c0_8 = arith.constant 0 : index
    %10 = vector.load %arg6[%c0_7, %c0_8] : memref<8x4xf32, #tpu.memory_space<vmem>>, vector<8x1xf32>
    %cst_9 = arith.constant dense<0xFF800000> : vector<8xf32>
    %11 = vector.multi_reduction <maximumf>, %9, %cst_9 [1] : vector<8x8xf32> to vector<8xf32>
    %12 = vector.shape_cast %11 : vector<8xf32> to vector<8x1xf32>
    %13 = arith.maximumf %10, %12 : vector<8x1xf32>
    %14 = arith.subf %10, %13 : vector<8x1xf32>
    %15 = math.exp %14 : vector<8x1xf32>
    %16 = vector.broadcast %13 : vector<8x1xf32> to vector<8x8xf32>
    %17 = arith.subf %9, %16 : vector<8x8xf32>
    %18 = math.exp %17 : vector<8x8xf32>
    %c0_10 = arith.constant 0 : index
    %c0_11 = arith.constant 0 : index
    %19 = vector.load %arg7[%c0_10, %c0_11] : memref<8x4xf32, #tpu.memory_space<vmem>>, vector<8x1xf32>
    %20 = arith.mulf %15, %19 : vector<8x1xf32>
    %cst_12 = arith.constant dense<0.000000e+00> : vector<8xf32>
    %21 = vector.multi_reduction <add>, %18, %cst_12 [1] : vector<8x8xf32> to vector<8xf32>
    %22 = vector.shape_cast %21 : vector<8xf32> to vector<8x1xf32>
    %23 = arith.addf %20, %22 : vector<8x1xf32>
    %c0_13 = arith.constant 0 : index
    %c0_14 = arith.constant 0 : index
    %24 = vector.load %arg7[%c0_13, %c0_14] : memref<8x4xf32, #tpu.memory_space<vmem>>, vector<8x1xf32>
    tpu.vector_store %arg7[%c0_13, %c0_14], %23 {strides = array<i32>} : memref<8x4xf32, #tpu.memory_space<vmem>>, vector<8x1xf32>,
    %c0_15 = arith.constant 0 : index
    %c0_16 = arith.constant 0 : index
    %25 = vector.load %arg8[%c0_15, %c0_16] : memref<8x32xf32, #tpu.memory_space<vmem>>, vector<8x8xf32>
    %26 = vector.broadcast %15 : vector<8x1xf32> to vector<8x8xf32>
    %27 = arith.mulf %26, %25 : vector<8x8xf32>
    %28 = arith.truncf %18 : vector<8x8xf32> to vector<8x8xbf16>
    %cst_17 = arith.constant dense<0.000000e+00> : vector<8x8xf32>
    %29 = tpu.matmul %28, %8, %cst_17 {dimension_numbers = #tpu.dot_dimension_numbers<[1], [0], [0], [1], [0, 0, 1, 1], [], []>} : vector<8x8xbf16>, vector<8x8xbf16>, vector<8x8xf32> -> vector<8x8xf32>
    %30 = arith.addf %27, %29 : vector<8x8xf32>
    %c0_18 = arith.constant 0 : index
    %c0_19 = arith.constant 0 : index
    %31 = vector.load %arg8[%c0_18, %c0_19] : memref<8x32xf32, #tpu.memory_space<vmem>>, vector<8x8xf32>
    tpu.vector_store %arg8[%c0_18, %c0_19], %30 {strides = array<i32>} : memref<8x32xf32, #tpu.memory_space<vmem>>, vector<8x8xf32>,
    %c0_20 = arith.constant 0 : index
    %c0_21 = arith.constant 0 : index
    %32 = vector.load %arg6[%c0_20, %c0_21] : memref<8x4xf32, #tpu.memory_space<vmem>>, vector<8x1xf32>
    tpu.vector_store %arg6[%c0_20, %c0_21], %13 {strides = array<i32>} : memref<8x4xf32, #tpu.memory_space<vmem>>, vector<8x1xf32>,
    %c0_22 = arith.constant 0 : index
    %c0_23 = arith.constant 0 : index
    %c8 = arith.constant 8 : index
    %33 = vector.load %arg3[%c0_22, %c0_23, %c8] : memref<1x8x96xbf16, #tpu.memory_space<vmem>>, vector<1x8x8xbf16>
    %34 = vector.shape_cast %33 : vector<1x8x8xbf16> to vector<8x8xbf16>
    %c0_24 = arith.constant 0 : index
    %c0_25 = arith.constant 0 : index
    %c40 = arith.constant 40 : index
    %35 = vector.load %arg4[%c0_24, %c0_25, %c40] : memref<1x8x96xbf16, #tpu.memory_space<vmem>>, vector<1x8x8xbf16>
    %36 = vector.shape_cast %35 : vector<1x8x8xbf16> to vector<8x8xbf16>
    %c0_26 = arith.constant 0 : index
    %c0_27 = arith.constant 0 : index
    %c72 = arith.constant 72 : index
    %37 = vector.load %arg4[%c0_26, %c0_27, %c72] : memref<1x8x96xbf16, #tpu.memory_space<vmem>>, vector<1x8x8xbf16>
    %38 = vector.shape_cast %37 : vector<1x8x8xbf16> to vector<8x8xbf16>
    %cst_28 = arith.constant dense<0.000000e+00> : vector<8x8xf32>
    %39 = tpu.matmul %34, %36, %cst_28 {dimension_numbers = #tpu.dot_dimension_numbers<[1], [1], [0], [0], [0, 0, 1, 0], [], []>} : vector<8x8xbf16>, vector<8x8xbf16>, vector<8x8xf32> -> vector<8x8xf32>
    %c0_29 = arith.constant 0 : index
    %c1 = arith.constant 1 : index
    %40 = vector.load %arg6[%c0_29, %c1] : memref<8x4xf32, #tpu.memory_space<vmem>>, vector<8x1xf32>
    %cst_30 = arith.constant dense<0xFF800000> : vector<8xf32>
    %41 = vector.multi_reduction <maximumf>, %39, %cst_30 [1] : vector<8x8xf32> to vector<8xf32>
    %42 = vector.shape_cast %41 : vector<8xf32> to vector<8x1xf32>
    %43 = arith.maximumf %40, %42 : vector<8x1xf32>
    %44 = arith.subf %40, %43 : vector<8x1xf32>
    %45 = math.exp %44 : vector<8x1xf32>
    %46 = vector.broadcast %43 : vector<8x1xf32> to vector<8x8xf32>
    %47 = arith.subf %39, %46 : vector<8x8xf32>
    %48 = math.exp %47 : vector<8x8xf32>
    %c0_31 = arith.constant 0 : index
    %c1_32 = arith.constant 1 : index
    %49 = vector.load %arg7[%c0_31, %c1_32] : memref<8x4xf32, #tpu.memory_space<vmem>>, vector<8x1xf32>
    %50 = arith.mulf %45, %49 : vector<8x1xf32>
    %cst_33 = arith.constant dense<0.000000e+00> : vector<8xf32>
    %51 = vector.multi_reduction <add>, %48, %cst_33 [1] : vector<8x8xf32> to vector<8xf32>
    %52 = vector.shape_cast %51 : vector<8xf32> to vector<8x1xf32>
    %53 = arith.addf %50, %52 : vector<8x1xf32>
    %c0_34 = arith.constant 0 : index
    %c1_35 = arith.constant 1 : index
    %54 = vector.load %arg7[%c0_34, %c1_35] : memref<8x4xf32, #tpu.memory_space<vmem>>, vector<8x1xf32>
    tpu.vector_store %arg7[%c0_34, %c1_35], %53 {strides = array<i32>} : memref<8x4xf32, #tpu.memory_space<vmem>>, vector<8x1xf32>,
    %c0_36 = arith.constant 0 : index
    %c8_37 = arith.constant 8 : index
    %55 = vector.load %arg8[%c0_36, %c8_37] : memref<8x32xf32, #tpu.memory_space<vmem>>, vector<8x8xf32>
    %56 = vector.broadcast %45 : vector<8x1xf32> to vector<8x8xf32>
    %57 = arith.mulf %56, %55 : vector<8x8xf32>
    %58 = arith.truncf %48 : vector<8x8xf32> to vector<8x8xbf16>
    %cst_38 = arith.constant dense<0.000000e+00> : vector<8x8xf32>
    %59 = tpu.matmul %58, %38, %cst_38 {dimension_numbers = #tpu.dot_dimension_numbers<[1], [0], [0], [1], [0, 0, 1, 1], [], []>} : vector<8x8xbf16>, vector<8x8xbf16>, vector<8x8xf32> -> vector<8x8xf32>
    %60 = arith.addf %57, %59 : vector<8x8xf32>
    %c0_39 = arith.constant 0 : index
    %c8_40 = arith.constant 8 : index
    %61 = vector.load %arg8[%c0_39, %c8_40] : memref<8x32xf32, #tpu.memory_space<vmem>>, vector<8x8xf32>
    tpu.vector_store %arg8[%c0_39, %c8_40], %60 {strides = array<i32>} : memref<8x32xf32, #tpu.memory_space<vmem>>, vector<8x8xf32>,
    %c0_41 = arith.constant 0 : index
    %c1_42 = arith.constant 1 : index
    %62 = vector.load %arg6[%c0_41, %c1_42] : memref<8x4xf32, #tpu.memory_space<vmem>>, vector<8x1xf32>
    tpu.vector_store %arg6[%c0_41, %c1_42], %43 {strides = array<i32>} : memref<8x4xf32, #tpu.memory_space<vmem>>, vector<8x1xf32>,
    %c0_43 = arith.constant 0 : index
    %c0_44 = arith.constant 0 : index
    %c16 = arith.constant 16 : index
    %63 = vector.load %arg3[%c0_43, %c0_44, %c16] : memref<1x8x96xbf16, #tpu.memory_space<vmem>>, vector<1x8x8xbf16>
    %64 = vector.shape_cast %63 : vector<1x8x8xbf16> to vector<8x8xbf16>
    %c0_45 = arith.constant 0 : index
    %c0_46 = arith.constant 0 : index
    %c48 = arith.constant 48 : index
    %65 = vector.load %arg4[%c0_45, %c0_46, %c48] : memref<1x8x96xbf16, #tpu.memory_space<vmem>>, vector<1x8x8xbf16>
    %66 = vector.shape_cast %65 : vector<1x8x8xbf16> to vector<8x8xbf16>
    %c0_47 = arith.constant 0 : index
    %c0_48 = arith.constant 0 : index
    %c80 = arith.constant 80 : index
    %67 = vector.load %arg4[%c0_47, %c0_48, %c80] : memref<1x8x96xbf16, #tpu.memory_space<vmem>>, vector<1x8x8xbf16>
    %68 = vector.shape_cast %67 : vector<1x8x8xbf16> to vector<8x8xbf16>
    %cst_49 = arith.constant dense<0.000000e+00> : vector<8x8xf32>
    %69 = tpu.matmul %64, %66, %cst_49 {dimension_numbers = #tpu.dot_dimension_numbers<[1], [1], [0], [0], [0, 0, 1, 0], [], []>} : vector<8x8xbf16>, vector<8x8xbf16>, vector<8x8xf32> -> vector<8x8xf32>
    %c0_50 = arith.constant 0 : index
    %c2 = arith.constant 2 : index
    %70 = vector.load %arg6[%c0_50, %c2] : memref<8x4xf32, #tpu.memory_space<vmem>>, vector<8x1xf32>
    %cst_51 = arith.constant dense<0xFF800000> : vector<8xf32>
    %71 = vector.multi_reduction <maximumf>, %69, %cst_51 [1] : vector<8x8xf32> to vector<8xf32>
    %72 = vector.shape_cast %71 : vector<8xf32> to vector<8x1xf32>
    %73 = arith.maximumf %70, %72 : vector<8x1xf32>
    %74 = arith.subf %70, %73 : vector<8x1xf32>
    %75 = math.exp %74 : vector<8x1xf32>
    %76 = vector.broadcast %73 : vector<8x1xf32> to vector<8x8xf32>
    %77 = arith.subf %69, %76 : vector<8x8xf32>
    %78 = math.exp %77 : vector<8x8xf32>
    %c0_52 = arith.constant 0 : index
    %c2_53 = arith.constant 2 : index
    %79 = vector.load %arg7[%c0_52, %c2_53] : memref<8x4xf32, #tpu.memory_space<vmem>>, vector<8x1xf32>
    %80 = arith.mulf %75, %79 : vector<8x1xf32>
    %cst_54 = arith.constant dense<0.000000e+00> : vector<8xf32>
    %81 = vector.multi_reduction <add>, %78, %cst_54 [1] : vector<8x8xf32> to vector<8xf32>
    %82 = vector.shape_cast %81 : vector<8xf32> to vector<8x1xf32>
    %83 = arith.addf %80, %82 : vector<8x1xf32>
    %c0_55 = arith.constant 0 : index
    %c2_56 = arith.constant 2 : index
    %84 = vector.load %arg7[%c0_55, %c2_56] : memref<8x4xf32, #tpu.memory_space<vmem>>, vector<8x1xf32>
    tpu.vector_store %arg7[%c0_55, %c2_56], %83 {strides = array<i32>} : memref<8x4xf32, #tpu.memory_space<vmem>>, vector<8x1xf32>,
    %c0_57 = arith.constant 0 : index
    %c16_58 = arith.constant 16 : index
    %85 = vector.load %arg8[%c0_57, %c16_58] : memref<8x32xf32, #tpu.memory_space<vmem>>, vector<8x8xf32>
    %86 = vector.broadcast %75 : vector<8x1xf32> to vector<8x8xf32>
    %87 = arith.mulf %86, %85 : vector<8x8xf32>
    %88 = arith.truncf %78 : vector<8x8xf32> to vector<8x8xbf16>
    %cst_59 = arith.constant dense<0.000000e+00> : vector<8x8xf32>
    %89 = tpu.matmul %88, %68, %cst_59 {dimension_numbers = #tpu.dot_dimension_numbers<[1], [0], [0], [1], [0, 0, 1, 1], [], []>} : vector<8x8xbf16>, vector<8x8xbf16>, vector<8x8xf32> -> vector<8x8xf32>
    %90 = arith.addf %87, %89 : vector<8x8xf32>
    %c0_60 = arith.constant 0 : index
    %c16_61 = arith.constant 16 : index
    %91 = vector.load %arg8[%c0_60, %c16_61] : memref<8x32xf32, #tpu.memory_space<vmem>>, vector<8x8xf32>
    tpu.vector_store %arg8[%c0_60, %c16_61], %90 {strides = array<i32>} : memref<8x32xf32, #tpu.memory_space<vmem>>, vector<8x8xf32>,
    %c0_62 = arith.constant 0 : index
    %c2_63 = arith.constant 2 : index
    %92 = vector.load %arg6[%c0_62, %c2_63] : memref<8x4xf32, #tpu.memory_space<vmem>>, vector<8x1xf32>
    tpu.vector_store %arg6[%c0_62, %c2_63], %73 {strides = array<i32>} : memref<8x4xf32, #tpu.memory_space<vmem>>, vector<8x1xf32>,
    %c0_64 = arith.constant 0 : index
    %c0_65 = arith.constant 0 : index
    %c24 = arith.constant 24 : index
    %93 = vector.load %arg3[%c0_64, %c0_65, %c24] : memref<1x8x96xbf16, #tpu.memory_space<vmem>>, vector<1x8x8xbf16>
    %94 = vector.shape_cast %93 : vector<1x8x8xbf16> to vector<8x8xbf16>
    %c0_66 = arith.constant 0 : index
    %c0_67 = arith.constant 0 : index
    %c56 = arith.constant 56 : index
    %95 = vector.load %arg4[%c0_66, %c0_67, %c56] : memref<1x8x96xbf16, #tpu.memory_space<vmem>>, vector<1x8x8xbf16>
    %96 = vector.shape_cast %95 : vector<1x8x8xbf16> to vector<8x8xbf16>
    %c0_68 = arith.constant 0 : index
    %c0_69 = arith.constant 0 : index
    %c88 = arith.constant 88 : index
    %97 = vector.load %arg4[%c0_68, %c0_69, %c88] : memref<1x8x96xbf16, #tpu.memory_space<vmem>>, vector<1x8x8xbf16>
    %98 = vector.shape_cast %97 : vector<1x8x8xbf16> to vector<8x8xbf16>
    %cst_70 = arith.constant dense<0.000000e+00> : vector<8x8xf32>
    %99 = tpu.matmul %94, %96, %cst_70 {dimension_numbers = #tpu.dot_dimension_numbers<[1], [1], [0], [0], [0, 0, 1, 0], [], []>} : vector<8x8xbf16>, vector<8x8xbf16>, vector<8x8xf32> -> vector<8x8xf32>
    %c0_71 = arith.constant 0 : index
    %c3 = arith.constant 3 : index
    %100 = vector.load %arg6[%c0_71, %c3] : memref<8x4xf32, #tpu.memory_space<vmem>>, vector<8x1xf32>
    %cst_72 = arith.constant dense<0xFF800000> : vector<8xf32>
    %101 = vector.multi_reduction <maximumf>, %99, %cst_72 [1] : vector<8x8xf32> to vector<8xf32>
    %102 = vector.shape_cast %101 : vector<8xf32> to vector<8x1xf32>
    %103 = arith.maximumf %100, %102 : vector<8x1xf32>
    %104 = arith.subf %100, %103 : vector<8x1xf32>
    %105 = math.exp %104 : vector<8x1xf32>
    %106 = vector.broadcast %103 : vector<8x1xf32> to vector<8x8xf32>
    %107 = arith.subf %99, %106 : vector<8x8xf32>
    %108 = math.exp %107 : vector<8x8xf32>
    %c0_73 = arith.constant 0 : index
    %c3_74 = arith.constant 3 : index
    %109 = vector.load %arg7[%c0_73, %c3_74] : memref<8x4xf32, #tpu.memory_space<vmem>>, vector<8x1xf32>
    %110 = arith.mulf %105, %109 : vector<8x1xf32>
    %cst_75 = arith.constant dense<0.000000e+00> : vector<8xf32>
    %111 = vector.multi_reduction <add>, %108, %cst_75 [1] : vector<8x8xf32> to vector<8xf32>
    %112 = vector.shape_cast %111 : vector<8xf32> to vector<8x1xf32>
    %113 = arith.addf %110, %112 : vector<8x1xf32>
    %c0_76 = arith.constant 0 : index
    %c3_77 = arith.constant 3 : index
    %114 = vector.load %arg7[%c0_76, %c3_77] : memref<8x4xf32, #tpu.memory_space<vmem>>, vector<8x1xf32>
    tpu.vector_store %arg7[%c0_76, %c3_77], %113 {strides = array<i32>} : memref<8x4xf32, #tpu.memory_space<vmem>>, vector<8x1xf32>,
    %c0_78 = arith.constant 0 : index
    %c24_79 = arith.constant 24 : index
    %115 = vector.load %arg8[%c0_78, %c24_79] : memref<8x32xf32, #tpu.memory_space<vmem>>, vector<8x8xf32>
    %116 = vector.broadcast %105 : vector<8x1xf32> to vector<8x8xf32>
    %117 = arith.mulf %116, %115 : vector<8x8xf32>
    %118 = arith.truncf %108 : vector<8x8xf32> to vector<8x8xbf16>
    %cst_80 = arith.constant dense<0.000000e+00> : vector<8x8xf32>
    %119 = tpu.matmul %118, %98, %cst_80 {dimension_numbers = #tpu.dot_dimension_numbers<[1], [0], [0], [1], [0, 0, 1, 1], [], []>} : vector<8x8xbf16>, vector<8x8xbf16>, vector<8x8xf32> -> vector<8x8xf32>
    %120 = arith.addf %117, %119 : vector<8x8xf32>
    %c0_81 = arith.constant 0 : index
    %c24_82 = arith.constant 24 : index
    %121 = vector.load %arg8[%c0_81, %c24_82] : memref<8x32xf32, #tpu.memory_space<vmem>>, vector<8x8xf32>
    tpu.vector_store %arg8[%c0_81, %c24_82], %120 {strides = array<i32>} : memref<8x32xf32, #tpu.memory_space<vmem>>, vector<8x8xf32>,
    %c0_83 = arith.constant 0 : index
    %c3_84 = arith.constant 3 : index
    %122 = vector.load %arg6[%c0_83, %c3_84] : memref<8x4xf32, #tpu.memory_space<vmem>>, vector<8x1xf32>
    tpu.vector_store %arg6[%c0_83, %c3_84], %103 {strides = array<i32>} : memref<8x4xf32, #tpu.memory_space<vmem>>, vector<8x1xf32>,
    %c0_i32_85 = arith.constant 0 : i32
    %123 = arith.cmpi eq, %arg2, %c0_i32_85 : i32
    %124 = arith.extui %123 : i1 to i32
    %c0_i32_86 = arith.constant 0 : i32
    %125 = arith.cmpi ne, %124, %c0_i32_86 : i32
    scf.if %125 {
      %c0_87 = arith.constant 0 : index
      %c0_88 = arith.constant 0 : index
      %126 = vector.load %arg7[%c0_87, %c0_88] : memref<8x4xf32, #tpu.memory_space<vmem>>, vector<8x4xf32>
      %127 = tpu.reciprocal %126 {approx = true} : vector<8x4xf32> -> vector<8x4xf32>
      %c0_89 = arith.constant 0 : index
      %c0_90 = arith.constant 0 : index
      %128 = vector.load %arg8[%c0_89, %c0_90] : memref<8x32xf32, #tpu.memory_space<vmem>>, vector<8x8xf32>
      %129 = vector.extract_strided_slice %127 {offsets = [0, 0], sizes = [8, 1], strides = [1, 1]} : vector<8x4xf32> to vector<8x1xf32>
      %130 = vector.broadcast %129 : vector<8x1xf32> to vector<8x8xf32>
      %131 = arith.mulf %128, %130 : vector<8x8xf32>
      %132 = arith.truncf %131 : vector<8x8xf32> to vector<8x8xbf16>
      %c0_91 = arith.constant 0 : index
      %c0_92 = arith.constant 0 : index
      %c0_93 = arith.constant 0 : index
      %133 = vector.load %arg5[%c0_91, %c0_92, %c0_93] : memref<1x8x32xbf16, #tpu.memory_space<vmem>>, vector<1x8x8xbf16>
      %134 = vector.shape_cast %133 : vector<1x8x8xbf16> to vector<8x8xbf16>
      %135 = vector.shape_cast %132 : vector<8x8xbf16> to vector<1x8x8xbf16>
      tpu.vector_store %arg5[%c0_91, %c0_92, %c0_93], %135 {strides = array<i32>} : memref<1x8x32xbf16, #tpu.memory_space<vmem>>, vector<1x8x8xbf16>,
      %c0_94 = arith.constant 0 : index
      %c8_95 = arith.constant 8 : index
      %136 = vector.load %arg8[%c0_94, %c8_95] : memref<8x32xf32, #tpu.memory_space<vmem>>, vector<8x8xf32>
      %137 = vector.extract_strided_slice %127 {offsets = [0, 1], sizes = [8, 1], strides = [1, 1]} : vector<8x4xf32> to vector<8x1xf32>
      %138 = vector.broadcast %137 : vector<8x1xf32> to vector<8x8xf32>
      %139 = arith.mulf %136, %138 : vector<8x8xf32>
      %140 = arith.truncf %139 : vector<8x8xf32> to vector<8x8xbf16>
      %c0_96 = arith.constant 0 : index
      %c0_97 = arith.constant 0 : index
      %c8_98 = arith.constant 8 : index
      %141 = vector.load %arg5[%c0_96, %c0_97, %c8_98] : memref<1x8x32xbf16, #tpu.memory_space<vmem>>, vector<1x8x8xbf16>
      %142 = vector.shape_cast %141 : vector<1x8x8xbf16> to vector<8x8xbf16>
      %143 = vector.shape_cast %140 : vector<8x8xbf16> to vector<1x8x8xbf16>
      tpu.vector_store %arg5[%c0_96, %c0_97, %c8_98], %143 {strides = array<i32>} : memref<1x8x32xbf16, #tpu.memory_space<vmem>>, vector<1x8x8xbf16>,
      %c0_99 = arith.constant 0 : index
      %c16_100 = arith.constant 16 : index
      %144 = vector.load %arg8[%c0_99, %c16_100] : memref<8x32xf32, #tpu.memory_space<vmem>>, vector<8x8xf32>
      %145 = vector.extract_strided_slice %127 {offsets = [0, 2], sizes = [8, 1], strides = [1, 1]} : vector<8x4xf32> to vector<8x1xf32>
      %146 = vector.broadcast %145 : vector<8x1xf32> to vector<8x8xf32>
      %147 = arith.mulf %144, %146 : vector<8x8xf32>
      %148 = arith.truncf %147 : vector<8x8xf32> to vector<8x8xbf16>
      %c0_101 = arith.constant 0 : index
      %c0_102 = arith.constant 0 : index
      %c16_103 = arith.constant 16 : index
      %149 = vector.load %arg5[%c0_101, %c0_102, %c16_103] : memref<1x8x32xbf16, #tpu.memory_space<vmem>>, vector<1x8x8xbf16>
      %150 = vector.shape_cast %149 : vector<1x8x8xbf16> to vector<8x8xbf16>
      %151 = vector.shape_cast %148 : vector<8x8xbf16> to vector<1x8x8xbf16>
      tpu.vector_store %arg5[%c0_101, %c0_102, %c16_103], %151 {strides = array<i32>} : memref<1x8x32xbf16, #tpu.memory_space<vmem>>, vector<1x8x8xbf16>,
      %c0_104 = arith.constant 0 : index
      %c24_105 = arith.constant 24 : index
      %152 = vector.load %arg8[%c0_104, %c24_105] : memref<8x32xf32, #tpu.memory_space<vmem>>, vector<8x8xf32>
      %153 = vector.extract_strided_slice %127 {offsets = [0, 3], sizes = [8, 1], strides = [1, 1]} : vector<8x4xf32> to vector<8x1xf32>
      %154 = vector.broadcast %153 : vector<8x1xf32> to vector<8x8xf32>
      %155 = arith.mulf %152, %154 : vector<8x8xf32>
      %156 = arith.truncf %155 : vector<8x8xf32> to vector<8x8xbf16>
      %c0_106 = arith.constant 0 : index
      %c0_107 = arith.constant 0 : index
      %c24_108 = arith.constant 24 : index
      %157 = vector.load %arg5[%c0_106, %c0_107, %c24_108] : memref<1x8x32xbf16, #tpu.memory_space<vmem>>, vector<1x8x8xbf16>
      %158 = vector.shape_cast %157 : vector<1x8x8xbf16> to vector<8x8xbf16>
      %159 = vector.shape_cast %156 : vector<8x8xbf16> to vector<1x8x8xbf16>
      tpu.vector_store %arg5[%c0_106, %c0_107, %c24_108], %159 {strides = array<i32>} : memref<1x8x32xbf16, #tpu.memory_space<vmem>>, vector<1x8x8xbf16>,
    } else {
    }
    return
  }
  func.func @transform_0(%arg0: i32, %arg1: i32, %arg2: i32) -> (i32, i32, i32) {
    %c0_i32 = arith.constant 0 : i32
    %c0_i32_0 = arith.constant 0 : i32
    return %arg0, %arg1, %c0_i32 : i32, i32, i32
  }
  func.func @transform_1(%arg0: i32, %arg1: i32, %arg2: i32) -> (i32, i32, i32) {
    %c0_i32 = arith.constant 0 : i32
    %c0_i32_0 = arith.constant 0 : i32
    return %arg0, %arg2, %c0_i32 : i32, i32, i32
  }
  func.func @transform_2(%arg0: i32, %arg1: i32, %arg2: i32) -> (i32, i32, i32) {
    %c0_i32 = arith.constant 0 : i32
    %c0_i32_0 = arith.constant 0 : i32
    return %arg0, %arg1, %c0_i32 : i32, i32, i32
  }
}

module attributes {stable_mosaic.version = 11 : i64} {
  func.func @_ffn_res_ln_kernel(%arg0: i32, %arg1: i32, %arg2: memref<16x32xbf16, #tpu.memory_space<vmem>>, %arg3: memref<32x64xbf16, #tpu.memory_space<vmem>>, %arg4: memref<1x64xf32, #tpu.memory_space<vmem>>, %arg5: memref<64x32xbf16, #tpu.memory_space<vmem>>, %arg6: memref<1x32xf32, #tpu.memory_space<vmem>>, %arg7: memref<1x32xf32, #tpu.memory_space<vmem>>, %arg8: memref<1x32xf32, #tpu.memory_space<vmem>>, %arg9: memref<16x32xbf16, #tpu.memory_space<vmem>>, %arg10: memref<16x32xf32, #tpu.memory_space<vmem>>) attributes {dimension_semantics = [#tpu.dimension_semantics<parallel>, #tpu.dimension_semantics<arbitrary>], iteration_bounds = array<i64: 1, 1>, scalar_prefetch = 0 : i64, scratch_operands = 1 : i64, tpu.core_type = #tpu.core_type<tc>, window_params = [{transform_indices = @transform_0, window_bounds = array<i64: 16, 32>}, {transform_indices = @transform_1, window_bounds = array<i64: 32, 64>}, {transform_indices = @transform_2, window_bounds = array<i64: 1, 64>}, {transform_indices = @transform_3, window_bounds = array<i64: 64, 32>}, {pipeline_mode = #tpu.pipeline_mode<synchronous>, transform_indices = @transform_4, window_bounds = array<i64: 1, 32>}, {pipeline_mode = #tpu.pipeline_mode<synchronous>, transform_indices = @transform_5, window_bounds = array<i64: 1, 32>}, {pipeline_mode = #tpu.pipeline_mode<synchronous>, transform_indices = @transform_6, window_bounds = array<i64: 1, 32>}, {transform_indices = @transform_7, window_bounds = array<i64: 16, 32>}]} {
    %c0_i32 = arith.constant 0 : i32
    %0 = arith.cmpi eq, %arg1, %c0_i32 : i32
    %1 = arith.extui %0 : i1 to i32
    %c0_i32_0 = arith.constant 0 : i32
    %2 = arith.cmpi ne, %1, %c0_i32_0 : i32
    scf.if %2 {
      %cst_16 = arith.constant 0.000000e+00 : f32
      %20 = vector.broadcast %cst_16 : f32 to vector<16x32xf32>
      %c0_17 = arith.constant 0 : index
      %c0_18 = arith.constant 0 : index
      %21 = vector.load %arg10[%c0_17, %c0_18] : memref<16x32xf32, #tpu.memory_space<vmem>>, vector<16x32xf32>
      tpu.vector_store %arg10[%c0_17, %c0_18], %20 {strides = array<i32>} : memref<16x32xf32, #tpu.memory_space<vmem>>, vector<16x32xf32>,
    } else {
    }
    %c0 = arith.constant 0 : index
    %c0_1 = arith.constant 0 : index
    %3 = vector.load %arg2[%c0, %c0_1] : memref<16x32xbf16, #tpu.memory_space<vmem>>, vector<16x32xbf16>
    %c0_2 = arith.constant 0 : index
    %c0_3 = arith.constant 0 : index
    %4 = vector.load %arg3[%c0_2, %c0_3] : memref<32x64xbf16, #tpu.memory_space<vmem>>, vector<32x64xbf16>
    %cst = arith.constant dense<0.000000e+00> : vector<16x64xf32>
    %5 = tpu.matmul %3, %4, %cst {dimension_numbers = #tpu.dot_dimension_numbers<[1], [0], [0], [1], [0, 0, 1, 1], [], []>} : vector<16x32xbf16>, vector<32x64xbf16>, vector<16x64xf32> -> vector<16x64xf32>
    %c0_4 = arith.constant 0 : index
    %c0_5 = arith.constant 0 : index
    %6 = vector.load %arg4[%c0_4, %c0_5] : memref<1x64xf32, #tpu.memory_space<vmem>>, vector<1x64xf32>
    %7 = vector.broadcast %6 : vector<1x64xf32> to vector<16x64xf32>
    %8 = arith.addf %5, %7 : vector<16x64xf32>
    %cst_6 = arith.constant 0.000000e+00 : f32
    %9 = vector.broadcast %cst_6 : f32 to vector<16x64xf32>
    %10 = arith.maximumf %8, %9 : vector<16x64xf32>
    %11 = arith.truncf %10 : vector<16x64xf32> to vector<16x64xbf16>
    %c0_7 = arith.constant 0 : index
    %c0_8 = arith.constant 0 : index
    %12 = vector.load %arg10[%c0_7, %c0_8] : memref<16x32xf32, #tpu.memory_space<vmem>>, vector<16x32xf32>
    %c0_9 = arith.constant 0 : index
    %c0_10 = arith.constant 0 : index
    %13 = vector.load %arg5[%c0_9, %c0_10] : memref<64x32xbf16, #tpu.memory_space<vmem>>, vector<64x32xbf16>
    %cst_11 = arith.constant dense<0.000000e+00> : vector<16x32xf32>
    %14 = tpu.matmul %11, %13, %cst_11 {dimension_numbers = #tpu.dot_dimension_numbers<[1], [0], [0], [1], [0, 0, 1, 1], [], []>} : vector<16x64xbf16>, vector<64x32xbf16>, vector<16x32xf32> -> vector<16x32xf32>
    %15 = arith.addf %12, %14 : vector<16x32xf32>
    %c0_12 = arith.constant 0 : index
    %c0_13 = arith.constant 0 : index
    %16 = vector.load %arg10[%c0_12, %c0_13] : memref<16x32xf32, #tpu.memory_space<vmem>>, vector<16x32xf32>
    tpu.vector_store %arg10[%c0_12, %c0_13], %15 {strides = array<i32>} : memref<16x32xf32, #tpu.memory_space<vmem>>, vector<16x32xf32>,
    %c0_i32_14 = arith.constant 0 : i32
    %17 = arith.cmpi eq, %arg1, %c0_i32_14 : i32
    %18 = arith.extui %17 : i1 to i32
    %c0_i32_15 = arith.constant 0 : i32
    %19 = arith.cmpi ne, %18, %c0_i32_15 : i32
    scf.if %19 {
      %c0_16 = arith.constant 0 : index
      %c0_17 = arith.constant 0 : index
      %20 = vector.load %arg10[%c0_16, %c0_17] : memref<16x32xf32, #tpu.memory_space<vmem>>, vector<16x32xf32>
      %c0_18 = arith.constant 0 : index
      %c0_19 = arith.constant 0 : index
      %21 = vector.load %arg6[%c0_18, %c0_19] : memref<1x32xf32, #tpu.memory_space<vmem>>, vector<1x32xf32>
      %22 = vector.broadcast %21 : vector<1x32xf32> to vector<16x32xf32>
      %23 = arith.addf %20, %22 : vector<16x32xf32>
      %c0_20 = arith.constant 0 : index
      %c0_21 = arith.constant 0 : index
      %24 = vector.load %arg2[%c0_20, %c0_21] : memref<16x32xbf16, #tpu.memory_space<vmem>>, vector<16x32xbf16>
      %25 = arith.extf %24 : vector<16x32xbf16> to vector<16x32xf32>
      %26 = arith.addf %23, %25 : vector<16x32xf32>
      %cst_22 = arith.constant dense<0.000000e+00> : vector<16xf32>
      %27 = vector.multi_reduction <add>, %26, %cst_22 [1] : vector<16x32xf32> to vector<16xf32>
      %28 = vector.shape_cast %27 : vector<16xf32> to vector<16x1xf32>
      %cst_23 = arith.constant 3.200000e+01 : f32
      %29 = vector.broadcast %cst_23 : f32 to vector<16x1xf32>
      %30 = arith.divf %28, %29 : vector<16x1xf32>
      %31 = vector.broadcast %30 : vector<16x1xf32> to vector<16x32xf32>
      %32 = arith.subf %26, %31 : vector<16x32xf32>
      %33 = arith.mulf %32, %32 : vector<16x32xf32>
      %cst_24 = arith.constant dense<0.000000e+00> : vector<16xf32>
      %34 = vector.multi_reduction <add>, %33, %cst_24 [1] : vector<16x32xf32> to vector<16xf32>
      %35 = vector.shape_cast %34 : vector<16xf32> to vector<16x1xf32>
      %cst_25 = arith.constant 3.200000e+01 : f32
      %36 = vector.broadcast %cst_25 : f32 to vector<16x1xf32>
      %37 = arith.divf %35, %36 : vector<16x1xf32>
      %38 = vector.broadcast %30 : vector<16x1xf32> to vector<16x32xf32>
      %39 = arith.subf %26, %38 : vector<16x32xf32>
      %cst_26 = arith.constant 9.99999974E-6 : f32
      %40 = vector.broadcast %cst_26 : f32 to vector<16x1xf32>
      %41 = arith.addf %37, %40 : vector<16x1xf32>
      %42 = math.rsqrt %41 : vector<16x1xf32>
      %43 = vector.broadcast %42 : vector<16x1xf32> to vector<16x32xf32>
      %44 = arith.mulf %39, %43 : vector<16x32xf32>
      %c0_27 = arith.constant 0 : index
      %c0_28 = arith.constant 0 : index
      %45 = vector.load %arg7[%c0_27, %c0_28] : memref<1x32xf32, #tpu.memory_space<vmem>>, vector<1x32xf32>
      %46 = vector.broadcast %45 : vector<1x32xf32> to vector<16x32xf32>
      %47 = arith.mulf %44, %46 : vector<16x32xf32>
      %c0_29 = arith.constant 0 : index
      %c0_30 = arith.constant 0 : index
      %48 = vector.load %arg8[%c0_29, %c0_30] : memref<1x32xf32, #tpu.memory_space<vmem>>, vector<1x32xf32>
      %49 = vector.broadcast %48 : vector<1x32xf32> to vector<16x32xf32>
      %50 = arith.addf %47, %49 : vector<16x32xf32>
      %51 = arith.truncf %50 : vector<16x32xf32> to vector<16x32xbf16>
      %c0_31 = arith.constant 0 : index
      %c0_32 = arith.constant 0 : index
      %52 = vector.load %arg9[%c0_31, %c0_32] : memref<16x32xbf16, #tpu.memory_space<vmem>>, vector<16x32xbf16>
      tpu.vector_store %arg9[%c0_31, %c0_32], %51 {strides = array<i32>} : memref<16x32xbf16, #tpu.memory_space<vmem>>, vector<16x32xbf16>,
    } else {
    }
    return
  }
  func.func @transform_0(%arg0: i32, %arg1: i32) -> (i32, i32) {
    %c0_i32 = arith.constant 0 : i32
    %c0_i32_0 = arith.constant 0 : i32
    return %arg0, %c0_i32 : i32, i32
  }
  func.func @transform_1(%arg0: i32, %arg1: i32) -> (i32, i32) {
    %c0_i32 = arith.constant 0 : i32
    %c0_i32_0 = arith.constant 0 : i32
    return %c0_i32, %arg1 : i32, i32
  }
  func.func @transform_2(%arg0: i32, %arg1: i32) -> (i32, i32) {
    %c0_i32 = arith.constant 0 : i32
    %c0_i32_0 = arith.constant 0 : i32
    return %c0_i32, %arg1 : i32, i32
  }
  func.func @transform_3(%arg0: i32, %arg1: i32) -> (i32, i32) {
    %c0_i32 = arith.constant 0 : i32
    %c0_i32_0 = arith.constant 0 : i32
    return %arg1, %c0_i32 : i32, i32
  }
  func.func @transform_4(%arg0: i32, %arg1: i32) -> (i32, i32) {
    %c0_i32 = arith.constant 0 : i32
    %c0_i32_0 = arith.constant 0 : i32
    %c0_i32_1 = arith.constant 0 : i32
    return %c0_i32, %c0_i32_0 : i32, i32
  }
  func.func @transform_5(%arg0: i32, %arg1: i32) -> (i32, i32) {
    %c0_i32 = arith.constant 0 : i32
    %c0_i32_0 = arith.constant 0 : i32
    %c0_i32_1 = arith.constant 0 : i32
    return %c0_i32, %c0_i32_0 : i32, i32
  }
  func.func @transform_6(%arg0: i32, %arg1: i32) -> (i32, i32) {
    %c0_i32 = arith.constant 0 : i32
    %c0_i32_0 = arith.constant 0 : i32
    %c0_i32_1 = arith.constant 0 : i32
    return %c0_i32, %c0_i32_0 : i32, i32
  }
  func.func @transform_7(%arg0: i32, %arg1: i32) -> (i32, i32) {
    %c0_i32 = arith.constant 0 : i32
    %c0_i32_0 = arith.constant 0 : i32
    return %arg0, %c0_i32 : i32, i32
  }
}

module attributes {stable_mosaic.version = 11 : i64} {
  func.func @_ln_kernel(%arg0: i32, %arg1: memref<16x32xbf16, #tpu.memory_space<vmem>>, %arg2: memref<1x32xf32, #tpu.memory_space<vmem>>, %arg3: memref<1x32xf32, #tpu.memory_space<vmem>>, %arg4: memref<16x32xbf16, #tpu.memory_space<vmem>>) attributes {dimension_semantics = [#tpu.dimension_semantics<parallel>], iteration_bounds = array<i64: 1>, scalar_prefetch = 0 : i64, scratch_operands = 0 : i64, tpu.core_type = #tpu.core_type<tc>, window_params = [{transform_indices = @transform_0, window_bounds = array<i64: 16, 32>}, {pipeline_mode = #tpu.pipeline_mode<synchronous>, transform_indices = @transform_1, window_bounds = array<i64: 1, 32>}, {pipeline_mode = #tpu.pipeline_mode<synchronous>, transform_indices = @transform_2, window_bounds = array<i64: 1, 32>}, {transform_indices = @transform_3, window_bounds = array<i64: 16, 32>}]} {
    %c0 = arith.constant 0 : index
    %c0_0 = arith.constant 0 : index
    %0 = vector.load %arg1[%c0, %c0_0] : memref<16x32xbf16, #tpu.memory_space<vmem>>, vector<16x32xbf16>
    %1 = arith.extf %0 : vector<16x32xbf16> to vector<16x32xf32>
    %cst = arith.constant dense<0.000000e+00> : vector<16xf32>
    %2 = vector.multi_reduction <add>, %1, %cst [1] : vector<16x32xf32> to vector<16xf32>
    %3 = vector.shape_cast %2 : vector<16xf32> to vector<16x1xf32>
    %cst_1 = arith.constant 3.200000e+01 : f32
    %4 = vector.broadcast %cst_1 : f32 to vector<16x1xf32>
    %5 = arith.divf %3, %4 : vector<16x1xf32>
    %6 = vector.broadcast %5 : vector<16x1xf32> to vector<16x32xf32>
    %7 = arith.subf %1, %6 : vector<16x32xf32>
    %8 = arith.mulf %7, %7 : vector<16x32xf32>
    %cst_2 = arith.constant dense<0.000000e+00> : vector<16xf32>
    %9 = vector.multi_reduction <add>, %8, %cst_2 [1] : vector<16x32xf32> to vector<16xf32>
    %10 = vector.shape_cast %9 : vector<16xf32> to vector<16x1xf32>
    %cst_3 = arith.constant 3.200000e+01 : f32
    %11 = vector.broadcast %cst_3 : f32 to vector<16x1xf32>
    %12 = arith.divf %10, %11 : vector<16x1xf32>
    %13 = vector.broadcast %5 : vector<16x1xf32> to vector<16x32xf32>
    %14 = arith.subf %1, %13 : vector<16x32xf32>
    %cst_4 = arith.constant 9.99999974E-6 : f32
    %15 = vector.broadcast %cst_4 : f32 to vector<16x1xf32>
    %16 = arith.addf %12, %15 : vector<16x1xf32>
    %17 = math.rsqrt %16 : vector<16x1xf32>
    %18 = vector.broadcast %17 : vector<16x1xf32> to vector<16x32xf32>
    %19 = arith.mulf %14, %18 : vector<16x32xf32>
    %c0_5 = arith.constant 0 : index
    %c0_6 = arith.constant 0 : index
    %20 = vector.load %arg2[%c0_5, %c0_6] : memref<1x32xf32, #tpu.memory_space<vmem>>, vector<1x32xf32>
    %21 = vector.broadcast %20 : vector<1x32xf32> to vector<16x32xf32>
    %22 = arith.mulf %19, %21 : vector<16x32xf32>
    %c0_7 = arith.constant 0 : index
    %c0_8 = arith.constant 0 : index
    %23 = vector.load %arg3[%c0_7, %c0_8] : memref<1x32xf32, #tpu.memory_space<vmem>>, vector<1x32xf32>
    %24 = vector.broadcast %23 : vector<1x32xf32> to vector<16x32xf32>
    %25 = arith.addf %22, %24 : vector<16x32xf32>
    %26 = arith.truncf %25 : vector<16x32xf32> to vector<16x32xbf16>
    %c0_9 = arith.constant 0 : index
    %c0_10 = arith.constant 0 : index
    %27 = vector.load %arg4[%c0_9, %c0_10] : memref<16x32xbf16, #tpu.memory_space<vmem>>, vector<16x32xbf16>
    tpu.vector_store %arg4[%c0_9, %c0_10], %26 {strides = array<i32>} : memref<16x32xbf16, #tpu.memory_space<vmem>>, vector<16x32xbf16>,
    return
  }
  func.func @transform_0(%arg0: i32) -> (i32, i32) {
    %c0_i32 = arith.constant 0 : i32
    %c0_i32_0 = arith.constant 0 : i32
    return %arg0, %c0_i32 : i32, i32
  }
  func.func @transform_1(%arg0: i32) -> (i32, i32) {
    %c0_i32 = arith.constant 0 : i32
    %c0_i32_0 = arith.constant 0 : i32
    %c0_i32_1 = arith.constant 0 : i32
    return %c0_i32, %c0_i32_0 : i32, i32
  }
  func.func @transform_2(%arg0: i32) -> (i32, i32) {
    %c0_i32 = arith.constant 0 : i32
    %c0_i32_0 = arith.constant 0 : i32
    %c0_i32_1 = arith.constant 0 : i32
    return %c0_i32, %c0_i32_0 : i32, i32
  }
  func.func @transform_3(%arg0: i32) -> (i32, i32) {
    %c0_i32 = arith.constant 0 : i32
    %c0_i32_0 = arith.constant 0 : i32
    return %arg0, %c0_i32 : i32, i32
  }
}

module attributes {stable_mosaic.version = 11 : i64} {
  func.func @_matmul_bias_kernel(%arg0: i32, %arg1: i32, %arg2: i32, %arg3: memref<16x32xbf16, #tpu.memory_space<vmem>>, %arg4: memref<32x64xbf16, #tpu.memory_space<vmem>>, %arg5: memref<1x64xf32, #tpu.memory_space<vmem>>, %arg6: memref<16x64xf32, #tpu.memory_space<vmem>>, %arg7: memref<16x64xf32, #tpu.memory_space<vmem>>) attributes {dimension_semantics = [#tpu.dimension_semantics<parallel>, #tpu.dimension_semantics<parallel>, #tpu.dimension_semantics<arbitrary>], iteration_bounds = array<i64: 1, 1, 1>, scalar_prefetch = 0 : i64, scratch_operands = 1 : i64, tpu.core_type = #tpu.core_type<tc>, window_params = [{transform_indices = @transform_0, window_bounds = array<i64: 16, 32>}, {transform_indices = @transform_1, window_bounds = array<i64: 32, 64>}, {transform_indices = @transform_2, window_bounds = array<i64: 1, 64>}, {transform_indices = @transform_3, window_bounds = array<i64: 16, 64>}]} {
    %c0_i32 = arith.constant 0 : i32
    %0 = arith.cmpi eq, %arg2, %c0_i32 : i32
    %1 = arith.extui %0 : i1 to i32
    %c0_i32_0 = arith.constant 0 : i32
    %2 = arith.cmpi ne, %1, %c0_i32_0 : i32
    scf.if %2 {
      %cst_10 = arith.constant 0.000000e+00 : f32
      %12 = vector.broadcast %cst_10 : f32 to vector<16x64xf32>
      %c0_11 = arith.constant 0 : index
      %c0_12 = arith.constant 0 : index
      %13 = vector.load %arg7[%c0_11, %c0_12] : memref<16x64xf32, #tpu.memory_space<vmem>>, vector<16x64xf32>
      tpu.vector_store %arg7[%c0_11, %c0_12], %12 {strides = array<i32>} : memref<16x64xf32, #tpu.memory_space<vmem>>, vector<16x64xf32>,
    } else {
    }
    %c0 = arith.constant 0 : index
    %c0_1 = arith.constant 0 : index
    %3 = vector.load %arg7[%c0, %c0_1] : memref<16x64xf32, #tpu.memory_space<vmem>>, vector<16x64xf32>
    %c0_2 = arith.constant 0 : index
    %c0_3 = arith.constant 0 : index
    %4 = vector.load %arg3[%c0_2, %c0_3] : memref<16x32xbf16, #tpu.memory_space<vmem>>, vector<16x32xbf16>
    %c0_4 = arith.constant 0 : index
    %c0_5 = arith.constant 0 : index
    %5 = vector.load %arg4[%c0_4, %c0_5] : memref<32x64xbf16, #tpu.memory_space<vmem>>, vector<32x64xbf16>
    %cst = arith.constant dense<0.000000e+00> : vector<16x64xf32>
    %6 = tpu.matmul %4, %5, %cst {dimension_numbers = #tpu.dot_dimension_numbers<[1], [0], [0], [1], [0, 0, 1, 1], [], []>} : vector<16x32xbf16>, vector<32x64xbf16>, vector<16x64xf32> -> vector<16x64xf32>
    %7 = arith.addf %3, %6 : vector<16x64xf32>
    %c0_6 = arith.constant 0 : index
    %c0_7 = arith.constant 0 : index
    %8 = vector.load %arg7[%c0_6, %c0_7] : memref<16x64xf32, #tpu.memory_space<vmem>>, vector<16x64xf32>
    tpu.vector_store %arg7[%c0_6, %c0_7], %7 {strides = array<i32>} : memref<16x64xf32, #tpu.memory_space<vmem>>, vector<16x64xf32>,
    %c0_i32_8 = arith.constant 0 : i32
    %9 = arith.cmpi eq, %arg2, %c0_i32_8 : i32
    %10 = arith.extui %9 : i1 to i32
    %c0_i32_9 = arith.constant 0 : i32
    %11 = arith.cmpi ne, %10, %c0_i32_9 : i32
    scf.if %11 {
      %c0_10 = arith.constant 0 : index
      %c0_11 = arith.constant 0 : index
      %12 = vector.load %arg7[%c0_10, %c0_11] : memref<16x64xf32, #tpu.memory_space<vmem>>, vector<16x64xf32>
      %c0_12 = arith.constant 0 : index
      %c0_13 = arith.constant 0 : index
      %13 = vector.load %arg5[%c0_12, %c0_13] : memref<1x64xf32, #tpu.memory_space<vmem>>, vector<1x64xf32>
      %14 = vector.broadcast %13 : vector<1x64xf32> to vector<16x64xf32>
      %15 = arith.addf %12, %14 : vector<16x64xf32>
      %c0_14 = arith.constant 0 : index
      %c0_15 = arith.constant 0 : index
      %16 = vector.load %arg6[%c0_14, %c0_15] : memref<16x64xf32, #tpu.memory_space<vmem>>, vector<16x64xf32>
      tpu.vector_store %arg6[%c0_14, %c0_15], %15 {strides = array<i32>} : memref<16x64xf32, #tpu.memory_space<vmem>>, vector<16x64xf32>,
    } else {
    }
    return
  }
  func.func @transform_0(%arg0: i32, %arg1: i32, %arg2: i32) -> (i32, i32) {
    %c0_i32 = arith.constant 0 : i32
    return %arg0, %arg2 : i32, i32
  }
  func.func @transform_1(%arg0: i32, %arg1: i32, %arg2: i32) -> (i32, i32) {
    %c0_i32 = arith.constant 0 : i32
    return %arg2, %arg1 : i32, i32
  }
  func.func @transform_2(%arg0: i32, %arg1: i32, %arg2: i32) -> (i32, i32) {
    %c0_i32 = arith.constant 0 : i32
    %c0_i32_0 = arith.constant 0 : i32
    return %c0_i32, %arg1 : i32, i32
  }
  func.func @transform_3(%arg0: i32, %arg1: i32, %arg2: i32) -> (i32, i32) {
    %c0_i32 = arith.constant 0 : i32
    return %arg0, %arg1 : i32, i32
  }
}

</mosaic_0001>

<llo_original>
// kernel: transformer_lm_forward.10
$region0: #{transformer_lm_forward.10}
  #allocation0 [shape = 'u32[]', space=smem, size = 0x4, offset = 0x4, fixed_abs, tag = 'smem constant byte address 0x4 - core index']
  #allocation1 [shape = 'u32[144,128]{1,0:T(1,128)}', space=vmem, size = 0x12000, scoped, tag = 'internal scratch']
  #allocation2 [shape = 'f32[16,96]{1,0:T(8,128)}', space=vmem, size = 0x2000, scoped, tag = 'scratch operand']
  %s0 = inlined_call_operand.hbm [shape: bf16[16,32], index: 0, kind: input, shape index: {}]
  %s1 = inlined_call_operand.hbm [shape: bf16[32,96], index: 1, kind: input, shape index: {}]
  %s2 = inlined_call_operand.hbm [shape: f32[1,96], index: 2, kind: input, shape index: {}]
  %s3 = inlined_call_operand.hbm [shape: bf16[16,96], index: 3, kind: output, shape index: {}]
  %s4 = sld [smem:[#allocation0]]
  $region42: #{transformer_lm_forward.10} parent=0
    _
  %s6 = ssub.s32 1, %s4
  %s7 = scalar_select 0, %s6, %s4
  $region1: #{transformer_lm_forward.10} parent=0
    #allocation3 [shape = 'u8[4096]{0}', space=vmem, size = 0x1000, scoped, tag = 'input window, operand 0, single buffered']
    #allocation4 [shape = 's32[1]{0}', space=sflag, size = 0x4, scoped, tag = 'scoped memory for transformer_lm_forward.10']
    #allocation5 [shape = 's32[1]{0}', space=sflag, size = 0x4, scoped, tag = 'scoped memory for transformer_lm_forward.10']
    #allocation6 [shape = 'u8[8192]{0}', space=vmem, size = 0x2000, scoped, tag = 'input window, operand 1, single buffered']
    #allocation7 [shape = 's32[1]{0}', space=sflag, size = 0x4, scoped, tag = 'scoped memory for transformer_lm_forward.10']
    #allocation8 [shape = 'u8[512]{0}', space=vmem, size = 0x400, scoped, tag = 'input window, operand 2, single buffered']
    #allocation9 [shape = 'u8[4096]{0}', space=vmem, size = 0x1000, scoped, tag = 'output window, operand 0, single buffered']
    %8 = vsyncpa [#allocation4], 0
    %9 = vsyncpa [#allocation7], 0
    %10 = vsyncpa [#allocation5], 0
    // Predicated region
    $region2: #{transformer_lm_forward.10} parent=1 // pred_check
      _
    $region3: #{transformer_lm_forward.10} parent=1 // pred_check_branch
      %12 = sbr.rel (0) target = $region5
    $region4: #{transformer_lm_forward.10} parent=1 // pred_region
      %s14 = ssub.s32 128, 128
      %15 = vsyncadd [#allocation4], %s14
      %s16 = sshll.u32 [#allocation3], 4
      %s17 = int_to_ptr.vmem [resolvable:$true] %s16
      %22 = dma.hbm_to_vmem [thread:$0]  %s0, 128, %s17, [#allocation4], 64, 64, 4
    $region5: #{transformer_lm_forward.10} parent=1 // pred_fallthru
      _
    // Predicated region
    $region6: #{transformer_lm_forward.10} parent=1 // pred_check
      _
    $region7: #{transformer_lm_forward.10} parent=1 // pred_check_branch
      %24 = sbr.rel (0) target = $region9
    $region8: #{transformer_lm_forward.10} parent=1 // pred_region
      %s26 = ssub.s32 256, 256
      %27 = vsyncadd [#allocation7], %s26
      %s28 = sshll.u32 [#allocation6], 4
      %s29 = int_to_ptr.vmem [resolvable:$true] %s28
      %34 = dma.hbm_to_vmem [thread:$0]  %s1, 256, %s29, [#allocation7], 64, 64, 4
    $region9: #{transformer_lm_forward.10} parent=1 // pred_fallthru
      _
    // Predicated region
    $region10: #{transformer_lm_forward.10} parent=1 // pred_check
      _
    $region11: #{transformer_lm_forward.10} parent=1 // pred_check_branch
      %36 = sbr.rel (0) target = $region13
    $region12: #{transformer_lm_forward.10} parent=1 // pred_region
      %s38 = ssub.s32 16, 16
      %39 = vsyncadd [#allocation7], %s38
      %s41 = sshll.u32 [#allocation8], 4
      %s42 = int_to_ptr.vmem [resolvable:$true] %s41
      %44 = dma.hbm_to_vmem [thread:$0]  %s2, 16, %s42, [#allocation7]
    $region13: #{transformer_lm_forward.10} parent=1 // pred_fallthru
      _
    // Predicated region
    $region14: #{transformer_lm_forward.10} parent=1 // pred_check
      _
    $region15: #{transformer_lm_forward.10} parent=1 // pred_check_branch
      %46 = sbr.rel (0) target = $region17
    $region16: #{transformer_lm_forward.10} parent=1 // pred_region
      %47 = dma.done [#allocation4], 128
    $region17: #{transformer_lm_forward.10} parent=1 // pred_fallthru
      _
    // Predicated region
    $region18: #{transformer_lm_forward.10} parent=1 // pred_check
      _
    $region19: #{transformer_lm_forward.10} parent=1 // pred_check_branch
      %49 = sbr.rel (0) target = $region21
    $region20: #{transformer_lm_forward.10} parent=1 // pred_region
      %50 = dma.done [#allocation7], 256
    $region21: #{transformer_lm_forward.10} parent=1 // pred_fallthru
      _
    // Predicated region
    $region22: #{transformer_lm_forward.10} parent=1 // pred_check
      _
    $region23: #{transformer_lm_forward.10} parent=1 // pred_check_branch
      %52 = sbr.rel (0) target = $region25
    $region24: #{transformer_lm_forward.10} parent=1 // pred_region
      %53 = dma.done [#allocation7], 16
    $region25: #{transformer_lm_forward.10} parent=1 // pred_fallthru
      _
    %p55 = scmp.eq.s32.totalorder 0, 0
    // Predicated region
    $region26: #{transformer_lm_forward.10} parent=1 // pred_check
      %p56 = pneg %p55
    $region27: #{transformer_lm_forward.10} parent=1 // pred_check_branch
      %58 = sbr.rel (%p56) target = $region29
    $region28: #{transformer_lm_forward.10} parent=1 // pred_region
      %vm59 = vcmask 785408
      %60 = vst.msk [vmem:[#allocation2] sm:$0xff] %vm59, 0.0
      %61 = vst.msk [vmem:[#allocation2 + $0x8] sm:$0xff] %vm59, 0.0
    $region29: #{transformer_lm_forward.10} parent=1 // pred_fallthru
      _
    %v62 = vld [vmem:[#allocation2] sm:$0xff]
    %v63 = vld [vmem:[#allocation2 + $0x8] sm:$0xff]
    %v64 = vld [vmem:[#allocation3] sm:$0xf]
    %v65 = vld [vmem:[#allocation3 + $0x4] sm:$0xf]
    %v66 = vld [vmem:[#allocation6] sm:$0xf]
    %v67 = vld [vmem:[#allocation6 + $0x4] sm:$0xf]
    %v68 = vld [vmem:[#allocation6 + $0x8] sm:$0xf]
    %v69 = vld [vmem:[#allocation6 + $0xc] sm:$0xf]
    %v72 = vunpack.c.l.b16 %v64
    %v73 = vunpack.c.l.b16 %v65
    %v74 = vpack.c.b16 %v73, %v72
    %v79 = vunpack.c.l.b16 %v66
    %v80 = vunpack.c.l.b16 %v67
    %v81 = vunpack.c.l.b16 %v68
    %v82 = vunpack.c.l.b16 %v69
    %v83 = vpack.c.b16 %v80, %v79
    %v84 = vpack.c.b16 %v82, %v81
    %vm87 = vcmask 261120
    %v89 = vsel %vm87, %v74, 0
    %91 = vmatprep.subr.bf16.mxu0 0
    %92 = vmatpush1.bf16.msra.mxu0 %v83
    %93 = vmatprep.subr.bf16.mxu0 0
    %94 = vmatpush1.bf16.msra.mxu0 %v84
    %95 = vmatprep.subr.bf16.mxu0 0
    %96 = vmatpush1.bf16.msra.mxu0 0
    %97 = vmatprep.subr.bf16.mxu0 0
    %98 = vmatpush1.bf16.msra.mxu0 0
    %99 = vmatprep.subr.bf16.mxu0 0
    %100 = vmatpush1.bf16.msra.mxu0 0
    %101 = vmatprep.subr.bf16.mxu0 0
    %102 = vmatpush1.bf16.msra.mxu0 0
    %103 = vmatprep.subr.bf16.mxu0 0
    %104 = vmatpush1.bf16.msra.mxu0 0
    %105 = vmatprep.subr.bf16.mxu0 0
    %106 = vmatpush1.bf16.msra.mxu0 0
    %107 = vmatprep.subr.bf16.mxu0 0
    %108 = vmatpush1.bf16.msra.mxu0 0
    %109 = vmatprep.subr.bf16.mxu0 0
    %110 = vmatpush1.bf16.msra.mxu0 0
    %111 = vmatprep.subr.bf16.mxu0 0
    %112 = vmatpush1.bf16.msra.mxu0 0
    %113 = vmatprep.subr.bf16.mxu0 0
    %114 = vmatpush1.bf16.msra.mxu0 0
    %115 = vmatprep.subr.bf16.mxu0 0
    %116 = vmatpush1.bf16.msra.mxu0 0
    %117 = vmatprep.subr.bf16.mxu0 0
    %118 = vmatpush1.bf16.msra.mxu0 0
    %119 = vmatprep.subr.bf16.mxu0 0
    %120 = vmatpush1.bf16.msra.mxu0 0
    %121 = vmatprep.subr.bf16.mxu0 0
    %122 = vmatpush1.bf16.msra.mxu0 0
    %123 = vmatprep.mubr.bf16.mxu0 0
    %124 = vmatmul.mubr.bf16.gmra.mrb[0].mxu0 %v89
    %v125 = vpop.f32.mrb[0].mxu0
    %v126 = vadd.f32 0.0, %v125
    %v127 = vpop.f32.mrb[0].mxu0
    %v128 = vpop.f32.mrb[0].mxu0
    %v129 = vadd.f32 0.0, %v128
    %v130 = vpop.f32.mrb[0].mxu0
    %131 = vdwg.mxu0
    %v132 = vadd.f32 %v62, %v126
    %v133 = vadd.f32 %v63, %v129
    %vm134 = vcmask 785408
    %135 = vst.msk [vmem:[#allocation2] sm:$0xff] %vm134, %v132
    %136 = vst.msk [vmem:[#allocation2 + $0x8] sm:$0xff] %vm134, %v133
    // Predicated region
    $region30: #{transformer_lm_forward.10} parent=1 // pred_check
      %p137 = pneg %p55
    $region31: #{transformer_lm_forward.10} parent=1 // pred_check_branch
      %139 = sbr.rel (%p137) target = $region33
    $region32: #{transformer_lm_forward.10} parent=1 // pred_region
      %v140 = vld [vmem:[#allocation2] sm:$0xff]
      %v141 = vld [vmem:[#allocation2 + $0x8] sm:$0xff]
      %v142 = vld [vmem:[#allocation8] sm:$0x1]
      %v144 = vlaneseq
      %v145 = vshrl.u32 %v144, 7
      %v146 = vsub.s32 0, %v145
      %v147 = vrot.slane %v142, %v146
      %v149 = vadd.f32 %v140, %v147
      %v150 = vadd.f32 %v141, %v147
      %v151 = vpack.c.bf16 %v150, %v149
      %v153 = vunpack.c.l.b16 %v151
      %v154 = vunpack.c.h.b16 %v151
      %v155 = vpack.c.b16 %v153, %v153
      %v156 = vpack.c.b16 %v154, %v154
      %vm159 = vcmask 781312
      %160 = vst.msk [vmem:[#allocation9] sm:$0xf] %vm159, %v155
      %161 = vst.msk [vmem:[#allocation9 + $0x4] sm:$0xf] %vm159, %v156
    $region33: #{transformer_lm_forward.10} parent=1 // pred_fallthru
      _
    // Predicated region
    $region34: #{transformer_lm_forward.10} parent=1 // pred_check
      _
    $region35: #{transformer_lm_forward.10} parent=1 // pred_check_branch
      %163 = sbr.rel (0) target = $region37
    $region36: #{transformer_lm_forward.10} parent=1 // pred_region
      %s165 = ssub.s32 128, 128
      %166 = vsyncadd [#allocation5], %s165
      %s167 = sshll.u32 [#allocation9], 4
      %s168 = int_to_ptr.vmem [resolvable:$true] %s167
      %173 = dma.vmem_to_hbm [thread:$0]  %s168, 128, %s3, [#allocation5], 64, 64, 4
    $region37: #{transformer_lm_forward.10} parent=1 // pred_fallthru
      _
    // Predicated region
    $region38: #{transformer_lm_forward.10} parent=1 // pred_check
      _
    $region39: #{transformer_lm_forward.10} parent=1 // pred_check_branch
      %175 = sbr.rel (0) target = $region41
    $region40: #{transformer_lm_forward.10} parent=1 // pred_region
      %176 = dma.done [#allocation5], 128
    $region41: #{transformer_lm_forward.10} parent=1 // pred_fallthru
      _
    %177 = vsyncpa [#allocation4], 1
    %178 = vsyncpa [#allocation7], 1
    %179 = vsyncpa [#allocation5], 1

// kernel: transformer_lm_forward.12
$region0: #{transformer_lm_forward.12}
  #allocation0 [shape = 'u32[]', space=smem, size = 0x4, offset = 0x4, fixed_abs, tag = 'smem constant byte address 0x4 - core index']
  #allocation1 [shape = 'u32[144,128]{1,0:T(1,128)}', space=vmem, size = 0x12000, scoped, tag = 'internal scratch']
  #allocation2 [shape = 'f32[16,32]{1,0:T(8,128)}', space=vmem, size = 0x2000, scoped, tag = 'scratch operand']
  %s0 = inlined_call_operand.hbm [shape: bf16[16,32], index: 0, kind: input, shape index: {}]
  %s1 = inlined_call_operand.hbm [shape: bf16[32,32], index: 1, kind: input, shape index: {}]
  %s2 = inlined_call_operand.hbm [shape: f32[1,32], index: 2, kind: input, shape index: {}]
  %s3 = inlined_call_operand.hbm [shape: bf16[16,32], index: 3, kind: input, shape index: {}]
  %s4 = inlined_call_operand.hbm [shape: f32[1,32], index: 4, kind: input, shape index: {}]
  %s5 = inlined_call_operand.hbm [shape: f32[1,32], index: 5, kind: input, shape index: {}]
  %s6 = inlined_call_operand.hbm [shape: bf16[16,32], index: 6, kind: output, shape index: {}]
  %s7 = sld [smem:[#allocation0]]
  $region66: #{transformer_lm_forward.12} parent=0
    _
  %s9 = ssub.s32 1, %s7
  %s10 = scalar_select 0, %s9, %s7
  $region1: #{transformer_lm_forward.12} parent=0
    #allocation3 [shape = 'u8[4096]{0}', space=vmem, size = 0x1000, scoped, tag = 'input window, operand 0, single buffered']
    #allocation4 [shape = 's32[1]{0}', space=sflag, size = 0x4, scoped, tag = 'scoped memory for transformer_lm_forward.12']
    #allocation5 [shape = 's32[1]{0}', space=sflag, size = 0x4, scoped, tag = 'scoped memory for transformer_lm_forward.12']
    #allocation6 [shape = 'u8[8192]{0}', space=vmem, size = 0x2000, scoped, tag = 'input window, operand 1, single buffered']
    #allocation7 [shape = 's32[1]{0}', space=sflag, size = 0x4, scoped, tag = 'scoped memory for transformer_lm_forward.12']
    #allocation8 [shape = 'u8[512]{0}', space=vmem, size = 0x400, scoped, tag = 'input window, operand 2, single buffered']
    #allocation9 [shape = 'u8[4096]{0}', space=vmem, size = 0x1000, scoped, tag = 'input window, operand 3, single buffered']
    #allocation10 [shape = 's32[1]{0}', space=sflag, size = 0x4, scoped, tag = 'scoped memory for transformer_lm_forward.12']
    #allocation11 [shape = 'u8[512]{0}', space=vmem, size = 0x400, scoped, tag = 'input window, operand 4, single buffered']
    #allocation12 [shape = 'u8[512]{0}', space=vmem, size = 0x400, scoped, tag = 'input window, operand 5, single buffered']
    #allocation13 [shape = 's32[1]{0}', space=sflag, size = 0x4, scoped, tag = 'scoped memory for transformer_lm_forward.12']
    #allocation14 [shape = 'u8[4096]{0}', space=vmem, size = 0x1000, scoped, tag = 'output window, operand 0, single buffered']
    %11 = vsyncpa [#allocation4], 0
    %12 = vsyncpa [#allocation7], 0
    %13 = vsyncpa [#allocation10], 0
    %14 = vsyncpa [#allocation13], 0
    %15 = vsyncpa [#allocation5], 0
    // Predicated region
    $region2: #{transformer_lm_forward.12} parent=1 // pred_check
      _
    $region3: #{transformer_lm_forward.12} parent=1 // pred_check_branch
      %17 = sbr.rel (0) target = $region5
    $region4: #{transformer_lm_forward.12} parent=1 // pred_region
      %s19 = ssub.s32 128, 128
      %20 = vsyncadd [#allocation4], %s19
      %s21 = sshll.u32 [#allocation3], 4
      %s22 = int_to_ptr.vmem [resolvable:$true] %s21
      %27 = dma.hbm_to_vmem [thread:$0]  %s0, 128, %s22, [#allocation4], 64, 64, 4
    $region5: #{transformer_lm_forward.12} parent=1 // pred_fallthru
      _
    // Predicated region
    $region6: #{transformer_lm_forward.12} parent=1 // pred_check
      _
    $region7: #{transformer_lm_forward.12} parent=1 // pred_check_branch
      %29 = sbr.rel (0) target = $region9
    $region8: #{transformer_lm_forward.12} parent=1 // pred_region
      %s31 = ssub.s32 256, 256
      %32 = vsyncadd [#allocation7], %s31
      %s33 = sshll.u32 [#allocation6], 4
      %s34 = int_to_ptr.vmem [resolvable:$true] %s33
      %39 = dma.hbm_to_vmem [thread:$0]  %s1, 256, %s34, [#allocation7], 64, 64, 4
    $region9: #{transformer_lm_forward.12} parent=1 // pred_fallthru
      _
    // Predicated region
    $region10: #{transformer_lm_forward.12} parent=1 // pred_check
      _
    $region11: #{transformer_lm_forward.12} parent=1 // pred_check_branch
      %41 = sbr.rel (0) target = $region13
    $region12: #{transformer_lm_forward.12} parent=1 // pred_region
      %s43 = ssub.s32 16, 16
      %44 = vsyncadd [#allocation7], %s43
      %s46 = sshll.u32 [#allocation8], 4
      %s47 = int_to_ptr.vmem [resolvable:$true] %s46
      %49 = dma.hbm_to_vmem [thread:$0]  %s2, 16, %s47, [#allocation7]
    $region13: #{transformer_lm_forward.12} parent=1 // pred_fallthru
      _
    // Predicated region
    $region14: #{transformer_lm_forward.12} parent=1 // pred_check
      _
    $region15: #{transformer_lm_forward.12} parent=1 // pred_check_branch
      %51 = sbr.rel (0) target = $region17
    $region16: #{transformer_lm_forward.12} parent=1 // pred_region
      %s53 = ssub.s32 128, 128
      %54 = vsyncadd [#allocation10], %s53
      %s55 = sshll.u32 [#allocation9], 4
      %s56 = int_to_ptr.vmem [resolvable:$true] %s55
      %61 = dma.hbm_to_vmem [thread:$0]  %s3, 128, %s56, [#allocation10], 64, 64, 4
    $region17: #{transformer_lm_forward.12} parent=1 // pred_fallthru
      _
    // Predicated region
    $region18: #{transformer_lm_forward.12} parent=1 // pred_check
      _
    $region19: #{transformer_lm_forward.12} parent=1 // pred_check_branch
      %63 = sbr.rel (0) target = $region21
    $region20: #{transformer_lm_forward.12} parent=1 // pred_region
      %s65 = ssub.s32 16, 16
      %66 = vsyncadd [#allocation10], %s65
      %s68 = sshll.u32 [#allocation11], 4
      %s69 = int_to_ptr.vmem [resolvable:$true] %s68
      %71 = dma.hbm_to_vmem [thread:$0]  %s4, 16, %s69, [#allocation10]
    $region21: #{transformer_lm_forward.12} parent=1 // pred_fallthru
      _
    // Predicated region
    $region22: #{transformer_lm_forward.12} parent=1 // pred_check
      _
    $region23: #{transformer_lm_forward.12} parent=1 // pred_check_branch
      %73 = sbr.rel (0) target = $region25
    $region24: #{transformer_lm_forward.12} parent=1 // pred_region
      %s75 = ssub.s32 16, 16
      %76 = vsyncadd [#allocation13], %s75
      %s78 = sshll.u32 [#allocation12], 4
      %s79 = int_to_ptr.vmem [resolvable:$true] %s78
      %81 = dma.hbm_to_vmem [thread:$0]  %s5, 16, %s79, [#allocation13]
    $region25: #{transformer_lm_forward.12} parent=1 // pred_fallthru
      _
    // Predicated region
    $region26: #{transformer_lm_forward.12} parent=1 // pred_check
      _
    $region27: #{transformer_lm_forward.12} parent=1 // pred_check_branch
      %83 = sbr.rel (0) target = $region29
    $region28: #{transformer_lm_forward.12} parent=1 // pred_region
      %84 = dma.done [#allocation4], 128
    $region29: #{transformer_lm_forward.12} parent=1 // pred_fallthru
      _
    // Predicated region
    $region30: #{transformer_lm_forward.12} parent=1 // pred_check
      _
    $region31: #{transformer_lm_forward.12} parent=1 // pred_check_branch
      %86 = sbr.rel (0) target = $region33
    $region32: #{transformer_lm_forward.12} parent=1 // pred_region
      %87 = dma.done [#allocation7], 256
    $region33: #{transformer_lm_forward.12} parent=1 // pred_fallthru
      _
    // Predicated region
    $region34: #{transformer_lm_forward.12} parent=1 // pred_check
      _
    $region35: #{transformer_lm_forward.12} parent=1 // pred_check_branch
      %89 = sbr.rel (0) target = $region37
    $region36: #{transformer_lm_forward.12} parent=1 // pred_region
      %90 = dma.done [#allocation7], 16
    $region37: #{transformer_lm_forward.12} parent=1 // pred_fallthru
      _
    // Predicated region
    $region38: #{transformer_lm_forward.12} parent=1 // pred_check
      _
    $region39: #{transformer_lm_forward.12} parent=1 // pred_check_branch
      %92 = sbr.rel (0) target = $region41
    $region40: #{transformer_lm_forward.12} parent=1 // pred_region
      %93 = dma.done [#allocation10], 128
    $region41: #{transformer_lm_forward.12} parent=1 // pred_fallthru
      _
    // Predicated region
    $region42: #{transformer_lm_forward.12} parent=1 // pred_check
      _
    $region43: #{transformer_lm_forward.12} parent=1 // pred_check_branch
      %95 = sbr.rel (0) target = $region45
    $region44: #{transformer_lm_forward.12} parent=1 // pred_region
      %96 = dma.done [#allocation10], 16
    $region45: #{transformer_lm_forward.12} parent=1 // pred_fallthru
      _
    // Predicated region
    $region46: #{transformer_lm_forward.12} parent=1 // pred_check
      _
    $region47: #{transformer_lm_forward.12} parent=1 // pred_check_branch
      %98 = sbr.rel (0) target = $region49
    $region48: #{transformer_lm_forward.12} parent=1 // pred_region
      %99 = dma.done [#allocation13], 16
    $region49: #{transformer_lm_forward.12} parent=1 // pred_fallthru
      _
    %p101 = scmp.eq.s32.totalorder 0, 0
    // Predicated region
    $region50: #{transformer_lm_forward.12} parent=1 // pred_check
      %p102 = pneg %p101
    $region51: #{transformer_lm_forward.12} parent=1 // pred_check_branch
      %104 = sbr.rel (%p102) target = $region53
    $region52: #{transformer_lm_forward.12} parent=1 // pred_region
      %vm105 = vcmask 261120
      %106 = vst.msk [vmem:[#allocation2] sm:$0xff] %vm105, 0.0
      %107 = vst.msk [vmem:[#allocation2 + $0x8] sm:$0xff] %vm105, 0.0
    $region53: #{transformer_lm_forward.12} parent=1 // pred_fallthru
      _
    %v108 = vld [vmem:[#allocation2] sm:$0xff]
    %v109 = vld [vmem:[#allocation2 + $0x8] sm:$0xff]
    %v110 = vld [vmem:[#allocation3] sm:$0xf]
    %v111 = vld [vmem:[#allocation3 + $0x4] sm:$0xf]
    %v112 = vld [vmem:[#allocation6] sm:$0xf]
    %v113 = vld [vmem:[#allocation6 + $0x4] sm:$0xf]
    %v114 = vld [vmem:[#allocation6 + $0x8] sm:$0xf]
    %v115 = vld [vmem:[#allocation6 + $0xc] sm:$0xf]
    %v118 = vunpack.c.l.b16 %v110
    %v119 = vunpack.c.l.b16 %v111
    %v120 = vpack.c.b16 %v119, %v118
    %v125 = vunpack.c.l.b16 %v112
    %v126 = vunpack.c.l.b16 %v113
    %v127 = vunpack.c.l.b16 %v114
    %v128 = vunpack.c.l.b16 %v115
    %v129 = vpack.c.b16 %v126, %v125
    %v130 = vpack.c.b16 %v128, %v127
    %vm133 = vcmask 261120
    %v135 = vsel %vm133, %v120, 0
    %137 = vmatprep.subr.bf16.mxu0 0
    %138 = vmatpush1.bf16.msra.mxu0 %v129
    %139 = vmatprep.subr.bf16.mxu0 0
    %140 = vmatpush1.bf16.msra.mxu0 %v130
    %141 = vmatprep.subr.bf16.mxu0 0
    %142 = vmatpush1.bf16.msra.mxu0 0
    %143 = vmatprep.subr.bf16.mxu0 0
    %144 = vmatpush1.bf16.msra.mxu0 0
    %145 = vmatprep.subr.bf16.mxu0 0
    %146 = vmatpush1.bf16.msra.mxu0 0
    %147 = vmatprep.subr.bf16.mxu0 0
    %148 = vmatpush1.bf16.msra.mxu0 0
    %149 = vmatprep.subr.bf16.mxu0 0
    %150 = vmatpush1.bf16.msra.mxu0 0
    %151 = vmatprep.subr.bf16.mxu0 0
    %152 = vmatpush1.bf16.msra.mxu0 0
    %153 = vmatprep.subr.bf16.mxu0 0
    %154 = vmatpush1.bf16.msra.mxu0 0
    %155 = vmatprep.subr.bf16.mxu0 0
    %156 = vmatpush1.bf16.msra.mxu0 0
    %157 = vmatprep.subr.bf16.mxu0 0
    %158 = vmatpush1.bf16.msra.mxu0 0
    %159 = vmatprep.subr.bf16.mxu0 0
    %160 = vmatpush1.bf16.msra.mxu0 0
    %161 = vmatprep.subr.bf16.mxu0 0
    %162 = vmatpush1.bf16.msra.mxu0 0
    %163 = vmatprep.subr.bf16.mxu0 0
    %164 = vmatpush1.bf16.msra.mxu0 0
    %165 = vmatprep.subr.bf16.mxu0 0
    %166 = vmatpush1.bf16.msra.mxu0 0
    %167 = vmatprep.subr.bf16.mxu0 0
    %168 = vmatpush1.bf16.msra.mxu0 0
    %169 = vmatprep.mubr.bf16.mxu0 0
    %170 = vmatmul.mubr.bf16.gmra.mrb[0].mxu0 %v135
    %v171 = vpop.f32.mrb[0].mxu0
    %v172 = vadd.f32 0.0, %v171
    %v173 = vpop.f32.mrb[0].mxu0
    %v174 = vpop.f32.mrb[0].mxu0
    %v175 = vadd.f32 0.0, %v174
    %v176 = vpop.f32.mrb[0].mxu0
    %177 = vdwg.mxu0
    %v178 = vadd.f32 %v108, %v172
    %v179 = vadd.f32 %v109, %v175
    %180 = vst.msk [vmem:[#allocation2] sm:$0xff] %vm133, %v178
    %181 = vst.msk [vmem:[#allocation2 + $0x8] sm:$0xff] %vm133, %v179
    // Predicated region
    $region54: #{transformer_lm_forward.12} parent=1 // pred_check
      %p182 = pneg %p101
    $region55: #{transformer_lm_forward.12} parent=1 // pred_check_branch
      %184 = sbr.rel (%p182) target = $region57
    $region56: #{transformer_lm_forward.12} parent=1 // pred_region
      %v185 = vld [vmem:[#allocation2] sm:$0xff]
      %v186 = vld [vmem:[#allocation2 + $0x8] sm:$0xff]
      %v187 = vld [vmem:[#allocation8] sm:$0x1]
      %v189 = vlaneseq
      %v190 = vshrl.u32 %v189, 7
      %v191 = vsub.s32 0, %v190
      %v192 = vrot.slane %v187, %v191
      %v194 = vadd.f32 %v185, %v192
      %v195 = vadd.f32 %v186, %v192
      %v196 = vld [vmem:[#allocation9] sm:$0xf]
      %v197 = vld [vmem:[#allocation9 + $0x4] sm:$0xf]
      %v198 = vunpack.c.l.bf16 %v196
      %v199 = vunpack.c.l.bf16 %v197
      %v200 = vadd.f32 %v194, %v198
      %v201 = vadd.f32 %v195, %v199
      %v202 = vsel %vm133, %v200, 0.0
      %203 = vadd.xlane.f32.xlu0 %v202
      %v204 = vpop.xlane.xlu0 %203
      %v205 = vsel %vm133, %v201, 0.0
      %206 = vadd.xlane.f32.xlu0 %v205
      %v207 = vpop.xlane.xlu0 %206
      %v208 = vrcp.pop 32.0
      %v209 = vmul.f32 %v204, %v208
      %v210 = vmul.f32 %v207, %v208
      %v211 = vsub.f32 %v200, %v209
      %v212 = vsub.f32 %v201, %v210
      %v213 = vmul.f32 %v211, %v211
      %v214 = vmul.f32 %v212, %v212
      %v215 = vsel %vm133, %v213, 0.0
      %216 = vadd.xlane.f32.xlu0 %v215
      %v217 = vpop.xlane.xlu0 %216
      %v218 = vsel %vm133, %v214, 0.0
      %219 = vadd.xlane.f32.xlu0 %v218
      %v220 = vpop.xlane.xlu0 %219
      %v221 = vmul.f32 %v217, %v208
      %v222 = vmul.f32 %v220, %v208
      %v223 = vadd.f32 %v221, 1e-05
      %v224 = vadd.f32 %v222, 1e-05
      %v225 = vrsqrt.pop %v223
      %v226 = vrsqrt.pop %v224
      %v227 = vmul.f32 %v211, %v225
      %v228 = vmul.f32 %v212, %v226
      %v229 = vld [vmem:[#allocation11] sm:$0x1]
      %v231 = vlaneseq
      %v232 = vshrl.u32 %v231, 7
      %v233 = vsub.s32 0, %v232
      %v234 = vrot.slane %v229, %v233
      %v236 = vmul.f32 %v227, %v234
      %v237 = vmul.f32 %v228, %v234
      %v238 = vld [vmem:[#allocation12] sm:$0x1]
      %v240 = vlaneseq
      %v241 = vshrl.u32 %v240, 7
      %v242 = vsub.s32 0, %v241
      %v243 = vrot.slane %v238, %v242
      %v245 = vadd.f32 %v236, %v243
      %v246 = vadd.f32 %v237, %v243
      %v247 = vpack.c.bf16 %v246, %v245
      %v249 = vunpack.c.l.b16 %v247
      %v250 = vunpack.c.h.b16 %v247
      %v251 = vpack.c.b16 %v249, %v249
      %v252 = vpack.c.b16 %v250, %v250
      %vm255 = vcmask 257024
      %256 = vst.msk [vmem:[#allocation14] sm:$0xf] %vm255, %v251
      %257 = vst.msk [vmem:[#allocation14 + $0x4] sm:$0xf] %vm255, %v252
    $region57: #{transformer_lm_forward.12} parent=1 // pred_fallthru
      _
    // Predicated region
    $region58: #{transformer_lm_forward.12} parent=1 // pred_check
      _
    $region59: #{transformer_lm_forward.12} parent=1 // pred_check_branch
      %259 = sbr.rel (0) target = $region61
    $region60: #{transformer_lm_forward.12} parent=1 // pred_region
      %s261 = ssub.s32 128, 128
      %262 = vsyncadd [#allocation5], %s261
      %s263 = sshll.u32 [#allocation14], 4
      %s264 = int_to_ptr.vmem [resolvable:$true] %s263
      %269 = dma.vmem_to_hbm [thread:$0]  %s264, 128, %s6, [#allocation5], 64, 64, 4
    $region61: #{transformer_lm_forward.12} parent=1 // pred_fallthru
      _
    // Predicated region
    $region62: #{transformer_lm_forward.12} parent=1 // pred_check
      _
    $region63: #{transformer_lm_forward.12} parent=1 // pred_check_branch
      %271 = sbr.rel (0) target = $region65
    $region64: #{transformer_lm_forward.12} parent=1 // pred_region
      %272 = dma.done [#allocation5], 128
    $region65: #{transformer_lm_forward.12} parent=1 // pred_fallthru
      _
    %273 = vsyncpa [#allocation4], 1
    %274 = vsyncpa [#allocation7], 1
    %275 = vsyncpa [#allocation10], 1
    %276 = vsyncpa [#allocation13], 1
    %277 = vsyncpa [#allocation5], 1

// kernel: transformer_lm_forward.13
$region0: #{transformer_lm_forward.13}
  #allocation0 [shape = 'u32[]', space=smem, size = 0x4, offset = 0x4, fixed_abs, tag = 'smem constant byte address 0x4 - core index']
  #allocation1 [shape = 'u32[144,128]{1,0:T(1,128)}', space=vmem, size = 0x12000, scoped, tag = 'internal scratch']
  #allocation2 [shape = 'f32[16,32]{1,0:T(8,128)}', space=vmem, size = 0x2000, scoped, tag = 'scratch operand']
  %s0 = inlined_call_operand.hbm [shape: bf16[16,32], index: 0, kind: input, shape index: {}]
  %s1 = inlined_call_operand.hbm [shape: bf16[32,64], index: 1, kind: input, shape index: {}]
  %s2 = inlined_call_operand.hbm [shape: f32[1,64], index: 2, kind: input, shape index: {}]
  %s3 = inlined_call_operand.hbm [shape: bf16[64,32], index: 3, kind: input, shape index: {}]
  %s4 = inlined_call_operand.hbm [shape: f32[1,32], index: 4, kind: input, shape index: {}]
  %s5 = inlined_call_operand.hbm [shape: f32[1,32], index: 5, kind: input, shape index: {}]
  %s6 = inlined_call_operand.hbm [shape: f32[1,32], index: 6, kind: input, shape index: {}]
  %s7 = inlined_call_operand.hbm [shape: bf16[16,32], index: 7, kind: output, shape index: {}]
  %s8 = sld [smem:[#allocation0]]
  $region74: #{transformer_lm_forward.13} parent=0
    _
  %s10 = ssub.s32 1, %s8
  %s11 = scalar_select 0, %s10, %s8
  $region1: #{transformer_lm_forward.13} parent=0
    #allocation3 [shape = 'u8[4096]{0}', space=vmem, size = 0x1000, scoped, tag = 'input window, operand 0, single buffered']
    #allocation4 [shape = 's32[1]{0}', space=sflag, size = 0x4, scoped, tag = 'scoped memory for transformer_lm_forward.13']
    #allocation5 [shape = 's32[1]{0}', space=sflag, size = 0x4, scoped, tag = 'scoped memory for transformer_lm_forward.13']
    #allocation6 [shape = 'u8[8192]{0}', space=vmem, size = 0x2000, scoped, tag = 'input window, operand 1, single buffered']
    #allocation7 [shape = 's32[1]{0}', space=sflag, size = 0x4, scoped, tag = 'scoped memory for transformer_lm_forward.13']
    #allocation8 [shape = 'u8[512]{0}', space=vmem, size = 0x400, scoped, tag = 'input window, operand 2, single buffered']
    #allocation9 [shape = 'u8[16384]{0}', space=vmem, size = 0x4000, scoped, tag = 'input window, operand 3, single buffered']
    #allocation10 [shape = 's32[1]{0}', space=sflag, size = 0x4, scoped, tag = 'scoped memory for transformer_lm_forward.13']
    #allocation11 [shape = 'u8[512]{0}', space=vmem, size = 0x400, scoped, tag = 'input window, operand 4, single buffered']
    #allocation12 [shape = 'u8[512]{0}', space=vmem, size = 0x400, scoped, tag = 'input window, operand 5, single buffered']
    #allocation13 [shape = 's32[1]{0}', space=sflag, size = 0x4, scoped, tag = 'scoped memory for transformer_lm_forward.13']
    #allocation14 [shape = 'u8[512]{0}', space=vmem, size = 0x400, scoped, tag = 'input window, operand 6, single buffered']
    #allocation15 [shape = 'u8[4096]{0}', space=vmem, size = 0x1000, scoped, tag = 'output window, operand 0, single buffered']
    %12 = vsyncpa [#allocation4], 0
    %13 = vsyncpa [#allocation7], 0
    %14 = vsyncpa [#allocation10], 0
    %15 = vsyncpa [#allocation13], 0
    %16 = vsyncpa [#allocation5], 0
    // Predicated region
    $region2: #{transformer_lm_forward.13} parent=1 // pred_check
      _
    $region3: #{transformer_lm_forward.13} parent=1 // pred_check_branch
      %18 = sbr.rel (0) target = $region5
    $region4: #{transformer_lm_forward.13} parent=1 // pred_region
      %s20 = ssub.s32 128, 128
      %21 = vsyncadd [#allocation4], %s20
      %s22 = sshll.u32 [#allocation3], 4
      %s23 = int_to_ptr.vmem [resolvable:$true] %s22
      %28 = dma.hbm_to_vmem [thread:$0]  %s0, 128, %s23, [#allocation4], 64, 64, 4
    $region5: #{transformer_lm_forward.13} parent=1 // pred_fallthru
      _
    // Predicated region
    $region6: #{transformer_lm_forward.13} parent=1 // pred_check
      _
    $region7: #{transformer_lm_forward.13} parent=1 // pred_check_branch
      %30 = sbr.rel (0) target = $region9
    $region8: #{transformer_lm_forward.13} parent=1 // pred_region
      %s32 = ssub.s32 256, 256
      %33 = vsyncadd [#allocation7], %s32
      %s34 = sshll.u32 [#allocation6], 4
      %s35 = int_to_ptr.vmem [resolvable:$true] %s34
      %40 = dma.hbm_to_vmem [thread:$0]  %s1, 256, %s35, [#allocation7], 64, 64, 4
    $region9: #{transformer_lm_forward.13} parent=1 // pred_fallthru
      _
    // Predicated region
    $region10: #{transformer_lm_forward.13} parent=1 // pred_check
      _
    $region11: #{transformer_lm_forward.13} parent=1 // pred_check_branch
      %42 = sbr.rel (0) target = $region13
    $region12: #{transformer_lm_forward.13} parent=1 // pred_region
      %s44 = ssub.s32 16, 16
      %45 = vsyncadd [#allocation7], %s44
      %s47 = sshll.u32 [#allocation8], 4
      %s48 = int_to_ptr.vmem [resolvable:$true] %s47
      %50 = dma.hbm_to_vmem [thread:$0]  %s2, 16, %s48, [#allocation7]
    $region13: #{transformer_lm_forward.13} parent=1 // pred_fallthru
      _
    // Predicated region
    $region14: #{transformer_lm_forward.13} parent=1 // pred_check
      _
    $region15: #{transformer_lm_forward.13} parent=1 // pred_check_branch
      %52 = sbr.rel (0) target = $region17
    $region16: #{transformer_lm_forward.13} parent=1 // pred_region
      %s54 = ssub.s32 512, 512
      %55 = vsyncadd [#allocation10], %s54
      %s56 = sshll.u32 [#allocation9], 4
      %s57 = int_to_ptr.vmem [resolvable:$true] %s56
      %62 = dma.hbm_to_vmem [thread:$0]  %s3, 512, %s57, [#allocation10], 64, 64, 4
    $region17: #{transformer_lm_forward.13} parent=1 // pred_fallthru
      _
    // Predicated region
    $region18: #{transformer_lm_forward.13} parent=1 // pred_check
      _
    $region19: #{transformer_lm_forward.13} parent=1 // pred_check_branch
      %64 = sbr.rel (0) target = $region21
    $region20: #{transformer_lm_forward.13} parent=1 // pred_region
      %s66 = ssub.s32 16, 16
      %67 = vsyncadd [#allocation10], %s66
      %s69 = sshll.u32 [#allocation11], 4
      %s70 = int_to_ptr.vmem [resolvable:$true] %s69
      %72 = dma.hbm_to_vmem [thread:$0]  %s4, 16, %s70, [#allocation10]
    $region21: #{transformer_lm_forward.13} parent=1 // pred_fallthru
      _
    // Predicated region
    $region22: #{transformer_lm_forward.13} parent=1 // pred_check
      _
    $region23: #{transformer_lm_forward.13} parent=1 // pred_check_branch
      %74 = sbr.rel (0) target = $region25
    $region24: #{transformer_lm_forward.13} parent=1 // pred_region
      %s76 = ssub.s32 16, 16
      %77 = vsyncadd [#allocation13], %s76
      %s79 = sshll.u32 [#allocation12], 4
      %s80 = int_to_ptr.vmem [resolvable:$true] %s79
      %82 = dma.hbm_to_vmem [thread:$0]  %s5, 16, %s80, [#allocation13]
    $region25: #{transformer_lm_forward.13} parent=1 // pred_fallthru
      _
    // Predicated region
    $region26: #{transformer_lm_forward.13} parent=1 // pred_check
      _
    $region27: #{transformer_lm_forward.13} parent=1 // pred_check_branch
      %84 = sbr.rel (0) target = $region29
    $region28: #{transformer_lm_forward.13} parent=1 // pred_region
      %s86 = ssub.s32 16, 16
      %87 = vsyncadd [#allocation13], %s86
      %s89 = sshll.u32 [#allocation14], 4
      %s90 = int_to_ptr.vmem [resolvable:$true] %s89
      %92 = dma.hbm_to_vmem [thread:$0]  %s6, 16, %s90, [#allocation13]
    $region29: #{transformer_lm_forward.13} parent=1 // pred_fallthru
      _
    // Predicated region
    $region30: #{transformer_lm_forward.13} parent=1 // pred_check
      _
    $region31: #{transformer_lm_forward.13} parent=1 // pred_check_branch
      %94 = sbr.rel (0) target = $region33
    $region32: #{transformer_lm_forward.13} parent=1 // pred_region
      %95 = dma.done [#allocation4], 128
    $region33: #{transformer_lm_forward.13} parent=1 // pred_fallthru
      _
    // Predicated region
    $region34: #{transformer_lm_forward.13} parent=1 // pred_check
      _
    $region35: #{transformer_lm_forward.13} parent=1 // pred_check_branch
      %97 = sbr.rel (0) target = $region37
    $region36: #{transformer_lm_forward.13} parent=1 // pred_region
      %98 = dma.done [#allocation7], 256
    $region37: #{transformer_lm_forward.13} parent=1 // pred_fallthru
      _
    // Predicated region
    $region38: #{transformer_lm_forward.13} parent=1 // pred_check
      _
    $region39: #{transformer_lm_forward.13} parent=1 // pred_check_branch
      %100 = sbr.rel (0) target = $region41
    $region40: #{transformer_lm_forward.13} parent=1 // pred_region
      %101 = dma.done [#allocation7], 16
    $region41: #{transformer_lm_forward.13} parent=1 // pred_fallthru
      _
    // Predicated region
    $region42: #{transformer_lm_forward.13} parent=1 // pred_check
      _
    $region43: #{transformer_lm_forward.13} parent=1 // pred_check_branch
      %103 = sbr.rel (0) target = $region45
    $region44: #{transformer_lm_forward.13} parent=1 // pred_region
      %104 = dma.done [#allocation10], 512
    $region45: #{transformer_lm_forward.13} parent=1 // pred_fallthru
      _
    // Predicated region
    $region46: #{transformer_lm_forward.13} parent=1 // pred_check
      _
    $region47: #{transformer_lm_forward.13} parent=1 // pred_check_branch
      %106 = sbr.rel (0) target = $region49
    $region48: #{transformer_lm_forward.13} parent=1 // pred_region
      %107 = dma.done [#allocation10], 16
    $region49: #{transformer_lm_forward.13} parent=1 // pred_fallthru
      _
    // Predicated region
    $region50: #{transformer_lm_forward.13} parent=1 // pred_check
      _
    $region51: #{transformer_lm_forward.13} parent=1 // pred_check_branch
      %109 = sbr.rel (0) target = $region53
    $region52: #{transformer_lm_forward.13} parent=1 // pred_region
      %110 = dma.done [#allocation13], 16
    $region53: #{transformer_lm_forward.13} parent=1 // pred_fallthru
      _
    // Predicated region
    $region54: #{transformer_lm_forward.13} parent=1 // pred_check
      _
    $region55: #{transformer_lm_forward.13} parent=1 // pred_check_branch
      %112 = sbr.rel (0) target = $region57
    $region56: #{transformer_lm_forward.13} parent=1 // pred_region
      %113 = dma.done [#allocation13], 16
    $region57: #{transformer_lm_forward.13} parent=1 // pred_fallthru
      _
    %p115 = scmp.eq.s32.totalorder 0, 0
    // Predicated region
    $region58: #{transformer_lm_forward.13} parent=1 // pred_check
      %p116 = pneg %p115
    $region59: #{transformer_lm_forward.13} parent=1 // pred_check_branch
      %118 = sbr.rel (%p116) target = $region61
    $region60: #{transformer_lm_forward.13} parent=1 // pred_region
      %vm119 = vcmask 261120
      %120 = vst.msk [vmem:[#allocation2] sm:$0xff] %vm119, 0.0
      %121 = vst.msk [vmem:[#allocation2 + $0x8] sm:$0xff] %vm119, 0.0
    $region61: #{transformer_lm_forward.13} parent=1 // pred_fallthru
      _
    %v122 = vld [vmem:[#allocation3] sm:$0xf]
    %v123 = vld [vmem:[#allocation3 + $0x4] sm:$0xf]
    %v124 = vld [vmem:[#allocation6] sm:$0xf]
    %v125 = vld [vmem:[#allocation6 + $0x4] sm:$0xf]
    %v126 = vld [vmem:[#allocation6 + $0x8] sm:$0xf]
    %v127 = vld [vmem:[#allocation6 + $0xc] sm:$0xf]
    %v128 = vld [vmem:[#allocation8] sm:$0x1]
    %v130 = vlaneseq
    %v131 = vshrl.u32 %v130, 7
    %v132 = vsub.s32 0, %v131
    %v133 = vrot.slane %v128, %v132
    %v137 = vunpack.c.l.b16 %v122
    %v138 = vunpack.c.l.b16 %v123
    %v139 = vpack.c.b16 %v138, %v137
    %v144 = vunpack.c.l.b16 %v124
    %v145 = vunpack.c.l.b16 %v125
    %v146 = vunpack.c.l.b16 %v126
    %v147 = vunpack.c.l.b16 %v127
    %v148 = vpack.c.b16 %v145, %v144
    %v149 = vpack.c.b16 %v147, %v146
    %vm152 = vcmask 261120
    %v154 = vsel %vm152, %v139, 0
    %156 = vmatprep.subr.bf16.mxu0 0
    %157 = vmatpush1.bf16.msra.mxu0 %v148
    %158 = vmatprep.subr.bf16.mxu0 0
    %159 = vmatpush1.bf16.msra.mxu0 %v149
    %160 = vmatprep.subr.bf16.mxu0 0
    %161 = vmatpush1.bf16.msra.mxu0 0
    %162 = vmatprep.subr.bf16.mxu0 0
    %163 = vmatpush1.bf16.msra.mxu0 0
    %164 = vmatprep.subr.bf16.mxu0 0
    %165 = vmatpush1.bf16.msra.mxu0 0
    %166 = vmatprep.subr.bf16.mxu0 0
    %167 = vmatpush1.bf16.msra.mxu0 0
    %168 = vmatprep.subr.bf16.mxu0 0
    %169 = vmatpush1.bf16.msra.mxu0 0
    %170 = vmatprep.subr.bf16.mxu0 0
    %171 = vmatpush1.bf16.msra.mxu0 0
    %172 = vmatprep.subr.bf16.mxu0 0
    %173 = vmatpush1.bf16.msra.mxu0 0
    %174 = vmatprep.subr.bf16.mxu0 0
    %175 = vmatpush1.bf16.msra.mxu0 0
    %176 = vmatprep.subr.bf16.mxu0 0
    %177 = vmatpush1.bf16.msra.mxu0 0
    %178 = vmatprep.subr.bf16.mxu0 0
    %179 = vmatpush1.bf16.msra.mxu0 0
    %180 = vmatprep.subr.bf16.mxu0 0
    %181 = vmatpush1.bf16.msra.mxu0 0
    %182 = vmatprep.subr.bf16.mxu0 0
    %183 = vmatpush1.bf16.msra.mxu0 0
    %184 = vmatprep.subr.bf16.mxu0 0
    %185 = vmatpush1.bf16.msra.mxu0 0
    %186 = vmatprep.subr.bf16.mxu0 0
    %187 = vmatpush1.bf16.msra.mxu0 0
    %188 = vmatprep.mubr.bf16.mxu0 0
    %189 = vmatmul.mubr.bf16.gmra.mrb[0].mxu0 %v154
    %v190 = vpop.f32.mrb[0].mxu0
    %v191 = vadd.f32 %v133, %v190
    %v192 = vpop.f32.mrb[0].mxu0
    %v193 = vpop.f32.mrb[0].mxu0
    %v194 = vadd.f32 %v133, %v193
    %v195 = vpop.f32.mrb[0].mxu0
    %196 = vdwg.mxu0
    %v197 = vmax.f32 %v191, 0.0
    %v198 = vmax.f32 %v194, 0.0
    %v199 = vpack.c.bf16 %v198, %v197
    %v200 = vld [vmem:[#allocation2] sm:$0xff]
    %v201 = vld [vmem:[#allocation2 + $0x8] sm:$0xff]
    %v202 = vld [vmem:[#allocation9] sm:$0xf]
    %v203 = vld [vmem:[#allocation9 + $0x4] sm:$0xf]
    %v204 = vld [vmem:[#allocation9 + $0x8] sm:$0xf]
    %v205 = vld [vmem:[#allocation9 + $0xc] sm:$0xf]
    %v206 = vld [vmem:[#allocation9 + $0x10] sm:$0xf]
    %v207 = vld [vmem:[#allocation9 + $0x14] sm:$0xf]
    %v208 = vld [vmem:[#allocation9 + $0x18] sm:$0xf]
    %v209 = vld [vmem:[#allocation9 + $0x1c] sm:$0xf]
    %v218 = vunpack.c.l.b16 %v202
    %v219 = vunpack.c.l.b16 %v203
    %v220 = vunpack.c.l.b16 %v204
    %v221 = vunpack.c.l.b16 %v205
    %v222 = vunpack.c.l.b16 %v206
    %v223 = vunpack.c.l.b16 %v207
    %v224 = vunpack.c.l.b16 %v208
    %v225 = vunpack.c.l.b16 %v209
    %v226 = vpack.c.b16 %v219, %v218
    %v227 = vpack.c.b16 %v221, %v220
    %v228 = vpack.c.b16 %v223, %v222
    %v229 = vpack.c.b16 %v225, %v224
    %vm234 = vcmask 523264
    %v236 = vsel %vm234, %v199, 0
    %238 = vmatprep.subr.bf16.mxu0 0
    %239 = vmatpush1.bf16.msra.mxu0 %v226
    %240 = vmatprep.subr.bf16.mxu0 0
    %241 = vmatpush1.bf16.msra.mxu0 %v227
    %242 = vmatprep.subr.bf16.mxu0 0
    %243 = vmatpush1.bf16.msra.mxu0 %v228
    %244 = vmatprep.subr.bf16.mxu0 0
    %245 = vmatpush1.bf16.msra.mxu0 %v229
    %246 = vmatprep.subr.bf16.mxu0 0
    %247 = vmatpush1.bf16.msra.mxu0 0
    %248 = vmatprep.subr.bf16.mxu0 0
    %249 = vmatpush1.bf16.msra.mxu0 0
    %250 = vmatprep.subr.bf16.mxu0 0
    %251 = vmatpush1.bf16.msra.mxu0 0
    %252 = vmatprep.subr.bf16.mxu0 0
    %253 = vmatpush1.bf16.msra.mxu0 0
    %254 = vmatprep.subr.bf16.mxu0 0
    %255 = vmatpush1.bf16.msra.mxu0 0
    %256 = vmatprep.subr.bf16.mxu0 0
    %257 = vmatpush1.bf16.msra.mxu0 0
    %258 = vmatprep.subr.bf16.mxu0 0
    %259 = vmatpush1.bf16.msra.mxu0 0
    %260 = vmatprep.subr.bf16.mxu0 0
    %261 = vmatpush1.bf16.msra.mxu0 0
    %262 = vmatprep.subr.bf16.mxu0 0
    %263 = vmatpush1.bf16.msra.mxu0 0
    %264 = vmatprep.subr.bf16.mxu0 0
    %265 = vmatpush1.bf16.msra.mxu0 0
    %266 = vmatprep.subr.bf16.mxu0 0
    %267 = vmatpush1.bf16.msra.mxu0 0
    %268 = vmatprep.subr.bf16.mxu0 0
    %269 = vmatpush1.bf16.msra.mxu0 0
    %270 = vmatprep.mubr.bf16.mxu0 0
    %271 = vmatmul.mubr.bf16.gmra.mrb[0].mxu0 %v236
    %v272 = vpop.f32.mrb[0].mxu0
    %v273 = vadd.f32 0.0, %v272
    %v274 = vpop.f32.mrb[0].mxu0
    %v275 = vpop.f32.mrb[0].mxu0
    %v276 = vadd.f32 0.0, %v275
    %v277 = vpop.f32.mrb[0].mxu0
    %278 = vdwg.mxu0
    %v279 = vadd.f32 %v200, %v273
    %v280 = vadd.f32 %v201, %v276
    %281 = vst.msk [vmem:[#allocation2] sm:$0xff] %vm152, %v279
    %282 = vst.msk [vmem:[#allocation2 + $0x8] sm:$0xff] %vm152, %v280
    // Predicated region
    $region62: #{transformer_lm_forward.13} parent=1 // pred_check
      %p283 = pneg %p115
    $region63: #{transformer_lm_forward.13} parent=1 // pred_check_branch
      %285 = sbr.rel (%p283) target = $region65
    $region64: #{transformer_lm_forward.13} parent=1 // pred_region
      %v286 = vld [vmem:[#allocation2] sm:$0xff]
      %v287 = vld [vmem:[#allocation2 + $0x8] sm:$0xff]
      %v288 = vld [vmem:[#allocation11] sm:$0x1]
      %v290 = vlaneseq
      %v291 = vshrl.u32 %v290, 7
      %v292 = vsub.s32 0, %v291
      %v293 = vrot.slane %v288, %v292
      %v295 = vadd.f32 %v286, %v293
      %v296 = vadd.f32 %v287, %v293
      %v297 = vld [vmem:[#allocation3] sm:$0xf]
      %v298 = vld [vmem:[#allocation3 + $0x4] sm:$0xf]
      %v299 = vunpack.c.l.bf16 %v297
      %v300 = vunpack.c.l.bf16 %v298
      %v301 = vadd.f32 %v295, %v299
      %v302 = vadd.f32 %v296, %v300
      %v303 = vsel %vm152, %v301, 0.0
      %304 = vadd.xlane.f32.xlu0 %v303
      %v305 = vpop.xlane.xlu0 %304
      %v306 = vsel %vm152, %v302, 0.0
      %307 = vadd.xlane.f32.xlu0 %v306
      %v308 = vpop.xlane.xlu0 %307
      %v309 = vrcp.pop 32.0
      %v310 = vmul.f32 %v305, %v309
      %v311 = vmul.f32 %v308, %v309
      %v312 = vsub.f32 %v301, %v310
      %v313 = vsub.f32 %v302, %v311
      %v314 = vmul.f32 %v312, %v312
      %v315 = vmul.f32 %v313, %v313
      %v316 = vsel %vm152, %v314, 0.0
      %317 = vadd.xlane.f32.xlu0 %v316
      %v318 = vpop.xlane.xlu0 %317
      %v319 = vsel %vm152, %v315, 0.0
      %320 = vadd.xlane.f32.xlu0 %v319
      %v321 = vpop.xlane.xlu0 %320
      %v322 = vmul.f32 %v318, %v309
      %v323 = vmul.f32 %v321, %v309
      %v324 = vadd.f32 %v322, 1e-05
      %v325 = vadd.f32 %v323, 1e-05
      %v326 = vrsqrt.pop %v324
      %v327 = vrsqrt.pop %v325
      %v328 = vmul.f32 %v312, %v326
      %v329 = vmul.f32 %v313, %v327
      %v330 = vld [vmem:[#allocation12] sm:$0x1]
      %v332 = vlaneseq
      %v333 = vshrl.u32 %v332, 7
      %v334 = vsub.s32 0, %v333
      %v335 = vrot.slane %v330, %v334
      %v337 = vmul.f32 %v328, %v335
      %v338 = vmul.f32 %v329, %v335
      %v339 = vld [vmem:[#allocation14] sm:$0x1]
      %v341 = vlaneseq
      %v342 = vshrl.u32 %v341, 7
      %v343 = vsub.s32 0, %v342
      %v344 = vrot.slane %v339, %v343
      %v346 = vadd.f32 %v337, %v344
      %v347 = vadd.f32 %v338, %v344
      %v348 = vpack.c.bf16 %v347, %v346
      %v350 = vunpack.c.l.b16 %v348
      %v351 = vunpack.c.h.b16 %v348
      %v352 = vpack.c.b16 %v350, %v350
      %v353 = vpack.c.b16 %v351, %v351
      %vm356 = vcmask 257024
      %357 = vst.msk [vmem:[#allocation15] sm:$0xf] %vm356, %v352
      %358 = vst.msk [vmem:[#allocation15 + $0x4] sm:$0xf] %vm356, %v353
    $region65: #{transformer_lm_forward.13} parent=1 // pred_fallthru
      _
    // Predicated region
    $region66: #{transformer_lm_forward.13} parent=1 // pred_check
      _
    $region67: #{transformer_lm_forward.13} parent=1 // pred_check_branch
      %360 = sbr.rel (0) target = $region69
    $region68: #{transformer_lm_forward.13} parent=1 // pred_region
      %s362 = ssub.s32 128, 128
      %363 = vsyncadd [#allocation5], %s362
      %s364 = sshll.u32 [#allocation15], 4
      %s365 = int_to_ptr.vmem [resolvable:$true] %s364
      %370 = dma.vmem_to_hbm [thread:$0]  %s365, 128, %s7, [#allocation5], 64, 64, 4
    $region69: #{transformer_lm_forward.13} parent=1 // pred_fallthru
      _
    // Predicated region
    $region70: #{transformer_lm_forward.13} parent=1 // pred_check
      _
    $region71: #{transformer_lm_forward.13} parent=1 // pred_check_branch
      %372 = sbr.rel (0) target = $region73
    $region72: #{transformer_lm_forward.13} parent=1 // pred_region
      %373 = dma.done [#allocation5], 128
    $region73: #{transformer_lm_forward.13} parent=1 // pred_fallthru
      _
    %374 = vsyncpa [#allocation4], 1
    %375 = vsyncpa [#allocation7], 1
    %376 = vsyncpa [#allocation10], 1
    %377 = vsyncpa [#allocation13], 1
    %378 = vsyncpa [#allocation5], 1

// kernel: transformer_lm_forward.11
$region0: #{transformer_lm_forward.11}
  #allocation0 [shape = 'u32[]', space=smem, size = 0x4, offset = 0x4, fixed_abs, tag = 'smem constant byte address 0x4 - core index']
  #allocation1 [shape = 'u32[144,128]{1,0:T(1,128)}', space=vmem, size = 0x12000, scoped, tag = 'internal scratch']
  #allocation2 [shape = 'f32[8,4]{1,0:T(8,128)}', space=vmem, size = 0x1000, scoped, tag = 'scratch operand']
  #allocation3 [shape = 'f32[8,4]{1,0:T(8,128)}', space=vmem, size = 0x1000, scoped, tag = 'scratch operand']
  #allocation4 [shape = 'f32[8,32]{1,0:T(8,128)}', space=vmem, size = 0x1000, scoped, tag = 'scratch operand']
  %s0 = inlined_call_operand.hbm [shape: bf16[2,8,96], index: 0, kind: input, shape index: {}, may-alias: {0,1}]
  %s1 = inlined_call_operand.hbm [shape: bf16[2,8,96], index: 1, kind: input, shape index: {}, may-alias: {0,1}]
  %s2 = inlined_call_operand.hbm [shape: bf16[2,8,32], index: 2, kind: output, shape index: {}]
  %s3 = sld [smem:[#allocation0]]
  $region57: #{transformer_lm_forward.11} parent=0
    _
  %s5 = ssub.s32 1, %s3
  %s6 = scalar_select 0, %s5, %s3
  $region1: #{transformer_lm_forward.11} parent=0
    #allocation5 [shape = 'u8[4096]{0}', space=vmem, size = 0x1000, scoped, tag = 'input window, operand 0']
    #allocation6 [shape = 's32[2]{0}', space=sflag, size = 0x8, scoped, tag = 'scoped memory for transformer_lm_forward.11']
    #allocation7 [shape = 's32[2]{0}', space=sflag, size = 0x8, scoped, tag = 'scoped memory for transformer_lm_forward.11']
    #allocation8 [shape = 'u8[4096]{0}', space=vmem, size = 0x1000, scoped, tag = 'input window, operand 1']
    #allocation9 [shape = 's32[2]{0}', space=sflag, size = 0x8, scoped, tag = 'scoped memory for transformer_lm_forward.11']
    #allocation10 [shape = 'u8[4096]{0}', space=vmem, size = 0x1000, scoped, tag = 'output window, operand 0']
    %7 = vsyncpa [#allocation6], 0
    %s8 = scalar_lea.sflag [#allocation6], 1
    %9 = vsyncpa %s8, 0
    %10 = vsyncpa [#allocation9], 0
    %s11 = scalar_lea.sflag [#allocation9], 1
    %12 = vsyncpa %s11, 0
    %13 = vsyncpa [#allocation7], 0
    %s14 = scalar_lea.sflag [#allocation7], 1
    %15 = vsyncpa %s14, 0
    loop: start=0, step=1, limit=4
    $region2: #{transformer_lm_forward.11} parent=1 // loop_pre_header
      _
    $region3: #{transformer_lm_forward.11} parent=1 // loop_header
      %s17 = sphi 0, %s21
      %p18 = scmp.ge.s32.totalorder %s17, 4
      %s24 = sphi 0, %s43
      %s25 = sphi 0, %s39
      %s26 = sphi 0, %s35
      %s27 = sphi 0, %s24
      %s28 = sphi 0, %s25
      %s29 = sphi 0, %s26
      %s30 = sphi 0, %s27
      %s31 = sphi 0, %s28
      %s32 = sphi 0, %s29
      %s48 = sphi 0, %s50
      %s51 = sphi 0, %s48
      %s52 = sphi 0, %s51
      %s68 = sphi 0, %s52
      %s76 = sphi 0, %s78
      %s79 = sphi 0, %s76
      %s80 = sphi 0, %s79
      %s96 = sphi 0, %s80
      %s104 = sphi 0, %s106
      %s107 = sphi 0, %s104
      %s108 = sphi 0, %s107
      %s124 = sphi 0, %s108
    $region4: #{transformer_lm_forward.11} parent=1 // loop_header_branch
      %20 = sbr.rel (%p18) target = $region8
    $region5: #{transformer_lm_forward.11} parent=1 // loop_body
      %s22 = ssub.s32 %s17, 1
      %s23 = ssub.s32 %s17, 2
      %s33 = sadd.s32 1, %s26
      %p34 = scmp.ge.s32.totalorder %s33, 1
      %s35 = scalar_select %p34, 0, %s33
      %s36 = sadd.s32 1, %s25
      %s37 = scalar_select %p34, %s36, %s25
      %p38 = scmp.ge.s32.totalorder %s37, 1
      %s39 = scalar_select %p38, 0, %s37
      %s40 = sadd.s32 1, %s24
      %s41 = scalar_select %p38, %s40, %s24
      %p42 = scmp.ge.s32.totalorder %s41, 2
      %s43 = scalar_select %p42, 0, %s41
      %s44 = ssub.s32 %s24, %s43
      %s45 = ssub.s32 %s25, %s39
      %s46 = sor.u32 %s44, %s45
      %p47 = scmp.eq.s32.totalorder %s46, 0
      %s49 = sadd.s32 %s48, 1
      %s50 = scalar_select %p47, %s48, %s49
      %p53 = pneg %p47
      %p54 = scmp.eq.s32.totalorder %s17, 1
      %p55 = por %p53, %p54
      %p56 = scmp.ne.s32.totalorder %s48, %s51
      %p57 = scmp.eq.s32.totalorder %s17, 0
      %p58 = por %p56, %p57
      %p59 = scmp.ne.s32.totalorder %s48, %s51
      %p60 = scmp.eq.s32.totalorder %s22, 1
      %p61 = por %p59, %p60
      %p62 = scmp.ne.s32.totalorder %s51, %s52
      %p63 = scmp.eq.s32.totalorder %s22, 0
      %p64 = por %p62, %p63
      %p65 = scmp.ne.s32.totalorder %s51, %s52
      %p66 = scmp.eq.s32.totalorder %s23, 1
      %p67 = por %p65, %p66
      %p69 = scmp.ne.s32.totalorder %s52, %s68
      %p70 = scmp.eq.s32.totalorder %s23, 0
      %p71 = por %p69, %p70
      %s72 = ssub.s32 %s24, %s43
      %s73 = ssub.s32 %s26, %s35
      %s74 = sor.u32 %s72, %s73
      %p75 = scmp.eq.s32.totalorder %s74, 0
      %s77 = sadd.s32 %s76, 1
      %s78 = scalar_select %p75, %s76, %s77
      %p81 = pneg %p75
      %p82 = scmp.eq.s32.totalorder %s17, 1
      %p83 = por %p81, %p82
      %p84 = scmp.ne.s32.totalorder %s76, %s79
      %p85 = scmp.eq.s32.totalorder %s17, 0
      %p86 = por %p84, %p85
      %p87 = scmp.ne.s32.totalorder %s76, %s79
      %p88 = scmp.eq.s32.totalorder %s22, 1
      %p89 = por %p87, %p88
      %p90 = scmp.ne.s32.totalorder %s79, %s80
      %p91 = scmp.eq.s32.totalorder %s22, 0
      %p92 = por %p90, %p91
      %p93 = scmp.ne.s32.totalorder %s79, %s80
      %p94 = scmp.eq.s32.totalorder %s23, 1
      %p95 = por %p93, %p94
      %p97 = scmp.ne.s32.totalorder %s80, %s96
      %p98 = scmp.eq.s32.totalorder %s23, 0
      %p99 = por %p97, %p98
      %s100 = ssub.s32 %s24, %s43
      %s101 = ssub.s32 %s25, %s39
      %s102 = sor.u32 %s100, %s101
      %p103 = scmp.eq.s32.totalorder %s102, 0
      %s105 = sadd.s32 %s104, 1
      %s106 = scalar_select %p103, %s104, %s105
      %p109 = pneg %p103
      %p110 = scmp.eq.s32.totalorder %s17, 1
      %p111 = por %p109, %p110
      %p112 = scmp.ne.s32.totalorder %s104, %s107
      %p113 = scmp.eq.s32.totalorder %s17, 0
      %p114 = por %p112, %p113
      %p115 = scmp.ne.s32.totalorder %s104, %s107
      %p116 = scmp.eq.s32.totalorder %s22, 1
      %p117 = por %p115, %p116
      %p118 = scmp.ne.s32.totalorder %s107, %s108
      %p119 = scmp.eq.s32.totalorder %s22, 0
      %p120 = por %p118, %p119
      %p121 = scmp.ne.s32.totalorder %s107, %s108
      %p122 = scmp.eq.s32.totalorder %s23, 1
      %p123 = por %p121, %p122
      %p125 = scmp.ne.s32.totalorder %s108, %s124
      %p126 = scmp.eq.s32.totalorder %s23, 0
      %p127 = por %p125, %p126
      %p128 = scmp.le.s32.totalorder 1, %s17
      %p129 = scmp.lt.s32.totalorder %s17, 3
      %p130 = pnand %p128, %p129
      %p131 = pneg %p130
      // Predicated region
      $region9: #{transformer_lm_forward.11} parent=5 // pred_check
        _
      $region10: #{transformer_lm_forward.11} parent=5 // pred_check_branch
        %133 = sbr.rel (%p130) target = $region12
      $region11: #{transformer_lm_forward.11} parent=5 // pred_region
        %s134 = ssub.s32 %s17, 1
      $region12: #{transformer_lm_forward.11} parent=5 // pred_fallthru
        _
      %p135 = scmp.lt.s32.totalorder %s17, 2
      // Predicated region
      $region13: #{transformer_lm_forward.11} parent=5 // pred_check
        %p136 = pneg %p135
      $region14: #{transformer_lm_forward.11} parent=5 // pred_check_branch
        %138 = sbr.rel (%p136) target = $region16
      $region15: #{transformer_lm_forward.11} parent=5 // pred_region
        // Predicated region
        $region17: #{transformer_lm_forward.11} parent=15 // pred_check
          %p139 = pneg %p58
        $region18: #{transformer_lm_forward.11} parent=15 // pred_check_branch
          %141 = sbr.rel (%p139) target = $region20
        $region19: #{transformer_lm_forward.11} parent=15 // pred_region
          %s142 = sand.u32 %s48, 1
          %s143 = scalar_lea.sflag [#allocation6], %s142
          %s144 = sand.u32 %s48, 1
          %s145 = smul.addr %s144, 4
          %s146 = scalar_lea.vmem [#allocation5], %s145
          %s148 = ssub.s32 64, 64
          %149 = vsyncadd %s143, %s148
          %s150 = sadd.s32 %s25, %s24
          %s151 = smul.addr %s150, 64
          %s152 = scalar_lea.hbm %s0, %s151
          %s154 = sshll.u32 %s146, 4
          %s155 = int_to_ptr.vmem [resolvable:$true] %s154
          %157 = dma.hbm_to_vmem [thread:$0]  %s152, 64, %s155, %s143
        $region20: #{transformer_lm_forward.11} parent=15 // pred_fallthru
          _
        // Predicated region
        $region21: #{transformer_lm_forward.11} parent=15 // pred_check
          %p158 = pneg %p86
        $region22: #{transformer_lm_forward.11} parent=15 // pred_check_branch
          %160 = sbr.rel (%p158) target = $region24
        $region23: #{transformer_lm_forward.11} parent=15 // pred_region
          %s161 = sand.u32 %s76, 1
          %s162 = scalar_lea.sflag [#allocation9], %s161
          %s163 = sand.u32 %s76, 1
          %s164 = smul.addr %s163, 4
          %s165 = scalar_lea.vmem [#allocation8], %s164
          %s167 = ssub.s32 64, 64
          %168 = vsyncadd %s162, %s167
          %s169 = sadd.s32 %s26, %s24
          %s170 = smul.addr %s169, 64
          %s171 = scalar_lea.hbm %s1, %s170
          %s173 = sshll.u32 %s165, 4
          %s174 = int_to_ptr.vmem [resolvable:$true] %s173
          %176 = dma.hbm_to_vmem [thread:$0]  %s171, 64, %s174, %s162
        $region24: #{transformer_lm_forward.11} parent=15 // pred_fallthru
          _
      $region16: #{transformer_lm_forward.11} parent=5 // pred_fallthru
        _
      %p177 = scmp.le.s32.totalorder 1, %s17
      %p178 = scmp.lt.s32.totalorder %s17, 3
      %p179 = pnand %p177, %p178
      %p180 = pneg %p179
      // Predicated region
      $region25: #{transformer_lm_forward.11} parent=5 // pred_check
        _
      $region26: #{transformer_lm_forward.11} parent=5 // pred_check_branch
        %182 = sbr.rel (%p179) target = $region28
      $region27: #{transformer_lm_forward.11} parent=5 // pred_region
        %s183 = ssub.s32 %s17, 1
        %s184 = sand.u32 %s51, 1
        %s185 = scalar_lea.sflag [#allocation6], %s184
        %s186 = sand.u32 %s51, 1
        %s187 = smul.addr %s186, 4
        %s188 = scalar_lea.vmem [#allocation5], %s187
        // Predicated region
        $region29: #{transformer_lm_forward.11} parent=27 // pred_check
          %p189 = pneg %p64
        $region30: #{transformer_lm_forward.11} parent=27 // pred_check_branch
          %191 = sbr.rel (%p189) target = $region32
        $region31: #{transformer_lm_forward.11} parent=27 // pred_region
          %192 = dma.done %s185, 64
        $region32: #{transformer_lm_forward.11} parent=27 // pred_fallthru
          _
        %s193 = sand.u32 %s79, 1
        %s194 = scalar_lea.sflag [#allocation9], %s193
        %s195 = sand.u32 %s79, 1
        %s196 = smul.addr %s195, 4
        %s197 = scalar_lea.vmem [#allocation8], %s196
        // Predicated region
        $region33: #{transformer_lm_forward.11} parent=27 // pred_check
          %p198 = pneg %p92
        $region34: #{transformer_lm_forward.11} parent=27 // pred_check_branch
          %200 = sbr.rel (%p198) target = $region36
        $region35: #{transformer_lm_forward.11} parent=27 // pred_region
          %201 = dma.done %s194, 64
        $region36: #{transformer_lm_forward.11} parent=27 // pred_fallthru
          _
        %s202 = sand.u32 %s51, 1
        %s203 = scalar_lea.sflag [#allocation6], %s202
        %s204 = sand.u32 %s51, 1
        %s205 = smul.addr %s204, 4
        %s206 = scalar_lea.vmem [#allocation5], %s205
        %p207 = pneg %p64
        %p208 = pneg %p61
        %s209 = sand.u32 %s79, 1
        %s210 = scalar_lea.sflag [#allocation9], %s209
        %s211 = sand.u32 %s79, 1
        %s212 = smul.addr %s211, 4
        %s213 = scalar_lea.vmem [#allocation8], %s212
        %p214 = pneg %p92
        %p215 = pneg %p89
        %p216 = pneg %p120
        %p217 = pneg %p117
        %s218 = sand.u32 %s107, 1
        %s219 = scalar_lea.sflag [#allocation7], %s218
        %s220 = sand.u32 %s107, 1
        %s221 = smul.addr %s220, 4
        %s222 = scalar_lea.vmem [#allocation10], %s221
        %p224 = scmp.eq.s32.totalorder %s29, 0
        // Predicated region
        $region37: #{transformer_lm_forward.11} parent=27 // pred_check
          %p225 = pneg %p224
        $region38: #{transformer_lm_forward.11} parent=27 // pred_check_branch
          %227 = sbr.rel (%p225) target = $region40
        $region39: #{transformer_lm_forward.11} parent=27 // pred_region
          %vm228 = vcmask 31744
          %229 = vst.msk [vmem:[#allocation2] sm:$0xff] %vm228, -inf
          %230 = vst.msk [vmem:[#allocation3] sm:$0xff] %vm228, 0.0
          %vm231 = vcmask 261120
          %232 = vst.msk [vmem:[#allocation4] sm:$0xff] %vm231, 0.0
        $region40: #{transformer_lm_forward.11} parent=27 // pred_fallthru
          _
        %v233 = vld [vmem:[%s188] sm:$0xf]
        %v234 = vld [vmem:[%s197] sm:$0xf]
        %v236 = vunpack.c.l.b16 %v234
        %v237 = vpack.c.b16 %v236, %v236
        %238 = vrot.lane.b32.xlu0 %v237, 96
        %v239 = vpop.permute.xlu0 %238
        %vm240 = vcmask 64512
        %v242 = vsel %vm240, %v233, 0
        %v245 = vsel %vm240, %v239, 0
        %247 = vmatprep.subr.bf16.mxu0 0
        %248 = vmatpush1.bf16.xpose.msra.mxu0 %v245
        %249 = vmatprep.subr.bf16.mxu0 0
        %250 = vmatpush1.bf16.xpose.msra.mxu0 0
        %251 = vmatprep.subr.bf16.mxu0 0
        %252 = vmatpush1.bf16.xpose.msra.mxu0 0
        %253 = vmatprep.subr.bf16.mxu0 0
        %254 = vmatpush1.bf16.xpose.msra.mxu0 0
        %255 = vmatprep.subr.bf16.mxu0 0
        %256 = vmatpush1.bf16.xpose.msra.mxu0 0
        %257 = vmatprep.subr.bf16.mxu0 0
        %258 = vmatpush1.bf16.xpose.msra.mxu0 0
        %259 = vmatprep.subr.bf16.mxu0 0
        %260 = vmatpush1.bf16.xpose.msra.mxu0 0
        %261 = vmatprep.subr.bf16.mxu0 0
        %262 = vmatpush1.bf16.xpose.msra.mxu0 0
        %263 = vmatprep.subr.bf16.mxu0 0
        %264 = vmatpush1.bf16.xpose.msra.mxu0 0
        %265 = vmatprep.subr.bf16.mxu0 0
        %266 = vmatpush1.bf16.xpose.msra.mxu0 0
        %267 = vmatprep.subr.bf16.mxu0 0
        %268 = vmatpush1.bf16.xpose.msra.mxu0 0
        %269 = vmatprep.subr.bf16.mxu0 0
        %270 = vmatpush1.bf16.xpose.msra.mxu0 0
        %271 = vmatprep.subr.bf16.mxu0 0
        %272 = vmatpush1.bf16.xpose.msra.mxu0 0
        %273 = vmatprep.subr.bf16.mxu0 0
        %274 = vmatpush1.bf16.xpose.msra.mxu0 0
        %275 = vmatprep.subr.bf16.mxu0 0
        %276 = vmatpush1.bf16.xpose.msra.mxu0 0
        %277 = vmatprep.subr.bf16.mxu0 0
        %278 = vmatpush1.bf16.xpose.msra.mxu0 0
        %279 = vmatprep.mubr.bf16.mxu0 0
        %280 = vmatmul.mubr.bf16.gmra.mrb[0].mxu0 %v242
        %v281 = vpop.f32.mrb[0].mxu0
        %v282 = vadd.f32 0.0, %v281
        %v283 = vpop.f32.mrb[0].mxu0
        %v284 = vpop.f32.mrb[0].mxu0
        %v285 = vpop.f32.mrb[0].mxu0
        %286 = vdwg.mxu0
        %v287 = vld [vmem:[#allocation2] sm:$0xff]
        %v288 = vsel %vm240, %v282, -inf
        %289 = vmax.xlane.f32.xlu0 %v288
        %v290 = vpop.xlane.xlu0 %289
        %v291 = vmax.f32 %v287, %v290
        %v292 = vsub.f32 %v287, %v291
        %v293 = vmul.f32 %v292, 1.442695
        %v294 = vpow.pop %v293
        %296 = vset.pattern.permute.xlu0 0
        %297 = vperm.xlu0 %296, %v291
        %v298 = vpop.permute.xlu0 %297
        %v300 = vsub.f32 %v282, %v298
        %v301 = vmul.f32 %v300, 1.442695
        %v302 = vpow.pop %v301
        %v303 = vld [vmem:[#allocation3] sm:$0xff]
        %v304 = vmul.f32 %v294, %v303
        %v305 = vsel %vm240, %v302, 0.0
        %306 = vadd.xlane.f32.xlu0 %v305
        %v307 = vpop.xlane.xlu0 %306
        %v308 = vadd.f32 %v304, %v307
        %vm309 = vcmask 7168
        %310 = vst.msk [vmem:[#allocation3] sm:$0xff] %vm309, %v308
        %v311 = vld [vmem:[#allocation4] sm:$0xff]
        %313 = vset.pattern.permute.xlu0 0
        %314 = vperm.xlu0 %313, %v294
        %v315 = vpop.permute.xlu0 %314
        %v317 = vmul.f32 %v315, %v311
        %v318 = vpack.c.bf16 %v302, %v302
        %319 = vrot.lane.b32.xlu0 %v237, 64
        %v320 = vpop.permute.xlu0 %319
        %v322 = vsel %vm240, %v318, 0
        %vm324 = vcmask 1043456
        %v326 = vsel %vm324, %v320, 0
        %328 = vmatprep.subr.bf16.mxu0 0
        %329 = vmatpush1.bf16.msra.mxu0 %v326
        %330 = vmatprep.subr.bf16.mxu0 0
        %331 = vmatpush1.bf16.msra.mxu0 0
        %332 = vmatprep.subr.bf16.mxu0 0
        %333 = vmatpush1.bf16.msra.mxu0 0
        %334 = vmatprep.subr.bf16.mxu0 0
        %335 = vmatpush1.bf16.msra.mxu0 0
        %336 = vmatprep.subr.bf16.mxu0 0
        %337 = vmatpush1.bf16.msra.mxu0 0
        %338 = vmatprep.subr.bf16.mxu0 0
        %339 = vmatpush1.bf16.msra.mxu0 0
        %340 = vmatprep.subr.bf16.mxu0 0
        %341 = vmatpush1.bf16.msra.mxu0 0
        %342 = vmatprep.subr.bf16.mxu0 0
        %343 = vmatpush1.bf16.msra.mxu0 0
        %344 = vmatprep.subr.bf16.mxu0 0
        %345 = vmatpush1.bf16.msra.mxu0 0
        %346 = vmatprep.subr.bf16.mxu0 0
        %347 = vmatpush1.bf16.msra.mxu0 0
        %348 = vmatprep.subr.bf16.mxu0 0
        %349 = vmatpush1.bf16.msra.mxu0 0
        %350 = vmatprep.subr.bf16.mxu0 0
        %351 = vmatpush1.bf16.msra.mxu0 0
        %352 = vmatprep.subr.bf16.mxu0 0
        %353 = vmatpush1.bf16.msra.mxu0 0
        %354 = vmatprep.subr.bf16.mxu0 0
        %355 = vmatpush1.bf16.msra.mxu0 0
        %356 = vmatprep.subr.bf16.mxu0 0
        %357 = vmatpush1.bf16.msra.mxu0 0
        %358 = vmatprep.subr.bf16.mxu0 0
        %359 = vmatpush1.bf16.msra.mxu0 0
        %360 = vmatprep.mubr.bf16.mxu0 0
        %361 = vmatmul.mubr.bf16.gmra.mrb[0].mxu0 %v322
        %v362 = vpop.f32.mrb[0].mxu0
        %v363 = vadd.f32 0.0, %v362
        %v364 = vpop.f32.mrb[0].mxu0
        %v365 = vpop.f32.mrb[0].mxu0
        %v366 = vpop.f32.mrb[0].mxu0
        %367 = vdwg.mxu0
        %v368 = vadd.f32 %v317, %v363
        %369 = vst.msk [vmem:[#allocation4] sm:$0xff] %vm240, %v368
        %370 = vst.msk [vmem:[#allocation2] sm:$0xff] %vm309, %v291
        %v371 = vld [vmem:[%s188] sm:$0xf]
        %v372 = vld [vmem:[%s197] sm:$0xf]
        %v374 = vunpack.c.l.b16 %v371
        %v375 = vpack.c.b16 %v374, %v374
        %376 = vrot.lane.b32.xlu0 %v375, 120
        %v377 = vpop.permute.xlu0 %376
        %v379 = vunpack.c.l.b16 %v372
        %v380 = vpack.c.b16 %v379, %v379
        %381 = vrot.lane.b32.xlu0 %v380, 88
        %v382 = vpop.permute.xlu0 %381
        %v384 = vsel %vm240, %v377, 0
        %v387 = vsel %vm240, %v382, 0
        %389 = vmatprep.subr.bf16.mxu0 0
        %390 = vmatpush1.bf16.xpose.msra.mxu0 %v387
        %391 = vmatprep.subr.bf16.mxu0 0
        %392 = vmatpush1.bf16.xpose.msra.mxu0 0
        %393 = vmatprep.subr.bf16.mxu0 0
        %394 = vmatpush1.bf16.xpose.msra.mxu0 0
        %395 = vmatprep.subr.bf16.mxu0 0
        %396 = vmatpush1.bf16.xpose.msra.mxu0 0
        %397 = vmatprep.subr.bf16.mxu0 0
        %398 = vmatpush1.bf16.xpose.msra.mxu0 0
        %399 = vmatprep.subr.bf16.mxu0 0
        %400 = vmatpush1.bf16.xpose.msra.mxu0 0
        %401 = vmatprep.subr.bf16.mxu0 0
        %402 = vmatpush1.bf16.xpose.msra.mxu0 0
        %403 = vmatprep.subr.bf16.mxu0 0
        %404 = vmatpush1.bf16.xpose.msra.mxu0 0
        %405 = vmatprep.subr.bf16.mxu0 0
        %406 = vmatpush1.bf16.xpose.msra.mxu0 0
        %407 = vmatprep.subr.bf16.mxu0 0
        %408 = vmatpush1.bf16.xpose.msra.mxu0 0
        %409 = vmatprep.subr.bf16.mxu0 0
        %410 = vmatpush1.bf16.xpose.msra.mxu0 0
        %411 = vmatprep.subr.bf16.mxu0 0
        %412 = vmatpush1.bf16.xpose.msra.mxu0 0
        %413 = vmatprep.subr.bf16.mxu0 0
        %414 = vmatpush1.bf16.xpose.msra.mxu0 0
        %415 = vmatprep.subr.bf16.mxu0 0
        %416 = vmatpush1.bf16.xpose.msra.mxu0 0
        %417 = vmatprep.subr.bf16.mxu0 0
        %418 = vmatpush1.bf16.xpose.msra.mxu0 0
        %419 = vmatprep.subr.bf16.mxu0 0
        %420 = vmatpush1.bf16.xpose.msra.mxu0 0
        %421 = vmatprep.mubr.bf16.mxu0 0
        %422 = vmatmul.mubr.bf16.gmra.mrb[0].mxu0 %v384
        %v423 = vpop.f32.mrb[0].mxu0
        %v424 = vadd.f32 0.0, %v423
        %v425 = vpop.f32.mrb[0].mxu0
        %v426 = vpop.f32.mrb[0].mxu0
        %v427 = vpop.f32.mrb[0].mxu0
        %428 = vdwg.mxu0
        %v429 = vld [vmem:[#allocation2] sm:$0xff]
        %v430 = vsel %vm240, %v424, -inf
        %431 = vmax.xlane.f32.xlu0 %v430
        %v432 = vpop.xlane.xlu0 %431
        %v433 = vmax.f32 %v429, %v432
        %v434 = vsub.f32 %v429, %v433
        %v435 = vmul.f32 %v434, 1.442695
        %v436 = vpow.pop %v435
        %438 = vset.pattern.permute.xlu0 1
        %439 = vperm.xlu0 %438, %v433
        %v440 = vpop.permute.xlu0 %439
        %v442 = vsub.f32 %v424, %v440
        %v443 = vmul.f32 %v442, 1.442695
        %v444 = vpow.pop %v443
        %v445 = vld [vmem:[#allocation3] sm:$0xff]
        %v446 = vmul.f32 %v436, %v445
        %v447 = vsel %vm240, %v444, 0.0
        %448 = vadd.xlane.f32.xlu0 %v447
        %v449 = vpop.xlane.xlu0 %448
        %v450 = vadd.f32 %v446, %v449
        %vm451 = vcmask 15368
        %452 = vst.msk [vmem:[#allocation3] sm:$0xff] %vm451, %v450
        %v453 = vld [vmem:[#allocation4] sm:$0xff]
        %455 = vset.pattern.permute.xlu0 1
        %456 = vperm.xlu0 %455, %v436
        %v457 = vpop.permute.xlu0 %456
        %v459 = vmul.f32 %v457, %v453
        %v460 = vpack.c.bf16 %v444, %v444
        %461 = vrot.lane.b32.xlu0 %v380, 56
        %v462 = vpop.permute.xlu0 %461
        %v464 = vsel %vm240, %v460, 0
        %v467 = vsel %vm324, %v462, 0
        %469 = vmatprep.subr.bf16.mxu0 0
        %470 = vmatpush1.bf16.msra.mxu0 %v467
        %471 = vmatprep.subr.bf16.mxu0 0
        %472 = vmatpush1.bf16.msra.mxu0 0
        %473 = vmatprep.subr.bf16.mxu0 0
        %474 = vmatpush1.bf16.msra.mxu0 0
        %475 = vmatprep.subr.bf16.mxu0 0
        %476 = vmatpush1.bf16.msra.mxu0 0
        %477 = vmatprep.subr.bf16.mxu0 0
        %478 = vmatpush1.bf16.msra.mxu0 0
        %479 = vmatprep.subr.bf16.mxu0 0
        %480 = vmatpush1.bf16.msra.mxu0 0
        %481 = vmatprep.subr.bf16.mxu0 0
        %482 = vmatpush1.bf16.msra.mxu0 0
        %483 = vmatprep.subr.bf16.mxu0 0
        %484 = vmatpush1.bf16.msra.mxu0 0
        %485 = vmatprep.subr.bf16.mxu0 0
        %486 = vmatpush1.bf16.msra.mxu0 0
        %487 = vmatprep.subr.bf16.mxu0 0
        %488 = vmatpush1.bf16.msra.mxu0 0
        %489 = vmatprep.subr.bf16.mxu0 0
        %490 = vmatpush1.bf16.msra.mxu0 0
        %491 = vmatprep.subr.bf16.mxu0 0
        %492 = vmatpush1.bf16.msra.mxu0 0
        %493 = vmatprep.subr.bf16.mxu0 0
        %494 = vmatpush1.bf16.msra.mxu0 0
        %495 = vmatprep.subr.bf16.mxu0 0
        %496 = vmatpush1.bf16.msra.mxu0 0
        %497 = vmatprep.subr.bf16.mxu0 0
        %498 = vmatpush1.bf16.msra.mxu0 0
        %499 = vmatprep.subr.bf16.mxu0 0
        %500 = vmatpush1.bf16.msra.mxu0 0
        %501 = vmatprep.mubr.bf16.mxu0 0
        %502 = vmatmul.mubr.bf16.gmra.mrb[0].mxu0 %v464
        %v503 = vpop.f32.mrb[0].mxu0
        %v504 = vadd.f32 0.0, %v503
        %v505 = vpop.f32.mrb[0].mxu0
        %v506 = vpop.f32.mrb[0].mxu0
        %v507 = vpop.f32.mrb[0].mxu0
        %508 = vdwg.mxu0
        %510 = vrot.lane.b32.xlu0 %v504, 8
        %v511 = vpop.permute.xlu0 %510
        %v513 = vadd.f32 %v459, %v511
        %vm514 = vcmask 130112
        %515 = vst.msk [vmem:[#allocation4] sm:$0xff] %vm514, %v513
        %516 = vst.msk [vmem:[#allocation2] sm:$0xff] %vm451, %v433
        %v517 = vld [vmem:[%s188] sm:$0xf]
        %v518 = vld [vmem:[%s197] sm:$0xf]
        %v520 = vunpack.c.l.b16 %v517
        %v521 = vpack.c.b16 %v520, %v520
        %522 = vrot.lane.b32.xlu0 %v521, 112
        %v523 = vpop.permute.xlu0 %522
        %v525 = vunpack.c.l.b16 %v518
        %v526 = vpack.c.b16 %v525, %v525
        %527 = vrot.lane.b32.xlu0 %v526, 80
        %v528 = vpop.permute.xlu0 %527
        %v530 = vsel %vm240, %v523, 0
        %v533 = vsel %vm240, %v528, 0
        %535 = vmatprep.subr.bf16.mxu0 0
        %536 = vmatpush1.bf16.xpose.msra.mxu0 %v533
        %537 = vmatprep.subr.bf16.mxu0 0
        %538 = vmatpush1.bf16.xpose.msra.mxu0 0
        %539 = vmatprep.subr.bf16.mxu0 0
        %540 = vmatpush1.bf16.xpose.msra.mxu0 0
        %541 = vmatprep.subr.bf16.mxu0 0
        %542 = vmatpush1.bf16.xpose.msra.mxu0 0
        %543 = vmatprep.subr.bf16.mxu0 0
        %544 = vmatpush1.bf16.xpose.msra.mxu0 0
        %545 = vmatprep.subr.bf16.mxu0 0
        %546 = vmatpush1.bf16.xpose.msra.mxu0 0
        %547 = vmatprep.subr.bf16.mxu0 0
        %548 = vmatpush1.bf16.xpose.msra.mxu0 0
        %549 = vmatprep.subr.bf16.mxu0 0
        %550 = vmatpush1.bf16.xpose.msra.mxu0 0
        %551 = vmatprep.subr.bf16.mxu0 0
        %552 = vmatpush1.bf16.xpose.msra.mxu0 0
        %553 = vmatprep.subr.bf16.mxu0 0
        %554 = vmatpush1.bf16.xpose.msra.mxu0 0
        %555 = vmatprep.subr.bf16.mxu0 0
        %556 = vmatpush1.bf16.xpose.msra.mxu0 0
        %557 = vmatprep.subr.bf16.mxu0 0
        %558 = vmatpush1.bf16.xpose.msra.mxu0 0
        %559 = vmatprep.subr.bf16.mxu0 0
        %560 = vmatpush1.bf16.xpose.msra.mxu0 0
        %561 = vmatprep.subr.bf16.mxu0 0
        %562 = vmatpush1.bf16.xpose.msra.mxu0 0
        %563 = vmatprep.subr.bf16.mxu0 0
        %564 = vmatpush1.bf16.xpose.msra.mxu0 0
        %565 = vmatprep.subr.bf16.mxu0 0
        %566 = vmatpush1.bf16.xpose.msra.mxu0 0
        %567 = vmatprep.mubr.bf16.mxu0 0
        %568 = vmatmul.mubr.bf16.gmra.mrb[0].mxu0 %v530
        %v569 = vpop.f32.mrb[0].mxu0
        %v570 = vadd.f32 0.0, %v569
        %v571 = vpop.f32.mrb[0].mxu0
        %v572 = vpop.f32.mrb[0].mxu0
        %v573 = vpop.f32.mrb[0].mxu0
        %574 = vdwg.mxu0
        %v575 = vld [vmem:[#allocation2] sm:$0xff]
        %v576 = vsel %vm240, %v570, -inf
        %577 = vmax.xlane.f32.xlu0 %v576
        %v578 = vpop.xlane.xlu0 %577
        %v579 = vmax.f32 %v575, %v578
        %v580 = vsub.f32 %v575, %v579
        %v581 = vmul.f32 %v580, 1.442695
        %v582 = vpow.pop %v581
        %584 = vset.pattern.permute.xlu0 2
        %585 = vperm.xlu0 %584, %v579
        %v586 = vpop.permute.xlu0 %585
        %v588 = vsub.f32 %v570, %v586
        %v589 = vmul.f32 %v588, 1.442695
        %v590 = vpow.pop %v589
        %v591 = vld [vmem:[#allocation3] sm:$0xff]
        %v592 = vmul.f32 %v582, %v591
        %v593 = vsel %vm240, %v590, 0.0
        %594 = vadd.xlane.f32.xlu0 %v593
        %v595 = vpop.xlane.xlu0 %594
        %v596 = vadd.f32 %v592, %v595
        %vm597 = vcmask 23568
        %598 = vst.msk [vmem:[#allocation3] sm:$0xff] %vm597, %v596
        %v599 = vld [vmem:[#allocation4] sm:$0xff]
        %601 = vset.pattern.permute.xlu0 2
        %602 = vperm.xlu0 %601, %v582
        %v603 = vpop.permute.xlu0 %602
        %v605 = vmul.f32 %v603, %v599
        %v606 = vpack.c.bf16 %v590, %v590
        %607 = vrot.lane.b32.xlu0 %v526, 48
        %v608 = vpop.permute.xlu0 %607
        %v610 = vsel %vm240, %v606, 0
        %v613 = vsel %vm324, %v608, 0
        %615 = vmatprep.subr.bf16.mxu0 0
        %616 = vmatpush1.bf16.msra.mxu0 %v613
        %617 = vmatprep.subr.bf16.mxu0 0
        %618 = vmatpush1.bf16.msra.mxu0 0
        %619 = vmatprep.subr.bf16.mxu0 0
        %620 = vmatpush1.bf16.msra.mxu0 0
        %621 = vmatprep.subr.bf16.mxu0 0
        %622 = vmatpush1.bf16.msra.mxu0 0
        %623 = vmatprep.subr.bf16.mxu0 0
        %624 = vmatpush1.bf16.msra.mxu0 0
        %625 = vmatprep.subr.bf16.mxu0 0
        %626 = vmatpush1.bf16.msra.mxu0 0
        %627 = vmatprep.subr.bf16.mxu0 0
        %628 = vmatpush1.bf16.msra.mxu0 0
        %629 = vmatprep.subr.bf16.mxu0 0
        %630 = vmatpush1.bf16.msra.mxu0 0
        %631 = vmatprep.subr.bf16.mxu0 0
        %632 = vmatpush1.bf16.msra.mxu0 0
        %633 = vmatprep.subr.bf16.mxu0 0
        %634 = vmatpush1.bf16.msra.mxu0 0
        %635 = vmatprep.subr.bf16.mxu0 0
        %636 = vmatpush1.bf16.msra.mxu0 0
        %637 = vmatprep.subr.bf16.mxu0 0
        %638 = vmatpush1.bf16.msra.mxu0 0
        %639 = vmatprep.subr.bf16.mxu0 0
        %640 = vmatpush1.bf16.msra.mxu0 0
        %641 = vmatprep.subr.bf16.mxu0 0
        %642 = vmatpush1.bf16.msra.mxu0 0
        %643 = vmatprep.subr.bf16.mxu0 0
        %644 = vmatpush1.bf16.msra.mxu0 0
        %645 = vmatprep.subr.bf16.mxu0 0
        %646 = vmatpush1.bf16.msra.mxu0 0
        %647 = vmatprep.mubr.bf16.mxu0 0
        %648 = vmatmul.mubr.bf16.gmra.mrb[0].mxu0 %v610
        %v649 = vpop.f32.mrb[0].mxu0
        %v650 = vadd.f32 0.0, %v649
        %v651 = vpop.f32.mrb[0].mxu0
        %v652 = vpop.f32.mrb[0].mxu0
        %v653 = vpop.f32.mrb[0].mxu0
        %654 = vdwg.mxu0
        %656 = vrot.lane.b32.xlu0 %v650, 16
        %v657 = vpop.permute.xlu0 %656
        %v659 = vadd.f32 %v605, %v657
        %vm660 = vcmask 195712
        %661 = vst.msk [vmem:[#allocation4] sm:$0xff] %vm660, %v659
        %662 = vst.msk [vmem:[#allocation2] sm:$0xff] %vm597, %v579
        %v663 = vld [vmem:[%s188] sm:$0xf]
        %v664 = vld [vmem:[%s197] sm:$0xf]
        %v666 = vunpack.c.l.b16 %v663
        %v667 = vpack.c.b16 %v666, %v666
        %668 = vrot.lane.b32.xlu0 %v667, 104
        %v669 = vpop.permute.xlu0 %668
        %v671 = vunpack.c.l.b16 %v664
        %v672 = vpack.c.b16 %v671, %v671
        %673 = vrot.lane.b32.xlu0 %v672, 72
        %v674 = vpop.permute.xlu0 %673
        %v676 = vsel %vm240, %v669, 0
        %v679 = vsel %vm240, %v674, 0
        %681 = vmatprep.subr.bf16.mxu0 0
        %682 = vmatpush1.bf16.xpose.msra.mxu0 %v679
        %683 = vmatprep.subr.bf16.mxu0 0
        %684 = vmatpush1.bf16.xpose.msra.mxu0 0
        %685 = vmatprep.subr.bf16.mxu0 0
        %686 = vmatpush1.bf16.xpose.msra.mxu0 0
        %687 = vmatprep.subr.bf16.mxu0 0
        %688 = vmatpush1.bf16.xpose.msra.mxu0 0
        %689 = vmatprep.subr.bf16.mxu0 0
        %690 = vmatpush1.bf16.xpose.msra.mxu0 0
        %691 = vmatprep.subr.bf16.mxu0 0
        %692 = vmatpush1.bf16.xpose.msra.mxu0 0
        %693 = vmatprep.subr.bf16.mxu0 0
        %694 = vmatpush1.bf16.xpose.msra.mxu0 0
        %695 = vmatprep.subr.bf16.mxu0 0
        %696 = vmatpush1.bf16.xpose.msra.mxu0 0
        %697 = vmatprep.subr.bf16.mxu0 0
        %698 = vmatpush1.bf16.xpose.msra.mxu0 0
        %699 = vmatprep.subr.bf16.mxu0 0
        %700 = vmatpush1.bf16.xpose.msra.mxu0 0
        %701 = vmatprep.subr.bf16.mxu0 0
        %702 = vmatpush1.bf16.xpose.msra.mxu0 0
        %703 = vmatprep.subr.bf16.mxu0 0
        %704 = vmatpush1.bf16.xpose.msra.mxu0 0
        %705 = vmatprep.subr.bf16.mxu0 0
        %706 = vmatpush1.bf16.xpose.msra.mxu0 0
        %707 = vmatprep.subr.bf16.mxu0 0
        %708 = vmatpush1.bf16.xpose.msra.mxu0 0
        %709 = vmatprep.subr.bf16.mxu0 0
        %710 = vmatpush1.bf16.xpose.msra.mxu0 0
        %711 = vmatprep.subr.bf16.mxu0 0
        %712 = vmatpush1.bf16.xpose.msra.mxu0 0
        %713 = vmatprep.mubr.bf16.mxu0 0
        %714 = vmatmul.mubr.bf16.gmra.mrb[0].mxu0 %v676
        %v715 = vpop.f32.mrb[0].mxu0
        %v716 = vadd.f32 0.0, %v715
        %v717 = vpop.f32.mrb[0].mxu0
        %v718 = vpop.f32.mrb[0].mxu0
        %v719 = vpop.f32.mrb[0].mxu0
        %720 = vdwg.mxu0
        %v721 = vld [vmem:[#allocation2] sm:$0xff]
        %v722 = vsel %vm240, %v716, -inf
        %723 = vmax.xlane.f32.xlu0 %v722
        %v724 = vpop.xlane.xlu0 %723
        %v725 = vmax.f32 %v721, %v724
        %v726 = vsub.f32 %v721, %v725
        %v727 = vmul.f32 %v726, 1.442695
        %v728 = vpow.pop %v727
        %730 = vset.pattern.permute.xlu0 3
        %731 = vperm.xlu0 %730, %v725
        %v732 = vpop.permute.xlu0 %731
        %v734 = vsub.f32 %v716, %v732
        %v735 = vmul.f32 %v734, 1.442695
        %v736 = vpow.pop %v735
        %v737 = vld [vmem:[#allocation3] sm:$0xff]
        %v738 = vmul.f32 %v728, %v737
        %v739 = vsel %vm240, %v736, 0.0
        %740 = vadd.xlane.f32.xlu0 %v739
        %v741 = vpop.xlane.xlu0 %740
        %v742 = vadd.f32 %v738, %v741
        %vm743 = vcmask 31768
        %744 = vst.msk [vmem:[#allocation3] sm:$0xff] %vm743, %v742
        %v745 = vld [vmem:[#allocation4] sm:$0xff]
        %747 = vset.pattern.permute.xlu0 3
        %748 = vperm.xlu0 %747, %v728
        %v749 = vpop.permute.xlu0 %748
        %v751 = vmul.f32 %v749, %v745
        %v752 = vpack.c.bf16 %v736, %v736
        %753 = vrot.lane.b32.xlu0 %v672, 40
        %v754 = vpop.permute.xlu0 %753
        %v756 = vsel %vm240, %v752, 0
        %v759 = vsel %vm324, %v754, 0
        %761 = vmatprep.subr.bf16.mxu0 0
        %762 = vmatpush1.bf16.msra.mxu0 %v759
        %763 = vmatprep.subr.bf16.mxu0 0
        %764 = vmatpush1.bf16.msra.mxu0 0
        %765 = vmatprep.subr.bf16.mxu0 0
        %766 = vmatpush1.bf16.msra.mxu0 0
        %767 = vmatprep.subr.bf16.mxu0 0
        %768 = vmatpush1.bf16.msra.mxu0 0
        %769 = vmatprep.subr.bf16.mxu0 0
        %770 = vmatpush1.bf16.msra.mxu0 0
        %771 = vmatprep.subr.bf16.mxu0 0
        %772 = vmatpush1.bf16.msra.mxu0 0
        %773 = vmatprep.subr.bf16.mxu0 0
        %774 = vmatpush1.bf16.msra.mxu0 0
        %775 = vmatprep.subr.bf16.mxu0 0
        %776 = vmatpush1.bf16.msra.mxu0 0
        %777 = vmatprep.subr.bf16.mxu0 0
        %778 = vmatpush1.bf16.msra.mxu0 0
        %779 = vmatprep.subr.bf16.mxu0 0
        %780 = vmatpush1.bf16.msra.mxu0 0
        %781 = vmatprep.subr.bf16.mxu0 0
        %782 = vmatpush1.bf16.msra.mxu0 0
        %783 = vmatprep.subr.bf16.mxu0 0
        %784 = vmatpush1.bf16.msra.mxu0 0
        %785 = vmatprep.subr.bf16.mxu0 0
        %786 = vmatpush1.bf16.msra.mxu0 0
        %787 = vmatprep.subr.bf16.mxu0 0
        %788 = vmatpush1.bf16.msra.mxu0 0
        %789 = vmatprep.subr.bf16.mxu0 0
        %790 = vmatpush1.bf16.msra.mxu0 0
        %791 = vmatprep.subr.bf16.mxu0 0
        %792 = vmatpush1.bf16.msra.mxu0 0
        %793 = vmatprep.mubr.bf16.mxu0 0
        %794 = vmatmul.mubr.bf16.gmra.mrb[0].mxu0 %v756
        %v795 = vpop.f32.mrb[0].mxu0
        %v796 = vadd.f32 0.0, %v795
        %v797 = vpop.f32.mrb[0].mxu0
        %v798 = vpop.f32.mrb[0].mxu0
        %v799 = vpop.f32.mrb[0].mxu0
        %800 = vdwg.mxu0
        %802 = vrot.lane.b32.xlu0 %v796, 24
        %v803 = vpop.permute.xlu0 %802
        %v805 = vadd.f32 %v751, %v803
        %vm806 = vcmask 261312
        %807 = vst.msk [vmem:[#allocation4] sm:$0xff] %vm806, %v805
        %808 = vst.msk [vmem:[#allocation2] sm:$0xff] %vm743, %v725
        // Predicated region
        $region41: #{transformer_lm_forward.11} parent=27 // pred_check
          %p809 = pneg %p224
        $region42: #{transformer_lm_forward.11} parent=27 // pred_check_branch
          %811 = sbr.rel (%p809) target = $region44
        $region43: #{transformer_lm_forward.11} parent=27 // pred_region
          %v812 = vld [vmem:[#allocation3] sm:$0xff]
          %v813 = vrcp.pop %v812
          %v814 = vld [vmem:[#allocation4] sm:$0xff]
          %816 = vset.pattern.permute.xlu0 0
          %817 = vperm.xlu0 %816, %v813
          %v818 = vpop.permute.xlu0 %817
          %v820 = vmul.f32 %v814, %v818
          %v821 = vpack.c.bf16 %v820, %v820
          %vm822 = vcmask 60416
          %823 = vst.msk [vmem:[%s222] sm:$0xf] %vm822, %v821
          %v824 = vld [vmem:[#allocation4] sm:$0xff]
          %825 = vset.pattern.permute.xlu0 1
          %826 = vperm.xlu0 %825, %v813
          %v827 = vpop.permute.xlu0 %826
          %v829 = vmul.f32 %v824, %v827
          %v830 = vpack.c.bf16 %v829, %v829
          %vm831 = vcmask 126016
          %832 = vst.msk [vmem:[%s222] sm:$0xf] %vm831, %v830
          %v833 = vld [vmem:[#allocation4] sm:$0xff]
          %834 = vset.pattern.permute.xlu0 2
          %835 = vperm.xlu0 %834, %v813
          %v836 = vpop.permute.xlu0 %835
          %v838 = vmul.f32 %v833, %v836
          %v839 = vpack.c.bf16 %v838, %v838
          %vm840 = vcmask 191616
          %841 = vst.msk [vmem:[%s222] sm:$0xf] %vm840, %v839
          %v842 = vld [vmem:[#allocation4] sm:$0xff]
          %843 = vset.pattern.permute.xlu0 3
          %844 = vperm.xlu0 %843, %v813
          %v845 = vpop.permute.xlu0 %844
          %v847 = vmul.f32 %v842, %v845
          %v848 = vpack.c.bf16 %v847, %v847
          %vm849 = vcmask 257216
          %850 = vst.msk [vmem:[%s222] sm:$0xf] %vm849, %v848
        $region44: #{transformer_lm_forward.11} parent=27 // pred_fallthru
          _
        %s851 = sand.u32 %s107, 1
        %s852 = scalar_lea.sflag [#allocation7], %s851
        %s853 = sand.u32 %s107, 1
        %s854 = smul.addr %s853, 4
        %s855 = scalar_lea.vmem [#allocation10], %s854
        // Predicated region
        $region45: #{transformer_lm_forward.11} parent=27 // pred_check
          %p856 = pneg %p117
        $region46: #{transformer_lm_forward.11} parent=27 // pred_check_branch
          %858 = sbr.rel (%p856) target = $region48
        $region47: #{transformer_lm_forward.11} parent=27 // pred_region
          %s860 = ssub.s32 64, 64
          %861 = vsyncadd %s852, %s860
          %s862 = sadd.s32 %s28, %s27
          %s863 = smul.addr %s862, 64
          %s864 = scalar_lea.hbm %s2, %s863
          %s866 = sshll.u32 %s855, 4
          %s867 = int_to_ptr.vmem [resolvable:$true] %s866
          %869 = dma.vmem_to_hbm [thread:$0]  %s867, 64, %s864, %s852
        $region48: #{transformer_lm_forward.11} parent=27 // pred_fallthru
          _
      $region28: #{transformer_lm_forward.11} parent=5 // pred_fallthru
        _
      %p870 = scmp.le.s32.totalorder 2, %s17
      // Predicated region
      $region49: #{transformer_lm_forward.11} parent=5 // pred_check
        %p871 = pneg %p870
      $region50: #{transformer_lm_forward.11} parent=5 // pred_check_branch
        %873 = sbr.rel (%p871) target = $region52
      $region51: #{transformer_lm_forward.11} parent=5 // pred_region
        %s874 = ssub.s32 %s17, 2
        // Predicated region
        $region53: #{transformer_lm_forward.11} parent=51 // pred_check
          %p875 = pneg %p123
        $region54: #{transformer_lm_forward.11} parent=51 // pred_check_branch
          %877 = sbr.rel (%p875) target = $region56
        $region55: #{transformer_lm_forward.11} parent=51 // pred_region
          %s878 = sand.u32 %s108, 1
          %s879 = scalar_lea.sflag [#allocation7], %s878
          %s880 = sand.u32 %s108, 1
          %s881 = smul.addr %s880, 4
          %s882 = scalar_lea.vmem [#allocation10], %s881
          %883 = dma.done %s879, 64
        $region56: #{transformer_lm_forward.11} parent=51 // pred_fallthru
          _
      $region52: #{transformer_lm_forward.11} parent=5 // pred_fallthru
        _
    $region6: #{transformer_lm_forward.11} parent=1 // loop_footer
      %s21 = sadd.s32 1, %s17
    $region7: #{transformer_lm_forward.11} parent=1 // loop_footer_branch
      %16 = sbr.rel target = $region3
    $region8: #{transformer_lm_forward.11} parent=1 // loop_exit
      _
    %884 = vsyncpa [#allocation6], 1
    %s885 = scalar_lea.sflag [#allocation6], 1
    %886 = vsyncpa %s885, 1
    %887 = vsyncpa [#allocation9], 1
    %s888 = scalar_lea.sflag [#allocation9], 1
    %889 = vsyncpa %s888, 1
    %890 = vsyncpa [#allocation7], 1
    %s891 = scalar_lea.sflag [#allocation7], 1
    %892 = vsyncpa %s891, 1

// kernel: transformer_lm_forward.18
$region0: #{transformer_lm_forward.18}
  #allocation0 [shape = 'u32[]', space=smem, size = 0x4, offset = 0x4, fixed_abs, tag = 'smem constant byte address 0x4 - core index']
  #allocation1 [shape = 'u32[144,128]{1,0:T(1,128)}', space=vmem, size = 0x12000, scoped, tag = 'internal scratch']
  %s0 = inlined_call_operand.hbm [shape: bf16[16,32], index: 0, kind: input, shape index: {}]
  %s1 = inlined_call_operand.hbm [shape: f32[1,32], index: 1, kind: input, shape index: {}]
  %s2 = inlined_call_operand.hbm [shape: f32[1,32], index: 2, kind: input, shape index: {}]
  %s3 = inlined_call_operand.hbm [shape: bf16[16,32], index: 3, kind: output, shape index: {}]
  %s4 = sld [smem:[#allocation0]]
  $region34: #{transformer_lm_forward.18} parent=0
    _
  %s6 = ssub.s32 1, %s4
  %s7 = scalar_select 0, %s6, %s4
  $region1: #{transformer_lm_forward.18} parent=0
    #allocation2 [shape = 'u8[4096]{0}', space=vmem, size = 0x1000, scoped, tag = 'input window, operand 0, single buffered']
    #allocation3 [shape = 's32[1]{0}', space=sflag, size = 0x4, scoped, tag = 'scoped memory for transformer_lm_forward.18']
    #allocation4 [shape = 's32[1]{0}', space=sflag, size = 0x4, scoped, tag = 'scoped memory for transformer_lm_forward.18']
    #allocation5 [shape = 'u8[512]{0}', space=vmem, size = 0x400, scoped, tag = 'input window, operand 1, single buffered']
    #allocation6 [shape = 's32[1]{0}', space=sflag, size = 0x4, scoped, tag = 'scoped memory for transformer_lm_forward.18']
    #allocation7 [shape = 'u8[512]{0}', space=vmem, size = 0x400, scoped, tag = 'input window, operand 2, single buffered']
    #allocation8 [shape = 'u8[4096]{0}', space=vmem, size = 0x1000, scoped, tag = 'output window, operand 0, single buffered']
    %8 = vsyncpa [#allocation3], 0
    %9 = vsyncpa [#allocation6], 0
    %10 = vsyncpa [#allocation4], 0
    // Predicated region
    $region2: #{transformer_lm_forward.18} parent=1 // pred_check
      _
    $region3: #{transformer_lm_forward.18} parent=1 // pred_check_branch
      %12 = sbr.rel (0) target = $region5
    $region4: #{transformer_lm_forward.18} parent=1 // pred_region
      %s14 = ssub.s32 128, 128
      %15 = vsyncadd [#allocation3], %s14
      %s16 = sshll.u32 [#allocation2], 4
      %s17 = int_to_ptr.vmem [resolvable:$true] %s16
      %22 = dma.hbm_to_vmem [thread:$0]  %s0, 128, %s17, [#allocation3], 64, 64, 4
    $region5: #{transformer_lm_forward.18} parent=1 // pred_fallthru
      _
    // Predicated region
    $region6: #{transformer_lm_forward.18} parent=1 // pred_check
      _
    $region7: #{transformer_lm_forward.18} parent=1 // pred_check_branch
      %24 = sbr.rel (0) target = $region9
    $region8: #{transformer_lm_forward.18} parent=1 // pred_region
      %s26 = ssub.s32 16, 16
      %27 = vsyncadd [#allocation6], %s26
      %s29 = sshll.u32 [#allocation5], 4
      %s30 = int_to_ptr.vmem [resolvable:$true] %s29
      %32 = dma.hbm_to_vmem [thread:$0]  %s1, 16, %s30, [#allocation6]
    $region9: #{transformer_lm_forward.18} parent=1 // pred_fallthru
      _
    // Predicated region
    $region10: #{transformer_lm_forward.18} parent=1 // pred_check
      _
    $region11: #{transformer_lm_forward.18} parent=1 // pred_check_branch
      %34 = sbr.rel (0) target = $region13
    $region12: #{transformer_lm_forward.18} parent=1 // pred_region
      %s36 = ssub.s32 16, 16
      %37 = vsyncadd [#allocation6], %s36
      %s39 = sshll.u32 [#allocation7], 4
      %s40 = int_to_ptr.vmem [resolvable:$true] %s39
      %42 = dma.hbm_to_vmem [thread:$0]  %s2, 16, %s40, [#allocation6]
    $region13: #{transformer_lm_forward.18} parent=1 // pred_fallthru
      _
    // Predicated region
    $region14: #{transformer_lm_forward.18} parent=1 // pred_check
      _
    $region15: #{transformer_lm_forward.18} parent=1 // pred_check_branch
      %44 = sbr.rel (0) target = $region17
    $region16: #{transformer_lm_forward.18} parent=1 // pred_region
      %45 = dma.done [#allocation3], 128
    $region17: #{transformer_lm_forward.18} parent=1 // pred_fallthru
      _
    // Predicated region
    $region18: #{transformer_lm_forward.18} parent=1 // pred_check
      _
    $region19: #{transformer_lm_forward.18} parent=1 // pred_check_branch
      %47 = sbr.rel (0) target = $region21
    $region20: #{transformer_lm_forward.18} parent=1 // pred_region
      %48 = dma.done [#allocation6], 16
    $region21: #{transformer_lm_forward.18} parent=1 // pred_fallthru
      _
    // Predicated region
    $region22: #{transformer_lm_forward.18} parent=1 // pred_check
      _
    $region23: #{transformer_lm_forward.18} parent=1 // pred_check_branch
      %50 = sbr.rel (0) target = $region25
    $region24: #{transformer_lm_forward.18} parent=1 // pred_region
      %51 = dma.done [#allocation6], 16
    $region25: #{transformer_lm_forward.18} parent=1 // pred_fallthru
      _
    %v52 = vld [vmem:[#allocation2] sm:$0xf]
    %v53 = vld [vmem:[#allocation2 + $0x4] sm:$0xf]
    %v54 = vunpack.c.l.bf16 %v52
    %v55 = vunpack.c.l.bf16 %v53
    %vm56 = vcmask 261120
    %v57 = vsel %vm56, %v54, 0.0
    %58 = vadd.xlane.f32.xlu0 %v57
    %v59 = vpop.xlane.xlu0 %58
    %v60 = vsel %vm56, %v55, 0.0
    %61 = vadd.xlane.f32.xlu0 %v60
    %v62 = vpop.xlane.xlu0 %61
    %v63 = vrcp.pop 32.0
    %v64 = vmul.f32 %v59, %v63
    %v65 = vmul.f32 %v62, %v63
    %v66 = vsub.f32 %v54, %v64
    %v67 = vsub.f32 %v55, %v65
    %v68 = vmul.f32 %v66, %v66
    %v69 = vmul.f32 %v67, %v67
    %v70 = vsel %vm56, %v68, 0.0
    %71 = vadd.xlane.f32.xlu0 %v70
    %v72 = vpop.xlane.xlu0 %71
    %v73 = vsel %vm56, %v69, 0.0
    %74 = vadd.xlane.f32.xlu0 %v73
    %v75 = vpop.xlane.xlu0 %74
    %v76 = vmul.f32 %v72, %v63
    %v77 = vmul.f32 %v75, %v63
    %v78 = vadd.f32 %v76, 1e-05
    %v79 = vadd.f32 %v77, 1e-05
    %v80 = vrsqrt.pop %v78
    %v81 = vrsqrt.pop %v79
    %v82 = vmul.f32 %v66, %v80
    %v83 = vmul.f32 %v67, %v81
    %v84 = vld [vmem:[#allocation5] sm:$0x1]
    %v86 = vlaneseq
    %v87 = vshrl.u32 %v86, 7
    %v88 = vsub.s32 0, %v87
    %v89 = vrot.slane %v84, %v88
    %v91 = vmul.f32 %v82, %v89
    %v92 = vmul.f32 %v83, %v89
    %v93 = vld [vmem:[#allocation7] sm:$0x1]
    %v95 = vlaneseq
    %v96 = vshrl.u32 %v95, 7
    %v97 = vsub.s32 0, %v96
    %v98 = vrot.slane %v93, %v97
    %v100 = vadd.f32 %v91, %v98
    %v101 = vadd.f32 %v92, %v98
    %v102 = vpack.c.bf16 %v101, %v100
    %v104 = vunpack.c.l.b16 %v102
    %v105 = vunpack.c.h.b16 %v102
    %v106 = vpack.c.b16 %v104, %v104
    %v107 = vpack.c.b16 %v105, %v105
    %vm110 = vcmask 257024
    %111 = vst.msk [vmem:[#allocation8] sm:$0xf] %vm110, %v106
    %112 = vst.msk [vmem:[#allocation8 + $0x4] sm:$0xf] %vm110, %v107
    // Predicated region
    $region26: #{transformer_lm_forward.18} parent=1 // pred_check
      _
    $region27: #{transformer_lm_forward.18} parent=1 // pred_check_branch
      %114 = sbr.rel (0) target = $region29
    $region28: #{transformer_lm_forward.18} parent=1 // pred_region
      %s116 = ssub.s32 128, 128
      %117 = vsyncadd [#allocation4], %s116
      %s118 = sshll.u32 [#allocation8], 4
      %s119 = int_to_ptr.vmem [resolvable:$true] %s118
      %124 = dma.vmem_to_hbm [thread:$0]  %s119, 128, %s3, [#allocation4], 64, 64, 4
    $region29: #{transformer_lm_forward.18} parent=1 // pred_fallthru
      _
    // Predicated region
    $region30: #{transformer_lm_forward.18} parent=1 // pred_check
      _
    $region31: #{transformer_lm_forward.18} parent=1 // pred_check_branch
      %126 = sbr.rel (0) target = $region33
    $region32: #{transformer_lm_forward.18} parent=1 // pred_region
      %127 = dma.done [#allocation4], 128
    $region33: #{transformer_lm_forward.18} parent=1 // pred_fallthru
      _
    %128 = vsyncpa [#allocation3], 1
    %129 = vsyncpa [#allocation6], 1
    %130 = vsyncpa [#allocation4], 1

// kernel: transformer_lm_forward.19
$region0: #{transformer_lm_forward.19}
  #allocation0 [shape = 'u32[]', space=smem, size = 0x4, offset = 0x4, fixed_abs, tag = 'smem constant byte address 0x4 - core index']
  #allocation1 [shape = 'u32[144,128]{1,0:T(1,128)}', space=vmem, size = 0x12000, scoped, tag = 'internal scratch']
  #allocation2 [shape = 'f32[16,64]{1,0:T(8,128)}', space=vmem, size = 0x2000, scoped, tag = 'scratch operand']
  %s0 = inlined_call_operand.hbm [shape: bf16[16,32], index: 0, kind: input, shape index: {}]
  %s1 = inlined_call_operand.hbm [shape: bf16[32,64], index: 1, kind: input, shape index: {}]
  %s2 = inlined_call_operand.hbm [shape: f32[1,64], index: 2, kind: input, shape index: {}]
  %s3 = inlined_call_operand.hbm [shape: f32[16,64], index: 3, kind: output, shape index: {}]
  %s4 = sld [smem:[#allocation0]]
  $region42: #{transformer_lm_forward.19} parent=0
    _
  %s6 = ssub.s32 1, %s4
  %s7 = scalar_select 0, %s6, %s4
  $region1: #{transformer_lm_forward.19} parent=0
    #allocation3 [shape = 'u8[4096]{0}', space=vmem, size = 0x1000, scoped, tag = 'input window, operand 0, single buffered']
    #allocation4 [shape = 's32[1]{0}', space=sflag, size = 0x4, scoped, tag = 'scoped memory for transformer_lm_forward.19']
    #allocation5 [shape = 's32[1]{0}', space=sflag, size = 0x4, scoped, tag = 'scoped memory for transformer_lm_forward.19']
    #allocation6 [shape = 'u8[8192]{0}', space=vmem, size = 0x2000, scoped, tag = 'input window, operand 1, single buffered']
    #allocation7 [shape = 's32[1]{0}', space=sflag, size = 0x4, scoped, tag = 'scoped memory for transformer_lm_forward.19']
    #allocation8 [shape = 'u8[512]{0}', space=vmem, size = 0x400, scoped, tag = 'input window, operand 2, single buffered']
    #allocation9 [shape = 'u8[8192]{0}', space=vmem, size = 0x2000, scoped, tag = 'output window, operand 0, single buffered']
    %8 = vsyncpa [#allocation4], 0
    %9 = vsyncpa [#allocation7], 0
    %10 = vsyncpa [#allocation5], 0
    // Predicated region
    $region2: #{transformer_lm_forward.19} parent=1 // pred_check
      _
    $region3: #{transformer_lm_forward.19} parent=1 // pred_check_branch
      %12 = sbr.rel (0) target = $region5
    $region4: #{transformer_lm_forward.19} parent=1 // pred_region
      %s14 = ssub.s32 128, 128
      %15 = vsyncadd [#allocation4], %s14
      %s16 = sshll.u32 [#allocation3], 4
      %s17 = int_to_ptr.vmem [resolvable:$true] %s16
      %22 = dma.hbm_to_vmem [thread:$0]  %s0, 128, %s17, [#allocation4], 64, 64, 4
    $region5: #{transformer_lm_forward.19} parent=1 // pred_fallthru
      _
    // Predicated region
    $region6: #{transformer_lm_forward.19} parent=1 // pred_check
      _
    $region7: #{transformer_lm_forward.19} parent=1 // pred_check_branch
      %24 = sbr.rel (0) target = $region9
    $region8: #{transformer_lm_forward.19} parent=1 // pred_region
      %s26 = ssub.s32 256, 256
      %27 = vsyncadd [#allocation7], %s26
      %s28 = sshll.u32 [#allocation6], 4
      %s29 = int_to_ptr.vmem [resolvable:$true] %s28
      %34 = dma.hbm_to_vmem [thread:$0]  %s1, 256, %s29, [#allocation7], 64, 64, 4
    $region9: #{transformer_lm_forward.19} parent=1 // pred_fallthru
      _
    // Predicated region
    $region10: #{transformer_lm_forward.19} parent=1 // pred_check
      _
    $region11: #{transformer_lm_forward.19} parent=1 // pred_check_branch
      %36 = sbr.rel (0) target = $region13
    $region12: #{transformer_lm_forward.19} parent=1 // pred_region
      %s38 = ssub.s32 16, 16
      %39 = vsyncadd [#allocation7], %s38
      %s41 = sshll.u32 [#allocation8], 4
      %s42 = int_to_ptr.vmem [resolvable:$true] %s41
      %44 = dma.hbm_to_vmem [thread:$0]  %s2, 16, %s42, [#allocation7]
    $region13: #{transformer_lm_forward.19} parent=1 // pred_fallthru
      _
    // Predicated region
    $region14: #{transformer_lm_forward.19} parent=1 // pred_check
      _
    $region15: #{transformer_lm_forward.19} parent=1 // pred_check_branch
      %46 = sbr.rel (0) target = $region17
    $region16: #{transformer_lm_forward.19} parent=1 // pred_region
      %47 = dma.done [#allocation4], 128
    $region17: #{transformer_lm_forward.19} parent=1 // pred_fallthru
      _
    // Predicated region
    $region18: #{transformer_lm_forward.19} parent=1 // pred_check
      _
    $region19: #{transformer_lm_forward.19} parent=1 // pred_check_branch
      %49 = sbr.rel (0) target = $region21
    $region20: #{transformer_lm_forward.19} parent=1 // pred_region
      %50 = dma.done [#allocation7], 256
    $region21: #{transformer_lm_forward.19} parent=1 // pred_fallthru
      _
    // Predicated region
    $region22: #{transformer_lm_forward.19} parent=1 // pred_check
      _
    $region23: #{transformer_lm_forward.19} parent=1 // pred_check_branch
      %52 = sbr.rel (0) target = $region25
    $region24: #{transformer_lm_forward.19} parent=1 // pred_region
      %53 = dma.done [#allocation7], 16
    $region25: #{transformer_lm_forward.19} parent=1 // pred_fallthru
      _
    %p55 = scmp.eq.s32.totalorder 0, 0
    // Predicated region
    $region26: #{transformer_lm_forward.19} parent=1 // pred_check
      %p56 = pneg %p55
    $region27: #{transformer_lm_forward.19} parent=1 // pred_check_branch
      %58 = sbr.rel (%p56) target = $region29
    $region28: #{transformer_lm_forward.19} parent=1 // pred_region
      %vm59 = vcmask 523264
      %60 = vst.msk [vmem:[#allocation2] sm:$0xff] %vm59, 0.0
      %61 = vst.msk [vmem:[#allocation2 + $0x8] sm:$0xff] %vm59, 0.0
    $region29: #{transformer_lm_forward.19} parent=1 // pred_fallthru
      _
    %v62 = vld [vmem:[#allocation2] sm:$0xff]
    %v63 = vld [vmem:[#allocation2 + $0x8] sm:$0xff]
    %v64 = vld [vmem:[#allocation3] sm:$0xf]
    %v65 = vld [vmem:[#allocation3 + $0x4] sm:$0xf]
    %v66 = vld [vmem:[#allocation6] sm:$0xf]
    %v67 = vld [vmem:[#allocation6 + $0x4] sm:$0xf]
    %v68 = vld [vmem:[#allocation6 + $0x8] sm:$0xf]
    %v69 = vld [vmem:[#allocation6 + $0xc] sm:$0xf]
    %v72 = vunpack.c.l.b16 %v64
    %v73 = vunpack.c.l.b16 %v65
    %v74 = vpack.c.b16 %v73, %v72
    %v79 = vunpack.c.l.b16 %v66
    %v80 = vunpack.c.l.b16 %v67
    %v81 = vunpack.c.l.b16 %v68
    %v82 = vunpack.c.l.b16 %v69
    %v83 = vpack.c.b16 %v80, %v79
    %v84 = vpack.c.b16 %v82, %v81
    %vm87 = vcmask 261120
    %v89 = vsel %vm87, %v74, 0
    %91 = vmatprep.subr.bf16.mxu0 0
    %92 = vmatpush1.bf16.msra.mxu0 %v83
    %93 = vmatprep.subr.bf16.mxu0 0
    %94 = vmatpush1.bf16.msra.mxu0 %v84
    %95 = vmatprep.subr.bf16.mxu0 0
    %96 = vmatpush1.bf16.msra.mxu0 0
    %97 = vmatprep.subr.bf16.mxu0 0
    %98 = vmatpush1.bf16.msra.mxu0 0
    %99 = vmatprep.subr.bf16.mxu0 0
    %100 = vmatpush1.bf16.msra.mxu0 0
    %101 = vmatprep.subr.bf16.mxu0 0
    %102 = vmatpush1.bf16.msra.mxu0 0
    %103 = vmatprep.subr.bf16.mxu0 0
    %104 = vmatpush1.bf16.msra.mxu0 0
    %105 = vmatprep.subr.bf16.mxu0 0
    %106 = vmatpush1.bf16.msra.mxu0 0
    %107 = vmatprep.subr.bf16.mxu0 0
    %108 = vmatpush1.bf16.msra.mxu0 0
    %109 = vmatprep.subr.bf16.mxu0 0
    %110 = vmatpush1.bf16.msra.mxu0 0
    %111 = vmatprep.subr.bf16.mxu0 0
    %112 = vmatpush1.bf16.msra.mxu0 0
    %113 = vmatprep.subr.bf16.mxu0 0
    %114 = vmatpush1.bf16.msra.mxu0 0
    %115 = vmatprep.subr.bf16.mxu0 0
    %116 = vmatpush1.bf16.msra.mxu0 0
    %117 = vmatprep.subr.bf16.mxu0 0
    %118 = vmatpush1.bf16.msra.mxu0 0
    %119 = vmatprep.subr.bf16.mxu0 0
    %120 = vmatpush1.bf16.msra.mxu0 0
    %121 = vmatprep.subr.bf16.mxu0 0
    %122 = vmatpush1.bf16.msra.mxu0 0
    %123 = vmatprep.mubr.bf16.mxu0 0
    %124 = vmatmul.mubr.bf16.gmra.mrb[0].mxu0 %v89
    %v125 = vpop.f32.mrb[0].mxu0
    %v126 = vadd.f32 0.0, %v125
    %v127 = vpop.f32.mrb[0].mxu0
    %v128 = vpop.f32.mrb[0].mxu0
    %v129 = vadd.f32 0.0, %v128
    %v130 = vpop.f32.mrb[0].mxu0
    %131 = vdwg.mxu0
    %v132 = vadd.f32 %v62, %v126
    %v133 = vadd.f32 %v63, %v129
    %vm134 = vcmask 523264
    %135 = vst.msk [vmem:[#allocation2] sm:$0xff] %vm134, %v132
    %136 = vst.msk [vmem:[#allocation2 + $0x8] sm:$0xff] %vm134, %v133
    // Predicated region
    $region30: #{transformer_lm_forward.19} parent=1 // pred_check
      %p137 = pneg %p55
    $region31: #{transformer_lm_forward.19} parent=1 // pred_check_branch
      %139 = sbr.rel (%p137) target = $region33
    $region32: #{transformer_lm_forward.19} parent=1 // pred_region
      %v140 = vld [vmem:[#allocation2] sm:$0xff]
      %v141 = vld [vmem:[#allocation2 + $0x8] sm:$0xff]
      %v142 = vld [vmem:[#allocation8] sm:$0x1]
      %v144 = vlaneseq
      %v145 = vshrl.u32 %v144, 7
      %v146 = vsub.s32 0, %v145
      %v147 = vrot.slane %v142, %v146
      %v149 = vadd.f32 %v140, %v147
      %v150 = vadd.f32 %v141, %v147
      %151 = vst.msk [vmem:[#allocation9] sm:$0xff] %vm134, %v149
      %152 = vst.msk [vmem:[#allocation9 + $0x8] sm:$0xff] %vm134, %v150
    $region33: #{transformer_lm_forward.19} parent=1 // pred_fallthru
      _
    // Predicated region
    $region34: #{transformer_lm_forward.19} parent=1 // pred_check
      _
    $region35: #{transformer_lm_forward.19} parent=1 // pred_check_branch
      %154 = sbr.rel (0) target = $region37
    $region36: #{transformer_lm_forward.19} parent=1 // pred_region
      %s156 = ssub.s32 256, 256
      %157 = vsyncadd [#allocation5], %s156
      %s158 = sshll.u32 [#allocation9], 4
      %s159 = int_to_ptr.vmem [resolvable:$true] %s158
      %164 = dma.vmem_to_hbm [thread:$0]  %s159, 256, %s3, [#allocation5], 128, 128, 8
    $region37: #{transformer_lm_forward.19} parent=1 // pred_fallthru
      _
    // Predicated region
    $region38: #{transformer_lm_forward.19} parent=1 // pred_check
      _
    $region39: #{transformer_lm_forward.19} parent=1 // pred_check_branch
      %166 = sbr.rel (0) target = $region41
    $region40: #{transformer_lm_forward.19} parent=1 // pred_region
      %167 = dma.done [#allocation5], 256
    $region41: #{transformer_lm_forward.19} parent=1 // pred_fallthru
      _
    %168 = vsyncpa [#allocation4], 1
    %169 = vsyncpa [#allocation7], 1
    %170 = vsyncpa [#allocation5], 1

</llo_original>
